<compile_context>
chip_gen: v6e
topology: v6e:2x2x1
jax: 0.10.0
libtpu: 0.0.40
codegen_flags: <defaults>
</compile_context>

<pallas_src>
import functools

import numpy as np
import jax
import jax.numpy as jnp
from jax.experimental import pallas as pl
from jax.experimental.pallas import tpu as pltpu


def _round_up(x, m):
    return ((x + m - 1) // m) * m


# ----------------------------------------------------------------------------
# Host-side triplet selector (data-dependent, same role as in the PyTorch
# module). Vectorized with numpy broadcasting instead of an O(N^3) Python loop.
# ----------------------------------------------------------------------------
class AllTripletSelector:
    def get_triplets(self, embeddings, target):
        labels = np.asarray(target).reshape(-1)
        n = labels.shape[0]
        a, p, neg = np.meshgrid(np.arange(n), np.arange(n), np.arange(n),
                                indexing="ij")
        valid = (labels[a] == labels[p]) & (a != p) & (labels[a] != labels[neg])
        return np.stack([a[valid], p[valid], neg[valid]], axis=1).astype(np.int32)


# ----------------------------------------------------------------------------
# Pallas kernel: one tile of TILE_T triplets per grid step.
#   grid = (2, inner_tiles): axis 0 "parallel" (dual-TC split on v7x),
#                            axis 1 "arbitrary" (reduction into acc scratch).
# ----------------------------------------------------------------------------
def _triplet_tile_kernel(margin, exact, count_ref, idx_ref, emb_hbm, o_ref,
                         emb_vmem, acc_ref):
    # count_ref : SMEM int32 (1,)        -- real (unpadded) number of triplets
    # idx_ref   : VMEM int32 (TILE_T, 3) -- [anchor, positive, negative] indices
    # emb_hbm   : ANY/HBM f32 (Npad, Dpad) -- raw ref, copied once per core
    # o_ref     : VMEM f32 (1, 8, 128)   -- lane-dense per-core partial sum
    # emb_vmem  : VMEM f32 (Npad, Dpad)  -- single resident copy of embeddings
    # acc_ref   : VMEM f32 (1, 1)        -- per-core loss accumulator
    tile_t = idx_ref.shape[0]
    n_pad = emb_vmem.shape[0]
    c = pl.program_id(0)                       # core split index
    i = pl.program_id(1)                       # tile index within split
    count = count_ref[0]
    tile_start = (c * pl.num_programs(1) + i) * tile_t   # global triplet offset

    @pl.when(i == 0)
    def _init():
        acc_ref[...] = jnp.zeros_like(acc_ref)

    @pl.when(jnp.logical_and(i == 0, tile_start < count))
    def _load_embeddings():
        # Single-buffered resident embeddings: one DMA per core, no pipeline
        # double-buffering of the (Npad, Dpad) block.
        pltpu.sync_copy(emb_hbm, emb_vmem)

    @pl.when(tile_start < count)               # skip fully-padded tiles
    def _compute():
        idx = idx_ref[...]                                   # (TILE_T, 3)
        col = jax.lax.broadcasted_iota(jnp.int32, (tile_t, n_pad), 1)
        a_oh = (col == idx[:, 0:1]).astype(jnp.float32)
        # Difference-of-one-hots: 2 matmuls instead of 3, exact ({-1,0,1}).
        ap_sel = a_oh - (col == idx[:, 1:2]).astype(jnp.float32)
        an_sel = a_oh - (col == idx[:, 2:3]).astype(jnp.float32)

        e = emb_vmem[...]
        prec = (jax.lax.Precision.HIGHEST if exact
                else jax.lax.Precision.DEFAULT)
        d_ap = jnp.dot(ap_sel, e, precision=prec,
                       preferred_element_type=jnp.float32)   # E[a] - E[p]
        d_an = jnp.dot(an_sel, e, precision=prec,
                       preferred_element_type=jnp.float32)   # E[a] - E[n]

        ap = jnp.sum(d_ap * d_ap, axis=1, keepdims=True)     # (TILE_T, 1)
        an = jnp.sum(d_an * d_an, axis=1, keepdims=True)
        losses = jnp.maximum(ap - an + jnp.float32(margin), jnp.float32(0.0))

        # Mask padded triplets (global index >= real count) inside the tile.
        row = jax.lax.broadcasted_iota(jnp.int32, (tile_t, 1), 0) + tile_start
        mask = (row < count).astype(jnp.float32)
        acc_ref[...] += jnp.sum(losses * mask, axis=0, keepdims=True)

    # Keep the lane-dense output block current; HBM writeback only happens
    # when the outer block index changes, so this is a single vreg store.
    o_ref[...] = jnp.broadcast_to(acc_ref[...].reshape(1, 1, 1), o_ref.shape)


@functools.partial(jax.jit, static_argnames=("margin", "tile_t", "exact"))
def _triplet_loss_pallas(emb, idx, count, *, margin, tile_t, exact):
    # Pad embeddings on device (no host round-trip). Zero rows/cols never
    # change a distance and padded rows are never indexed.
    n, d = emb.shape
    n_pad = _round_up(n, 128)
    d_pad = _round_up(d, 128)
    emb_p = jnp.zeros((n_pad, d_pad), jnp.float32).at[:n, :d].set(
        emb.astype(jnp.float32))

    t_pad = idx.shape[0]
    inner_tiles = t_pad // (2 * tile_t)

    kernel = functools.partial(_triplet_tile_kernel, float(margin), bool(exact))

    # VMEM budget from the actual buffer plan: single-buffered resident
    # embeddings + double-buffered (tile_t, 3) index blocks + per-tile f32
    # intermediates (one-hot diffs + gathered diffs), plus headroom; capped to
    # the chip's VMEM capacity when it can be queried (v5e/v6e 128 MiB, v7x 64).
    emb_bytes = n_pad * d_pad * 4
    idx_bytes = 2 * tile_t * 128 * 4
    tmp_bytes = 8 * tile_t * max(n_pad, d_pad) * 4
    need = emb_bytes + idx_bytes + tmp_bytes
    vmem_bytes = need + (16 << 20)
    try:
        cap = int(pltpu.get_tpu_info().vmem_capacity_bytes)
        vmem_bytes = max(min(vmem_bytes, int(cap * 0.9)), need + (4 << 20))
    except Exception:
        pass
    vmem_bytes = int(vmem_bytes)

    out = pl.pallas_call(
        kernel,
        out_shape=jax.ShapeDtypeStruct((2, 8, 128), jnp.float32),
        grid_spec=pltpu.PrefetchScalarGridSpec(
            num_scalar_prefetch=1,
            grid=(2, inner_tiles),
            in_specs=[
                # Packed [a, p, n] index table: one small DMA per tile.
                pl.BlockSpec((tile_t, 3),
                             lambda c, i, cnt: (c * inner_tiles + i, 0)),
                # Embeddings stay in HBM; copied once per core into scratch.
                pl.BlockSpec(memory_space=pl.ANY),
            ],
            out_specs=pl.BlockSpec((1, 8, 128), lambda c, i, cnt: (c, 0, 0)),
            scratch_shapes=[
                pltpu.VMEM((n_pad, d_pad), jnp.float32),   # resident embeddings
                pltpu.VMEM((1, 1), jnp.float32),           # loss accumulator
            ],
        ),
        compiler_params=pltpu.CompilerParams(
            dimension_semantics=("parallel", "arbitrary"),
            vmem_limit_bytes=vmem_bytes,
        ),
    )(count, idx, emb_p)

    total = out[0, 0, 0] + out[1, 0, 0]          # combine per-core partial sums
    return total / jnp.maximum(count[0], 1).astype(jnp.float32)


# ----------------------------------------------------------------------------
# Module-equivalent wrapper.
# ----------------------------------------------------------------------------
class OnlineTripletLossPallas:
    def __init__(self, margin, triplet_selector, tile_t=256, exact=True):
        self.margin = float(margin)
        self.triplet_selector = triplet_selector
        self.tile_t = int(tile_t)
        self.exact = bool(exact)

    def __call__(self, embeddings, target):
        emb = jnp.asarray(embeddings)
        triplets = self.triplet_selector.get_triplets(emb, target)
        triplets = np.asarray(triplets, dtype=np.int32).reshape(-1, 3)
        if triplets.shape[0] == 0:
            # Same fallback as the PyTorch module: one degenerate (0,0,0)
            # triplet -> loss == margin.
            triplets = np.zeros((1, 3), dtype=np.int32)
        t = int(triplets.shape[0])

        # Two-way outer split (dual-TC on v7x) x power-of-two inner tile count
        # => bounded set of compiled shapes; padded tiles are skipped in-kernel
        # and the real count masks the mean.
        inner_tiles = max(1, pl.next_power_of_2(
            pl.cdiv(pl.cdiv(t, self.tile_t), 2)))
        t_pad = 2 * inner_tiles * self.tile_t
        idx = np.zeros((t_pad, 3), dtype=np.int32)
        idx[:t] = triplets

        return _triplet_loss_pallas(
            emb, jnp.asarray(idx), jnp.asarray([t], dtype=jnp.int32),
            margin=self.margin, tile_t=self.tile_t, exact=self.exact)


# ----------------------------------------------------------------------------
# Pure-numpy reference for verification.
# ----------------------------------------------------------------------------
def _reference_loss(embeddings, triplets, margin):
    e = np.asarray(embeddings, dtype=np.float32)
    a, p, n = triplets[:, 0], triplets[:, 1], triplets[:, 2]
    ap = ((e[a] - e[p]) ** 2).sum(1)
    an = ((e[a] - e[n]) ** 2).sum(1)
    return np.maximum(ap - an + margin, 0.0).mean()


if __name__ == "__main__":
    key = jax.random.PRNGKey(0)
    n, d = 8, 32
    margin = 1.0

    selector = AllTripletSelector()
    loss_fn = OnlineTripletLossPallas(margin, selector)

    k1, k2 = jax.random.split(key)

    # Batch 1: two classes -> 96 triplets.
    emb1 = jax.random.normal(k1, (n, d), dtype=jnp.float32)
    tgt1 = np.array([0, 0, 0, 0, 1, 1, 1, 1], dtype=np.int32)
    loss1 = jax.block_until_ready(loss_fn(emb1, tgt1))
    trips1 = np.asarray(selector.get_triplets(emb1, tgt1)).reshape(-1, 3)
    ref1 = _reference_loss(np.asarray(emb1), trips1, margin)
    assert np.allclose(np.asarray(loss1), ref1, rtol=1e-4, atol=1e-4), (loss1, ref1)

    # Batch 2: three classes -> different triplet count, same bucket shapes
    # (no recompile); exercises the dynamic-count masking + tile-skip path.
    emb2 = jax.random.normal(k2, (n, d), dtype=jnp.float32)
    tgt2 = np.array([0, 0, 0, 1, 1, 2, 2, 2], dtype=np.int32)
    loss2 = jax.block_until_ready(loss_fn(emb2, tgt2))
    trips2 = np.asarray(selector.get_triplets(emb2, tgt2)).reshape(-1, 3)
    ref2 = _reference_loss(np.asarray(emb2), trips2, margin)
    assert np.allclose(np.asarray(loss2), ref2, rtol=1e-4, atol=1e-4), (loss2, ref2)

    print("KERNEL_OK")
</pallas_src>

<mosaic_0001>
module attributes {stable_mosaic.version = 11 : i64} {
  func.func @_triplet_tile_kernel(%arg0: i32, %arg1: i32, %arg2: memref<1xi32, #tpu.memory_space<smem>>, %arg3: memref<256x3xi32, #tpu.memory_space<vmem>>, %arg4: memref<128x128xf32, #tpu.memory_space<any>>, %arg5: memref<1x8x128xf32, #tpu.memory_space<vmem>>, %arg6: memref<128x128xf32, #tpu.memory_space<vmem>>, %arg7: memref<1x1xf32, #tpu.memory_space<vmem>>) attributes {dimension_semantics = [#tpu.dimension_semantics<parallel>, #tpu.dimension_semantics<arbitrary>], iteration_bounds = array<i64: 2, 1>, scalar_prefetch = 1 : i64, scratch_operands = 2 : i64, tpu.core_type = #tpu.core_type<tc>, window_params = [{transform_indices = @transform_0, window_bounds = array<i64: 256, 3>}, {}, {transform_indices = @transform_2, window_bounds = array<i64: 1, 8, 128>}]} {
    %c0 = arith.constant 0 : index
    %0 = memref.load %arg2[%c0] : memref<1xi32, #tpu.memory_space<smem>>
    %c1_i32 = arith.constant 1 : i32
    %1 = arith.muli %arg0, %c1_i32 : i32
    %2 = arith.addi %1, %arg1 : i32
    %c256_i32 = arith.constant 256 : i32
    %3 = arith.muli %2, %c256_i32 : i32
    %c0_i32 = arith.constant 0 : i32
    %4 = arith.cmpi eq, %arg1, %c0_i32 : i32
    %5 = arith.extui %4 : i1 to i32
    %c0_i32_0 = arith.constant 0 : i32
    %6 = arith.cmpi ne, %5, %c0_i32_0 : i32
    scf.if %6 {
      %cst = arith.constant 0.000000e+00 : f32
      %20 = vector.broadcast %cst : f32 to vector<1x1xf32>
      %c0_9 = arith.constant 0 : index
      %c0_10 = arith.constant 0 : index
      %21 = vector.load %arg7[%c0_9, %c0_10] : memref<1x1xf32, #tpu.memory_space<vmem>>, vector<1x1xf32>
      tpu.vector_store %arg7[%c0_9, %c0_10], %20 {strides = array<i32>} : memref<1x1xf32, #tpu.memory_space<vmem>>, vector<1x1xf32>,
    } else {
    }
    %c0_i32_1 = arith.constant 0 : i32
    %7 = arith.cmpi eq, %arg1, %c0_i32_1 : i32
    %8 = arith.cmpi slt, %3, %0 : i32
    %9 = arith.andi %7, %8 : i1
    %10 = arith.extui %9 : i1 to i32
    %c0_i32_2 = arith.constant 0 : i32
    %11 = arith.cmpi ne, %10, %c0_i32_2 : i32
    scf.if %11 {
      "tpu.region"() ({
        %20 = tpu.sem_alloc : memref<!tpu.dma_semaphore, #tpu.memory_space<semaphore_mem>>
        tpu.enqueue_dma source(%arg4 : memref<128x128xf32, #tpu.memory_space<any>>) target(%arg6 : memref<128x128xf32, #tpu.memory_space<vmem>>) target_semaphore(%20 : memref<!tpu.dma_semaphore, #tpu.memory_space<semaphore_mem>>)
        tpu.wait_dma2 semaphore(%20 : memref<!tpu.dma_semaphore, #tpu.memory_space<semaphore_mem>>) src(%arg4 : memref<128x128xf32, #tpu.memory_space<any>>) dst(%arg6 : memref<128x128xf32, #tpu.memory_space<vmem>>)
        tpu.yield
      }) : () -> ()
    } else {
    }
    %12 = arith.cmpi slt, %3, %0 : i32
    %13 = arith.extui %12 : i1 to i32
    %c0_i32_3 = arith.constant 0 : i32
    %14 = arith.cmpi ne, %13, %c0_i32_3 : i32
    scf.if %14 {
      %c0_9 = arith.constant 0 : index
      %c0_10 = arith.constant 0 : index
      %20 = vector.load %arg3[%c0_9, %c0_10] : memref<256x3xi32, #tpu.memory_space<vmem>>, vector<256x3xi32>
      %21 = tpu.iota {dimensions = array<i32: 1>} : vector<256x128xi32>
      %22 = vector.extract_strided_slice %20 {offsets = [0, 0], sizes = [256, 1], strides = [1, 1]} : vector<256x3xi32> to vector<256x1xi32>
      %23 = vector.broadcast %22 : vector<256x1xi32> to vector<256x128xi32>
      %24 = arith.cmpi eq, %21, %23 : vector<256x128xi32>
      %25 = arith.extui %24 : vector<256x128xi1> to vector<256x128xi32>
      %26 = arith.sitofp %25 : vector<256x128xi32> to vector<256x128xf32>
      %27 = vector.extract_strided_slice %20 {offsets = [0, 1], sizes = [256, 1], strides = [1, 1]} : vector<256x3xi32> to vector<256x1xi32>
      %28 = vector.broadcast %27 : vector<256x1xi32> to vector<256x128xi32>
      %29 = arith.cmpi eq, %21, %28 : vector<256x128xi32>
      %30 = arith.extui %29 : vector<256x128xi1> to vector<256x128xi32>
      %31 = arith.sitofp %30 : vector<256x128xi32> to vector<256x128xf32>
      %32 = arith.subf %26, %31 : vector<256x128xf32>
      %33 = vector.extract_strided_slice %20 {offsets = [0, 2], sizes = [256, 1], strides = [1, 1]} : vector<256x3xi32> to vector<256x1xi32>
      %34 = vector.broadcast %33 : vector<256x1xi32> to vector<256x128xi32>
      %35 = arith.cmpi eq, %21, %34 : vector<256x128xi32>
      %36 = arith.extui %35 : vector<256x128xi1> to vector<256x128xi32>
      %37 = arith.sitofp %36 : vector<256x128xi32> to vector<256x128xf32>
      %38 = arith.subf %26, %37 : vector<256x128xf32>
      %c0_11 = arith.constant 0 : index
      %c0_12 = arith.constant 0 : index
      %39 = vector.load %arg6[%c0_11, %c0_12] : memref<128x128xf32, #tpu.memory_space<vmem>>, vector<128x128xf32>
      %cst = arith.constant dense<0.000000e+00> : vector<256x128xf32>
      %40 = tpu.matmul %32, %39, %cst {dimension_numbers = #tpu.dot_dimension_numbers<[1], [0], [0], [1], [0, 0, 1, 1], [], []>, precision = #tpu.contract_precision<fp32>} : vector<256x128xf32>, vector<128x128xf32>, vector<256x128xf32> -> vector<256x128xf32>
      %cst_13 = arith.constant dense<0.000000e+00> : vector<256x128xf32>
      %41 = tpu.matmul %38, %39, %cst_13 {dimension_numbers = #tpu.dot_dimension_numbers<[1], [0], [0], [1], [0, 0, 1, 1], [], []>, precision = #tpu.contract_precision<fp32>} : vector<256x128xf32>, vector<128x128xf32>, vector<256x128xf32> -> vector<256x128xf32>
      %42 = arith.mulf %40, %40 : vector<256x128xf32>
      %cst_14 = arith.constant dense<0.000000e+00> : vector<256xf32>
      %43 = vector.multi_reduction <add>, %42, %cst_14 [1] : vector<256x128xf32> to vector<256xf32>
      %44 = vector.shape_cast %43 : vector<256xf32> to vector<256x1xf32>
      %45 = arith.mulf %41, %41 : vector<256x128xf32>
      %cst_15 = arith.constant dense<0.000000e+00> : vector<256xf32>
      %46 = vector.multi_reduction <add>, %45, %cst_15 [1] : vector<256x128xf32> to vector<256xf32>
      %47 = vector.shape_cast %46 : vector<256xf32> to vector<256x1xf32>
      %48 = arith.subf %44, %47 : vector<256x1xf32>
      %cst_16 = arith.constant 1.000000e+00 : f32
      %49 = vector.broadcast %cst_16 : f32 to vector<256x1xf32>
      %50 = arith.addf %48, %49 : vector<256x1xf32>
      %cst_17 = arith.constant 0.000000e+00 : f32
      %51 = vector.broadcast %cst_17 : f32 to vector<256x1xf32>
      %52 = arith.maximumf %50, %51 : vector<256x1xf32>
      %53 = tpu.iota {dimensions = array<i32: 0>} : vector<256x1xi32>
      %54 = vector.broadcast %3 : i32 to vector<256x1xi32>
      %55 = arith.addi %53, %54 : vector<256x1xi32>
      %56 = vector.broadcast %0 : i32 to vector<256x1xi32>
      %57 = arith.cmpi slt, %55, %56 : vector<256x1xi32>
      %58 = arith.extui %57 : vector<256x1xi1> to vector<256x1xi32>
      %59 = arith.sitofp %58 : vector<256x1xi32> to vector<256x1xf32>
      %c0_18 = arith.constant 0 : index
      %c0_19 = arith.constant 0 : index
      %60 = vector.load %arg7[%c0_18, %c0_19] : memref<1x1xf32, #tpu.memory_space<vmem>>, vector<1x1xf32>
      %61 = arith.mulf %52, %59 : vector<256x1xf32>
      %cst_20 = arith.constant dense<0.000000e+00> : vector<1xf32>
      %62 = vector.multi_reduction <add>, %61, %cst_20 [0] : vector<256x1xf32> to vector<1xf32>
      %63 = vector.shape_cast %62 : vector<1xf32> to vector<1x1xf32>
      %64 = arith.addf %60, %63 : vector<1x1xf32>
      %c0_21 = arith.constant 0 : index
      %c0_22 = arith.constant 0 : index
      %65 = vector.load %arg7[%c0_21, %c0_22] : memref<1x1xf32, #tpu.memory_space<vmem>>, vector<1x1xf32>
      tpu.vector_store %arg7[%c0_21, %c0_22], %64 {strides = array<i32>} : memref<1x1xf32, #tpu.memory_space<vmem>>, vector<1x1xf32>,
    } else {
    }
    %c0_4 = arith.constant 0 : index
    %c0_5 = arith.constant 0 : index
    %15 = vector.load %arg7[%c0_4, %c0_5] : memref<1x1xf32, #tpu.memory_space<vmem>>, vector<1x1xf32>
    %16 = vector.shape_cast %15 : vector<1x1xf32> to vector<1x1x1xf32>
    %17 = vector.shape_cast %16 : vector<1x1x1xf32> to vector<1x1x1xf32>
    %18 = vector.broadcast %17 : vector<1x1x1xf32> to vector<1x8x128xf32>
    %c0_6 = arith.constant 0 : index
    %c0_7 = arith.constant 0 : index
    %c0_8 = arith.constant 0 : index
    %19 = vector.load %arg5[%c0_6, %c0_7, %c0_8] : memref<1x8x128xf32, #tpu.memory_space<vmem>>, vector<1x8x128xf32>
    tpu.vector_store %arg5[%c0_6, %c0_7, %c0_8], %18 {strides = array<i32>} : memref<1x8x128xf32, #tpu.memory_space<vmem>>, vector<1x8x128xf32>,
    return
  }
  func.func @transform_0(%arg0: i32, %arg1: i32, %arg2: memref<1xi32, #tpu.memory_space<smem>>) -> (i32, i32) {
    %c1_i32 = arith.constant 1 : i32
    %0 = arith.muli %arg0, %c1_i32 : i32
    %1 = arith.addi %0, %arg1 : i32
    %c0_i32 = arith.constant 0 : i32
    %c0_i32_0 = arith.constant 0 : i32
    return %1, %c0_i32 : i32, i32
  }
  func.func @transform_2(%arg0: i32, %arg1: i32, %arg2: memref<1xi32, #tpu.memory_space<smem>>) -> (i32, i32, i32) {
    %c0_i32 = arith.constant 0 : i32
    %c0_i32_0 = arith.constant 0 : i32
    %c0_i32_1 = arith.constant 0 : i32
    return %arg0, %c0_i32, %c0_i32_0 : i32, i32, i32
  }
}

</mosaic_0001>

<llo_original>
// kernel: _triplet_loss_pallas.1
$region0: #{_triplet_loss_pallas.1}
  #allocation0 [shape = 'u32[]', space=smem, size = 0x4, offset = 0x4, fixed_abs, tag = 'smem constant byte address 0x4 - core index']
  #allocation1 [shape = 'u32[144,128]{1,0:T(1,128)}', space=vmem, size = 0x12000, scoped, tag = 'internal scratch']
  #allocation2 [shape = 'f32[128,128]{1,0:T(8,128)}', space=vmem, size = 0x10000, scoped, tag = 'scratch operand']
  #allocation3 [shape = 'f32[1,1]{1,0:T(1,128)}', space=vmem, size = 0x200, scoped, tag = 'scratch operand']
  #allocation4 [shape = 's32[1]{0}', space=sflag, size = 0x4, scoped, tag = 'scoped memory for _triplet_loss_pallas.1']
  #allocation5 [shape = 's32[1]{0:T(128)S(6)}', space=smem, size = 0x200, scoped, tag = 'prefetched SMEM operand 0']
  #allocation7 [shape = 's32[]', space=sflag, size = 0x4, offset = 0, fixed_abs, tag = 'sflag constant byte address 0x0 - dummy sync flag']
  %s0 = inlined_call_operand.<no memory space> [shape: s32[1], index: 0, kind: input, shape index: {}]
  %s1 = inlined_call_operand.vmem [shape: s32[512,3], index: 1, kind: input, shape index: {}]
  %s2 = inlined_call_operand.vmem [shape: f32[128,128], index: 2, kind: input, shape index: {}]
  %s3 = inlined_call_operand.vmem [shape: f32[2,8,128], index: 3, kind: output, shape index: {}]
  %s4 = sld [smem:[#allocation0]]
  $region84: #{_triplet_loss_pallas.1} parent=0
    _
  %s6 = ssub.s32 1, %s4
  %s7 = scalar_select 0, %s6, %s4
  %8 = sst [smem:[#allocation5]] %s0
  loop: start=0, step=1, limit=4
  $region2: #{_triplet_loss_pallas.1} parent=0 // loop_pre_header
    _
  $region3: #{_triplet_loss_pallas.1} parent=0 // loop_header
    %s10 = sphi 0, %s14
    %p11 = scmp.ge.s32.totalorder %s10, 4
    %s17 = sphi 0, %s29
    %s18 = sphi 0, %s25
    %s19 = sphi 0, %s17
    %s20 = sphi 0, %s18
    %s21 = sphi 0, %s19
    %s22 = sphi 0, %s20
    %s34 = sphi 0, %s36
    %s37 = sphi 0, %s34
    %s38 = sphi 0, %s37
    %s54 = sphi 0, %s38
    %s60 = sphi 0, %s62
    %s63 = sphi 0, %s60
    %s64 = sphi 0, %s63
    %s80 = sphi 0, %s64
  $region4: #{_triplet_loss_pallas.1} parent=0 // loop_header_branch
    %13 = sbr.rel (%p11) target = $region8
  $region5: #{_triplet_loss_pallas.1} parent=0 // loop_body
    %s15 = ssub.s32 %s10, 1
    %s16 = ssub.s32 %s10, 2
    %s23 = sadd.s32 1, %s18
    %p24 = scmp.ge.s32.totalorder %s23, 1
    %s25 = scalar_select %p24, 0, %s23
    %s26 = sadd.s32 1, %s17
    %s27 = scalar_select %p24, %s26, %s17
    %p28 = scmp.ge.s32.totalorder %s27, 2
    %s29 = scalar_select %p28, 0, %s27
    %s30 = sadd.s32 %s17, %s18
    %s31 = sadd.s32 %s29, %s25
    %s32 = ssub.s32 %s30, %s31
    %p33 = scmp.eq.s32.totalorder %s32, 0
    %s35 = sadd.s32 %s34, 1
    %s36 = scalar_select %p33, %s34, %s35
    %p39 = pneg %p33
    %p40 = scmp.eq.s32.totalorder %s10, 1
    %p41 = por %p39, %p40
    %p42 = scmp.ne.s32.totalorder %s34, %s37
    %p43 = scmp.eq.s32.totalorder %s10, 0
    %p44 = por %p42, %p43
    %p45 = scmp.ne.s32.totalorder %s34, %s37
    %p46 = scmp.eq.s32.totalorder %s15, 1
    %p47 = por %p45, %p46
    %p48 = scmp.ne.s32.totalorder %s37, %s38
    %p49 = scmp.eq.s32.totalorder %s15, 0
    %p50 = por %p48, %p49
    %p51 = scmp.ne.s32.totalorder %s37, %s38
    %p52 = scmp.eq.s32.totalorder %s16, 1
    %p53 = por %p51, %p52
    %p55 = scmp.ne.s32.totalorder %s38, %s54
    %p56 = scmp.eq.s32.totalorder %s16, 0
    %p57 = por %p55, %p56
    %s58 = ssub.s32 %s17, %s29
    %p59 = scmp.eq.s32.totalorder %s58, 0
    %s61 = sadd.s32 %s60, 1
    %s62 = scalar_select %p59, %s60, %s61
    %p65 = pneg %p59
    %p66 = scmp.eq.s32.totalorder %s10, 1
    %p67 = por %p65, %p66
    %p68 = scmp.ne.s32.totalorder %s60, %s63
    %p69 = scmp.eq.s32.totalorder %s10, 0
    %p70 = por %p68, %p69
    %p71 = scmp.ne.s32.totalorder %s60, %s63
    %p72 = scmp.eq.s32.totalorder %s15, 1
    %p73 = por %p71, %p72
    %p74 = scmp.ne.s32.totalorder %s63, %s64
    %p75 = scmp.eq.s32.totalorder %s15, 0
    %p76 = por %p74, %p75
    %p77 = scmp.ne.s32.totalorder %s63, %s64
    %p78 = scmp.eq.s32.totalorder %s16, 1
    %p79 = por %p77, %p78
    %p81 = scmp.ne.s32.totalorder %s64, %s80
    %p82 = scmp.eq.s32.totalorder %s16, 0
    %p83 = por %p81, %p82
    %p84 = scmp.le.s32.totalorder 1, %s10
    %p85 = scmp.lt.s32.totalorder %s10, 3
    %p86 = pnand %p84, %p85
    %p87 = pneg %p86
    // Predicated region
    $region9: #{_triplet_loss_pallas.1} parent=5 // pred_check
      _
    $region10: #{_triplet_loss_pallas.1} parent=5 // pred_check_branch
      %89 = sbr.rel (%p86) target = $region12
    $region11: #{_triplet_loss_pallas.1} parent=5 // pred_region
      %s90 = ssub.s32 %s10, 1
    $region12: #{_triplet_loss_pallas.1} parent=5 // pred_fallthru
      _
    %p91 = scmp.lt.s32.totalorder %s10, 2
    // Predicated region
    $region13: #{_triplet_loss_pallas.1} parent=5 // pred_check
      %p92 = pneg %p91
    $region14: #{_triplet_loss_pallas.1} parent=5 // pred_check_branch
      %94 = sbr.rel (%p92) target = $region16
    $region15: #{_triplet_loss_pallas.1} parent=5 // pred_region
      // Predicated region
      $region17: #{_triplet_loss_pallas.1} parent=15 // pred_check
        %p95 = pneg %p44
      $region18: #{_triplet_loss_pallas.1} parent=15 // pred_check_branch
        %97 = sbr.rel (%p95) target = $region20
      $region19: #{_triplet_loss_pallas.1} parent=15 // pred_region
        %s98 = sadd.s32 %s17, %s18
        %s99 = smul.u32 32, %s98
        %p100 = scmp.lt.s32.totalorder %s99, 63
        %s101 = scalar_select %p100, %s99, 63
        %s102 = smul.addr %s101, 8
        %s103 = scalar_lea.vmem %s1, %s102
        %s104 = sadd.s32 %s17, %s18
        %s105 = smul.u32 32, %s104
      $region20: #{_triplet_loss_pallas.1} parent=15 // pred_fallthru
        _
    $region16: #{_triplet_loss_pallas.1} parent=5 // pred_fallthru
      _
    %p106 = scmp.le.s32.totalorder 1, %s10
    %p107 = scmp.lt.s32.totalorder %s10, 3
    %p108 = pnand %p106, %p107
    %p109 = pneg %p108
    // Predicated region
    $region21: #{_triplet_loss_pallas.1} parent=5 // pred_check
      _
    $region22: #{_triplet_loss_pallas.1} parent=5 // pred_check_branch
      %111 = sbr.rel (%p108) target = $region24
    $region23: #{_triplet_loss_pallas.1} parent=5 // pred_region
      %s112 = ssub.s32 %s10, 1
      %s113 = sadd.s32 %s19, %s20
      %s114 = smul.u32 32, %s113
      %p115 = scmp.lt.s32.totalorder %s114, 63
      %s116 = scalar_select %p115, %s114, 63
      %s117 = smul.addr %s116, 8
      %s118 = scalar_lea.vmem %s1, %s117
      %p119 = pneg %p50
      %p120 = pneg %p47
      %p121 = pneg %p76
      %p122 = pneg %p73
      %p123 = scmp.lt.s32.totalorder %s19, 1
      %s124 = scalar_select %p123, %s19, 1
      %s125 = smul.addr %s124, 8
      %s126 = scalar_lea.vmem %s3, %s125
      %s127 = sadd.s32 %s19, %s20
      %s128 = smul.u32 32, %s127
      %p129 = scmp.lt.s32.totalorder %s128, 63
      %s130 = scalar_select %p129, %s128, 63
      %s131 = smul.addr %s130, 8
      %s132 = scalar_lea.vmem %s1, %s131
      %s133 = sadd.s32 %s19, %s20
      %s134 = smul.u32 32, %s133
      %p135 = scmp.lt.s32.totalorder %s19, 1
      %s136 = scalar_select %p135, %s19, 1
      %s137 = smul.addr %s136, 8
      %s138 = scalar_lea.vmem %s3, %s137
      %s139 = sld [smem:[#allocation5]]
      %s140 = sadd.s32 %s19, %s20
      %s141 = smul.u32 %s140, 256
      %p142 = scmp.eq.s32.totalorder %s20, 0
      // Predicated region
      $region25: #{_triplet_loss_pallas.1} parent=23 // pred_check
        %p143 = pneg %p142
      $region26: #{_triplet_loss_pallas.1} parent=23 // pred_check_branch
        %145 = sbr.rel (%p143) target = $region28
      $region27: #{_triplet_loss_pallas.1} parent=23 // pred_region
        %vm146 = vcmask 0
        %147 = vst.msk [vmem:[#allocation3] sm:$0x1] %vm146, 0.0
      $region28: #{_triplet_loss_pallas.1} parent=23 // pred_fallthru
        _
      %p148 = scmp.lt.s32.totalorder %s141, %s139
      %p149 = pnand %p142, %p148
      %p150 = pneg %p149
      // Predicated region
      $region29: #{_triplet_loss_pallas.1} parent=23 // pred_check
        _
      $region30: #{_triplet_loss_pallas.1} parent=23 // pred_check_branch
        %152 = sbr.rel (%p149) target = $region32
      $region31: #{_triplet_loss_pallas.1} parent=23 // pred_region
        $region33: #{_triplet_loss_pallas.1} parent=31
          #allocation6 [shape = 's32[1]{0}', space=sflag, size = 0x4, scoped, tag = 'scoped memory for _triplet_loss_pallas.1']
          %p154 = scmp.lt.u32.totalorder 128, 8
          %p155 = pneg %p154
          // Predicated region
          $region34: #{_triplet_loss_pallas.1} parent=33 // pred_check
            _
          $region35: #{_triplet_loss_pallas.1} parent=33 // pred_check_branch
            %157 = sbr.rel (%p154) target = $region37
          $region36: #{_triplet_loss_pallas.1} parent=33 // pred_region
            %s173 = sand.u32 128, 7
            %p174 = scmp.eq.s32.totalorder %s173, 0
            // Predicated region
            $region49: #{_triplet_loss_pallas.1} parent=36 // pred_check
              %p175 = pneg %p174
            $region50: #{_triplet_loss_pallas.1} parent=36 // pred_check_branch
              %177 = sbr.rel (%p175) target = $region52
            $region51: #{_triplet_loss_pallas.1} parent=36 // pred_region
              loop: start=0, step=1, limit=1
              $region53: #{_triplet_loss_pallas.1} parent=51 // loop_pre_header
                _
              $region54: #{_triplet_loss_pallas.1} parent=51 // loop_header
                %s179 = sphi 0, %s183
                %p180 = scmp.ge.s32.totalorder %s179, 1
                %s184 = sphi %s2, %s2
                %s185 = sphi [#allocation2], [#allocation2]
              $region55: #{_triplet_loss_pallas.1} parent=51 // loop_header_branch
                %182 = sbr.rel (%p180) target = $region59
              $region56: #{_triplet_loss_pallas.1} parent=51 // loop_body
                %v186 = vld [vmem:[%s184] sm:$0xff]
                %187 = vst [vmem:[%s185] sm:$0xff] %v186
                %v188 = vld [vmem:[%s184 + $0x8] sm:$0xff]
                %189 = vst [vmem:[%s185 + $0x8] sm:$0xff] %v188
                %v190 = vld [vmem:[%s184 + $0x10] sm:$0xff]
                %191 = vst [vmem:[%s185 + $0x10] sm:$0xff] %v190
                %v192 = vld [vmem:[%s184 + $0x18] sm:$0xff]
                %193 = vst [vmem:[%s185 + $0x18] sm:$0xff] %v192
                %v194 = vld [vmem:[%s184 + $0x20] sm:$0xff]
                %195 = vst [vmem:[%s185 + $0x20] sm:$0xff] %v194
                %v196 = vld [vmem:[%s184 + $0x28] sm:$0xff]
                %197 = vst [vmem:[%s185 + $0x28] sm:$0xff] %v196
                %v198 = vld [vmem:[%s184 + $0x30] sm:$0xff]
                %199 = vst [vmem:[%s185 + $0x30] sm:$0xff] %v198
                %v200 = vld [vmem:[%s184 + $0x38] sm:$0xff]
                %201 = vst [vmem:[%s185 + $0x38] sm:$0xff] %v200
                %v202 = vld [vmem:[%s184 + $0x40] sm:$0xff]
                %203 = vst [vmem:[%s185 + $0x40] sm:$0xff] %v202
                %v204 = vld [vmem:[%s184 + $0x48] sm:$0xff]
                %205 = vst [vmem:[%s185 + $0x48] sm:$0xff] %v204
                %v206 = vld [vmem:[%s184 + $0x50] sm:$0xff]
                %207 = vst [vmem:[%s185 + $0x50] sm:$0xff] %v206
                %v208 = vld [vmem:[%s184 + $0x58] sm:$0xff]
                %209 = vst [vmem:[%s185 + $0x58] sm:$0xff] %v208
                %v210 = vld [vmem:[%s184 + $0x60] sm:$0xff]
                %211 = vst [vmem:[%s185 + $0x60] sm:$0xff] %v210
                %v212 = vld [vmem:[%s184 + $0x68] sm:$0xff]
                %213 = vst [vmem:[%s185 + $0x68] sm:$0xff] %v212
                %v214 = vld [vmem:[%s184 + $0x70] sm:$0xff]
                %215 = vst [vmem:[%s185 + $0x70] sm:$0xff] %v214
                %v216 = vld [vmem:[%s184 + $0x78] sm:$0xff]
                %217 = vst [vmem:[%s185 + $0x78] sm:$0xff] %v216
              $region57: #{_triplet_loss_pallas.1} parent=51 // loop_footer
                %s183 = sadd.s32 1, %s179
              $region58: #{_triplet_loss_pallas.1} parent=51 // loop_footer_branch
                %178 = sbr.rel target = $region54
              $region59: #{_triplet_loss_pallas.1} parent=51 // loop_exit
                _
            $region52: #{_triplet_loss_pallas.1} parent=36 // pred_fallthru
              _
            %p218 = pneg %p174
            // Predicated region
            $region60: #{_triplet_loss_pallas.1} parent=36 // pred_check
              _
            $region61: #{_triplet_loss_pallas.1} parent=36 // pred_check_branch
              %220 = sbr.rel (%p174) target = $region63
            $region62: #{_triplet_loss_pallas.1} parent=36 // pred_region
              %s221 = sand.u32 128, 7
            $region63: #{_triplet_loss_pallas.1} parent=36 // pred_fallthru
              _
          $region37: #{_triplet_loss_pallas.1} parent=33 // pred_fallthru
            _
          // Predicated region
          $region38: #{_triplet_loss_pallas.1} parent=33 // pred_check
            %p158 = pneg %p154
          $region39: #{_triplet_loss_pallas.1} parent=33 // pred_check_branch
            %160 = sbr.rel (%p158) target = $region41
          $region40: #{_triplet_loss_pallas.1} parent=33 // pred_region
            %s161 = sshll.u32 1, 128
            %s162 = ssub.s32 %s161, 1
            loop: start=0, step=1, limit=1
            $region42: #{_triplet_loss_pallas.1} parent=40 // loop_pre_header
              _
            $region43: #{_triplet_loss_pallas.1} parent=40 // loop_header
              %s164 = sphi 0, %s168
              %p165 = scmp.ge.s32.totalorder %s164, 1
              %s169 = sphi %s2, %s2
              %s170 = sphi [#allocation2], [#allocation2]
            $region44: #{_triplet_loss_pallas.1} parent=40 // loop_header_branch
              %167 = sbr.rel (%p165) target = $region48
            $region45: #{_triplet_loss_pallas.1} parent=40 // loop_body
              %v171 = vld [vmem:[%s169] sm:%s162]
              %172 = vst [vmem:[%s170] sm:%s162] %v171
            $region46: #{_triplet_loss_pallas.1} parent=40 // loop_footer
              %s168 = sadd.s32 1, %s164
            $region47: #{_triplet_loss_pallas.1} parent=40 // loop_footer_branch
              %163 = sbr.rel target = $region43
            $region48: #{_triplet_loss_pallas.1} parent=40 // loop_exit
              _
          $region41: #{_triplet_loss_pallas.1} parent=33 // pred_fallthru
            _
          // Predicated region
          $region64: #{_triplet_loss_pallas.1} parent=33 // pred_check
            _
          $region65: #{_triplet_loss_pallas.1} parent=33 // pred_check_branch
            %224 = sbr.rel (0) target = $region67
          $region66: #{_triplet_loss_pallas.1} parent=33 // pred_region
            %225 = vsyncadd [#allocation6], 2048
          $region67: #{_triplet_loss_pallas.1} parent=33 // pred_fallthru
            _
          %s226 = smul.u32 128, 1
          %s227 = sshll.u32 %s226, 4
          %228 = dma.done [#allocation6], %s227
      $region32: #{_triplet_loss_pallas.1} parent=23 // pred_fallthru
        _
      // Predicated region
      $region68: #{_triplet_loss_pallas.1} parent=23 // pred_check
        %p229 = pneg %p148
      $region69: #{_triplet_loss_pallas.1} parent=23 // pred_check_branch
        %231 = sbr.rel (%p229) target = $region71
      $region70: #{_triplet_loss_pallas.1} parent=23 // pred_region
        %v232 = vld [vmem:[%s132] sm:$0xff]
        %v233 = vld [vmem:[%s132 + $0x8] sm:$0xff]
        %v234 = vld [vmem:[%s132 + $0x10] sm:$0xff]
        %v235 = vld [vmem:[%s132 + $0x18] sm:$0xff]
        %v236 = vld [vmem:[%s132 + $0x20] sm:$0xff]
        %v237 = vld [vmem:[%s132 + $0x28] sm:$0xff]
        %v238 = vld [vmem:[%s132 + $0x30] sm:$0xff]
        %v239 = vld [vmem:[%s132 + $0x38] sm:$0xff]
        %v240 = vld [vmem:[%s132 + $0x40] sm:$0xff]
        %v241 = vld [vmem:[%s132 + $0x48] sm:$0xff]
        %v242 = vld [vmem:[%s132 + $0x50] sm:$0xff]
        %v243 = vld [vmem:[%s132 + $0x58] sm:$0xff]
        %v244 = vld [vmem:[%s132 + $0x60] sm:$0xff]
        %v245 = vld [vmem:[%s132 + $0x68] sm:$0xff]
        %v246 = vld [vmem:[%s132 + $0x70] sm:$0xff]
        %v247 = vld [vmem:[%s132 + $0x78] sm:$0xff]
        %v248 = vld [vmem:[%s132 + $0x80] sm:$0xff]
        %v249 = vld [vmem:[%s132 + $0x88] sm:$0xff]
        %v250 = vld [vmem:[%s132 + $0x90] sm:$0xff]
        %v251 = vld [vmem:[%s132 + $0x98] sm:$0xff]
        %v252 = vld [vmem:[%s132 + $0xa0] sm:$0xff]
        %v253 = vld [vmem:[%s132 + $0xa8] sm:$0xff]
        %v254 = vld [vmem:[%s132 + $0xb0] sm:$0xff]
        %v255 = vld [vmem:[%s132 + $0xb8] sm:$0xff]
        %v256 = vld [vmem:[%s132 + $0xc0] sm:$0xff]
        %v257 = vld [vmem:[%s132 + $0xc8] sm:$0xff]
        %v258 = vld [vmem:[%s132 + $0xd0] sm:$0xff]
        %v259 = vld [vmem:[%s132 + $0xd8] sm:$0xff]
        %v260 = vld [vmem:[%s132 + $0xe0] sm:$0xff]
        %v261 = vld [vmem:[%s132 + $0xe8] sm:$0xff]
        %v262 = vld [vmem:[%s132 + $0xf0] sm:$0xff]
        %v263 = vld [vmem:[%s132 + $0xf8] sm:$0xff]
        %v264 = vlaneseq
        %v265 = vand.u32 %v264, 127
        %266 = vset.pattern.permute.xlu0 0
        %267 = vperm.xlu0 %266, %v232
        %v268 = vpop.permute.xlu0 %267
        %269 = vset.pattern.permute.xlu0 0
        %270 = vperm.xlu0 %269, %v233
        %v271 = vpop.permute.xlu0 %270
        %272 = vset.pattern.permute.xlu0 0
        %273 = vperm.xlu0 %272, %v234
        %v274 = vpop.permute.xlu0 %273
        %275 = vset.pattern.permute.xlu0 0
        %276 = vperm.xlu0 %275, %v235
        %v277 = vpop.permute.xlu0 %276
        %278 = vset.pattern.permute.xlu0 0
        %279 = vperm.xlu0 %278, %v236
        %v280 = vpop.permute.xlu0 %279
        %281 = vset.pattern.permute.xlu0 0
        %282 = vperm.xlu0 %281, %v237
        %v283 = vpop.permute.xlu0 %282
        %284 = vset.pattern.permute.xlu0 0
        %285 = vperm.xlu0 %284, %v238
        %v286 = vpop.permute.xlu0 %285
        %287 = vset.pattern.permute.xlu0 0
        %288 = vperm.xlu0 %287, %v239
        %v289 = vpop.permute.xlu0 %288
        %290 = vset.pattern.permute.xlu0 0
        %291 = vperm.xlu0 %290, %v240
        %v292 = vpop.permute.xlu0 %291
        %293 = vset.pattern.permute.xlu0 0
        %294 = vperm.xlu0 %293, %v241
        %v295 = vpop.permute.xlu0 %294
        %296 = vset.pattern.permute.xlu0 0
        %297 = vperm.xlu0 %296, %v242
        %v298 = vpop.permute.xlu0 %297
        %299 = vset.pattern.permute.xlu0 0
        %300 = vperm.xlu0 %299, %v243
        %v301 = vpop.permute.xlu0 %300
        %302 = vset.pattern.permute.xlu0 0
        %303 = vperm.xlu0 %302, %v244
        %v304 = vpop.permute.xlu0 %303
        %305 = vset.pattern.permute.xlu0 0
        %306 = vperm.xlu0 %305, %v245
        %v307 = vpop.permute.xlu0 %306
        %308 = vset.pattern.permute.xlu0 0
        %309 = vperm.xlu0 %308, %v246
        %v310 = vpop.permute.xlu0 %309
        %311 = vset.pattern.permute.xlu0 0
        %312 = vperm.xlu0 %311, %v247
        %v313 = vpop.permute.xlu0 %312
        %314 = vset.pattern.permute.xlu0 0
        %315 = vperm.xlu0 %314, %v248
        %v316 = vpop.permute.xlu0 %315
        %317 = vset.pattern.permute.xlu0 0
        %318 = vperm.xlu0 %317, %v249
        %v319 = vpop.permute.xlu0 %318
        %320 = vset.pattern.permute.xlu0 0
        %321 = vperm.xlu0 %320, %v250
        %v322 = vpop.permute.xlu0 %321
        %323 = vset.pattern.permute.xlu0 0
        %324 = vperm.xlu0 %323, %v251
        %v325 = vpop.permute.xlu0 %324
        %326 = vset.pattern.permute.xlu0 0
        %327 = vperm.xlu0 %326, %v252
        %v328 = vpop.permute.xlu0 %327
        %329 = vset.pattern.permute.xlu0 0
        %330 = vperm.xlu0 %329, %v253
        %v331 = vpop.permute.xlu0 %330
        %332 = vset.pattern.permute.xlu0 0
        %333 = vperm.xlu0 %332, %v254
        %v334 = vpop.permute.xlu0 %333
        %335 = vset.pattern.permute.xlu0 0
        %336 = vperm.xlu0 %335, %v255
        %v337 = vpop.permute.xlu0 %336
        %338 = vset.pattern.permute.xlu0 0
        %339 = vperm.xlu0 %338, %v256
        %v340 = vpop.permute.xlu0 %339
        %341 = vset.pattern.permute.xlu0 0
        %342 = vperm.xlu0 %341, %v257
        %v343 = vpop.permute.xlu0 %342
        %344 = vset.pattern.permute.xlu0 0
        %345 = vperm.xlu0 %344, %v258
        %v346 = vpop.permute.xlu0 %345
        %347 = vset.pattern.permute.xlu0 0
        %348 = vperm.xlu0 %347, %v259
        %v349 = vpop.permute.xlu0 %348
        %350 = vset.pattern.permute.xlu0 0
        %351 = vperm.xlu0 %350, %v260
        %v352 = vpop.permute.xlu0 %351
        %353 = vset.pattern.permute.xlu0 0
        %354 = vperm.xlu0 %353, %v261
        %v355 = vpop.permute.xlu0 %354
        %356 = vset.pattern.permute.xlu0 0
        %357 = vperm.xlu0 %356, %v262
        %v358 = vpop.permute.xlu0 %357
        %359 = vset.pattern.permute.xlu0 0
        %360 = vperm.xlu0 %359, %v263
        %v361 = vpop.permute.xlu0 %360
        %vm362 = vcmp.eq.s32.totalorder %v265, %v268
        %vm363 = vcmp.eq.s32.totalorder %v265, %v271
        %vm364 = vcmp.eq.s32.totalorder %v265, %v274
        %vm365 = vcmp.eq.s32.totalorder %v265, %v277
        %vm366 = vcmp.eq.s32.totalorder %v265, %v280
        %vm367 = vcmp.eq.s32.totalorder %v265, %v283
        %vm368 = vcmp.eq.s32.totalorder %v265, %v286
        %vm369 = vcmp.eq.s32.totalorder %v265, %v289
        %vm370 = vcmp.eq.s32.totalorder %v265, %v292
        %vm371 = vcmp.eq.s32.totalorder %v265, %v295
        %vm372 = vcmp.eq.s32.totalorder %v265, %v298
        %vm373 = vcmp.eq.s32.totalorder %v265, %v301
        %vm374 = vcmp.eq.s32.totalorder %v265, %v304
        %vm375 = vcmp.eq.s32.totalorder %v265, %v307
        %vm376 = vcmp.eq.s32.totalorder %v265, %v310
        %vm377 = vcmp.eq.s32.totalorder %v265, %v313
        %vm378 = vcmp.eq.s32.totalorder %v265, %v316
        %vm379 = vcmp.eq.s32.totalorder %v265, %v319
        %vm380 = vcmp.eq.s32.totalorder %v265, %v322
        %vm381 = vcmp.eq.s32.totalorder %v265, %v325
        %vm382 = vcmp.eq.s32.totalorder %v265, %v328
        %vm383 = vcmp.eq.s32.totalorder %v265, %v331
        %vm384 = vcmp.eq.s32.totalorder %v265, %v334
        %vm385 = vcmp.eq.s32.totalorder %v265, %v337
        %vm386 = vcmp.eq.s32.totalorder %v265, %v340
        %vm387 = vcmp.eq.s32.totalorder %v265, %v343
        %vm388 = vcmp.eq.s32.totalorder %v265, %v346
        %vm389 = vcmp.eq.s32.totalorder %v265, %v349
        %vm390 = vcmp.eq.s32.totalorder %v265, %v352
        %vm391 = vcmp.eq.s32.totalorder %v265, %v355
        %vm392 = vcmp.eq.s32.totalorder %v265, %v358
        %vm393 = vcmp.eq.s32.totalorder %v265, %v361
        %v394 = vsel %vm362, 1, 0
        %v395 = vsel %vm363, 1, 0
        %v396 = vsel %vm364, 1, 0
        %v397 = vsel %vm365, 1, 0
        %v398 = vsel %vm366, 1, 0
        %v399 = vsel %vm367, 1, 0
        %v400 = vsel %vm368, 1, 0
        %v401 = vsel %vm369, 1, 0
        %v402 = vsel %vm370, 1, 0
        %v403 = vsel %vm371, 1, 0
        %v404 = vsel %vm372, 1, 0
        %v405 = vsel %vm373, 1, 0
        %v406 = vsel %vm374, 1, 0
        %v407 = vsel %vm375, 1, 0
        %v408 = vsel %vm376, 1, 0
        %v409 = vsel %vm377, 1, 0
        %v410 = vsel %vm378, 1, 0
        %v411 = vsel %vm379, 1, 0
        %v412 = vsel %vm380, 1, 0
        %v413 = vsel %vm381, 1, 0
        %v414 = vsel %vm382, 1, 0
        %v415 = vsel %vm383, 1, 0
        %v416 = vsel %vm384, 1, 0
        %v417 = vsel %vm385, 1, 0
        %v418 = vsel %vm386, 1, 0
        %v419 = vsel %vm387, 1, 0
        %v420 = vsel %vm388, 1, 0
        %v421 = vsel %vm389, 1, 0
        %v422 = vsel %vm390, 1, 0
        %v423 = vsel %vm391, 1, 0
        %v424 = vsel %vm392, 1, 0
        %v425 = vsel %vm393, 1, 0
        %v426 = vcvt.s32.f32 %v394
        %v427 = vcvt.s32.f32 %v395
        %v428 = vcvt.s32.f32 %v396
        %v429 = vcvt.s32.f32 %v397
        %v430 = vcvt.s32.f32 %v398
        %v431 = vcvt.s32.f32 %v399
        %v432 = vcvt.s32.f32 %v400
        %v433 = vcvt.s32.f32 %v401
        %v434 = vcvt.s32.f32 %v402
        %v435 = vcvt.s32.f32 %v403
        %v436 = vcvt.s32.f32 %v404
        %v437 = vcvt.s32.f32 %v405
        %v438 = vcvt.s32.f32 %v406
        %v439 = vcvt.s32.f32 %v407
        %v440 = vcvt.s32.f32 %v408
        %v441 = vcvt.s32.f32 %v409
        %v442 = vcvt.s32.f32 %v410
        %v443 = vcvt.s32.f32 %v411
        %v444 = vcvt.s32.f32 %v412
        %v445 = vcvt.s32.f32 %v413
        %v446 = vcvt.s32.f32 %v414
        %v447 = vcvt.s32.f32 %v415
        %v448 = vcvt.s32.f32 %v416
        %v449 = vcvt.s32.f32 %v417
        %v450 = vcvt.s32.f32 %v418
        %v451 = vcvt.s32.f32 %v419
        %v452 = vcvt.s32.f32 %v420
        %v453 = vcvt.s32.f32 %v421
        %v454 = vcvt.s32.f32 %v422
        %v455 = vcvt.s32.f32 %v423
        %v456 = vcvt.s32.f32 %v424
        %v457 = vcvt.s32.f32 %v425
        %458 = vset.pattern.permute.xlu0 1
        %459 = vperm.xlu0 %458, %v232
        %v460 = vpop.permute.xlu0 %459
        %461 = vset.pattern.permute.xlu0 1
        %462 = vperm.xlu0 %461, %v233
        %v463 = vpop.permute.xlu0 %462
        %464 = vset.pattern.permute.xlu0 1
        %465 = vperm.xlu0 %464, %v234
        %v466 = vpop.permute.xlu0 %465
        %467 = vset.pattern.permute.xlu0 1
        %468 = vperm.xlu0 %467, %v235
        %v469 = vpop.permute.xlu0 %468
        %470 = vset.pattern.permute.xlu0 1
        %471 = vperm.xlu0 %470, %v236
        %v472 = vpop.permute.xlu0 %471
        %473 = vset.pattern.permute.xlu0 1
        %474 = vperm.xlu0 %473, %v237
        %v475 = vpop.permute.xlu0 %474
        %476 = vset.pattern.permute.xlu0 1
        %477 = vperm.xlu0 %476, %v238
        %v478 = vpop.permute.xlu0 %477
        %479 = vset.pattern.permute.xlu0 1
        %480 = vperm.xlu0 %479, %v239
        %v481 = vpop.permute.xlu0 %480
        %482 = vset.pattern.permute.xlu0 1
        %483 = vperm.xlu0 %482, %v240
        %v484 = vpop.permute.xlu0 %483
        %485 = vset.pattern.permute.xlu0 1
        %486 = vperm.xlu0 %485, %v241
        %v487 = vpop.permute.xlu0 %486
        %488 = vset.pattern.permute.xlu0 1
        %489 = vperm.xlu0 %488, %v242
        %v490 = vpop.permute.xlu0 %489
        %491 = vset.pattern.permute.xlu0 1
        %492 = vperm.xlu0 %491, %v243
        %v493 = vpop.permute.xlu0 %492
        %494 = vset.pattern.permute.xlu0 1
        %495 = vperm.xlu0 %494, %v244
        %v496 = vpop.permute.xlu0 %495
        %497 = vset.pattern.permute.xlu0 1
        %498 = vperm.xlu0 %497, %v245
        %v499 = vpop.permute.xlu0 %498
        %500 = vset.pattern.permute.xlu0 1
        %501 = vperm.xlu0 %500, %v246
        %v502 = vpop.permute.xlu0 %501
        %503 = vset.pattern.permute.xlu0 1
        %504 = vperm.xlu0 %503, %v247
        %v505 = vpop.permute.xlu0 %504
        %506 = vset.pattern.permute.xlu0 1
        %507 = vperm.xlu0 %506, %v248
        %v508 = vpop.permute.xlu0 %507
        %509 = vset.pattern.permute.xlu0 1
        %510 = vperm.xlu0 %509, %v249
        %v511 = vpop.permute.xlu0 %510
        %512 = vset.pattern.permute.xlu0 1
        %513 = vperm.xlu0 %512, %v250
        %v514 = vpop.permute.xlu0 %513
        %515 = vset.pattern.permute.xlu0 1
        %516 = vperm.xlu0 %515, %v251
        %v517 = vpop.permute.xlu0 %516
        %518 = vset.pattern.permute.xlu0 1
        %519 = vperm.xlu0 %518, %v252
        %v520 = vpop.permute.xlu0 %519
        %521 = vset.pattern.permute.xlu0 1
        %522 = vperm.xlu0 %521, %v253
        %v523 = vpop.permute.xlu0 %522
        %524 = vset.pattern.permute.xlu0 1
        %525 = vperm.xlu0 %524, %v254
        %v526 = vpop.permute.xlu0 %525
        %527 = vset.pattern.permute.xlu0 1
        %528 = vperm.xlu0 %527, %v255
        %v529 = vpop.permute.xlu0 %528
        %530 = vset.pattern.permute.xlu0 1
        %531 = vperm.xlu0 %530, %v256
        %v532 = vpop.permute.xlu0 %531
        %533 = vset.pattern.permute.xlu0 1
        %534 = vperm.xlu0 %533, %v257
        %v535 = vpop.permute.xlu0 %534
        %536 = vset.pattern.permute.xlu0 1
        %537 = vperm.xlu0 %536, %v258
        %v538 = vpop.permute.xlu0 %537
        %539 = vset.pattern.permute.xlu0 1
        %540 = vperm.xlu0 %539, %v259
        %v541 = vpop.permute.xlu0 %540
        %542 = vset.pattern.permute.xlu0 1
        %543 = vperm.xlu0 %542, %v260
        %v544 = vpop.permute.xlu0 %543
        %545 = vset.pattern.permute.xlu0 1
        %546 = vperm.xlu0 %545, %v261
        %v547 = vpop.permute.xlu0 %546
        %548 = vset.pattern.permute.xlu0 1
        %549 = vperm.xlu0 %548, %v262
        %v550 = vpop.permute.xlu0 %549
        %551 = vset.pattern.permute.xlu0 1
        %552 = vperm.xlu0 %551, %v263
        %v553 = vpop.permute.xlu0 %552
        %vm554 = vcmp.eq.s32.totalorder %v265, %v460
        %vm555 = vcmp.eq.s32.totalorder %v265, %v463
        %vm556 = vcmp.eq.s32.totalorder %v265, %v466
        %vm557 = vcmp.eq.s32.totalorder %v265, %v469
        %vm558 = vcmp.eq.s32.totalorder %v265, %v472
        %vm559 = vcmp.eq.s32.totalorder %v265, %v475
        %vm560 = vcmp.eq.s32.totalorder %v265, %v478
        %vm561 = vcmp.eq.s32.totalorder %v265, %v481
        %vm562 = vcmp.eq.s32.totalorder %v265, %v484
        %vm563 = vcmp.eq.s32.totalorder %v265, %v487
        %vm564 = vcmp.eq.s32.totalorder %v265, %v490
        %vm565 = vcmp.eq.s32.totalorder %v265, %v493
        %vm566 = vcmp.eq.s32.totalorder %v265, %v496
        %vm567 = vcmp.eq.s32.totalorder %v265, %v499
        %vm568 = vcmp.eq.s32.totalorder %v265, %v502
        %vm569 = vcmp.eq.s32.totalorder %v265, %v505
        %vm570 = vcmp.eq.s32.totalorder %v265, %v508
        %vm571 = vcmp.eq.s32.totalorder %v265, %v511
        %vm572 = vcmp.eq.s32.totalorder %v265, %v514
        %vm573 = vcmp.eq.s32.totalorder %v265, %v517
        %vm574 = vcmp.eq.s32.totalorder %v265, %v520
        %vm575 = vcmp.eq.s32.totalorder %v265, %v523
        %vm576 = vcmp.eq.s32.totalorder %v265, %v526
        %vm577 = vcmp.eq.s32.totalorder %v265, %v529
        %vm578 = vcmp.eq.s32.totalorder %v265, %v532
        %vm579 = vcmp.eq.s32.totalorder %v265, %v535
        %vm580 = vcmp.eq.s32.totalorder %v265, %v538
        %vm581 = vcmp.eq.s32.totalorder %v265, %v541
        %vm582 = vcmp.eq.s32.totalorder %v265, %v544
        %vm583 = vcmp.eq.s32.totalorder %v265, %v547
        %vm584 = vcmp.eq.s32.totalorder %v265, %v550
        %vm585 = vcmp.eq.s32.totalorder %v265, %v553
        %v586 = vsel %vm554, 1, 0
        %v587 = vsel %vm555, 1, 0
        %v588 = vsel %vm556, 1, 0
        %v589 = vsel %vm557, 1, 0
        %v590 = vsel %vm558, 1, 0
        %v591 = vsel %vm559, 1, 0
        %v592 = vsel %vm560, 1, 0
        %v593 = vsel %vm561, 1, 0
        %v594 = vsel %vm562, 1, 0
        %v595 = vsel %vm563, 1, 0
        %v596 = vsel %vm564, 1, 0
        %v597 = vsel %vm565, 1, 0
        %v598 = vsel %vm566, 1, 0
        %v599 = vsel %vm567, 1, 0
        %v600 = vsel %vm568, 1, 0
        %v601 = vsel %vm569, 1, 0
        %v602 = vsel %vm570, 1, 0
        %v603 = vsel %vm571, 1, 0
        %v604 = vsel %vm572, 1, 0
        %v605 = vsel %vm573, 1, 0
        %v606 = vsel %vm574, 1, 0
        %v607 = vsel %vm575, 1, 0
        %v608 = vsel %vm576, 1, 0
        %v609 = vsel %vm577, 1, 0
        %v610 = vsel %vm578, 1, 0
        %v611 = vsel %vm579, 1, 0
        %v612 = vsel %vm580, 1, 0
        %v613 = vsel %vm581, 1, 0
        %v614 = vsel %vm582, 1, 0
        %v615 = vsel %vm583, 1, 0
        %v616 = vsel %vm584, 1, 0
        %v617 = vsel %vm585, 1, 0
        %v618 = vcvt.s32.f32 %v586
        %v619 = vcvt.s32.f32 %v587
        %v620 = vcvt.s32.f32 %v588
        %v621 = vcvt.s32.f32 %v589
        %v622 = vcvt.s32.f32 %v590
        %v623 = vcvt.s32.f32 %v591
        %v624 = vcvt.s32.f32 %v592
        %v625 = vcvt.s32.f32 %v593
        %v626 = vcvt.s32.f32 %v594
        %v627 = vcvt.s32.f32 %v595
        %v628 = vcvt.s32.f32 %v596
        %v629 = vcvt.s32.f32 %v597
        %v630 = vcvt.s32.f32 %v598
        %v631 = vcvt.s32.f32 %v599
        %v632 = vcvt.s32.f32 %v600
        %v633 = vcvt.s32.f32 %v601
        %v634 = vcvt.s32.f32 %v602
        %v635 = vcvt.s32.f32 %v603
        %v636 = vcvt.s32.f32 %v604
        %v637 = vcvt.s32.f32 %v605
        %v638 = vcvt.s32.f32 %v606
        %v639 = vcvt.s32.f32 %v607
        %v640 = vcvt.s32.f32 %v608
        %v641 = vcvt.s32.f32 %v609
        %v642 = vcvt.s32.f32 %v610
        %v643 = vcvt.s32.f32 %v611
        %v644 = vcvt.s32.f32 %v612
        %v645 = vcvt.s32.f32 %v613
        %v646 = vcvt.s32.f32 %v614
        %v647 = vcvt.s32.f32 %v615
        %v648 = vcvt.s32.f32 %v616
        %v649 = vcvt.s32.f32 %v617
        %v650 = vsub.f32 %v426, %v618
        %v651 = vsub.f32 %v427, %v619
        %v652 = vsub.f32 %v428, %v620
        %v653 = vsub.f32 %v429, %v621
        %v654 = vsub.f32 %v430, %v622
        %v655 = vsub.f32 %v431, %v623
        %v656 = vsub.f32 %v432, %v624
        %v657 = vsub.f32 %v433, %v625
        %v658 = vsub.f32 %v434, %v626
        %v659 = vsub.f32 %v435, %v627
        %v660 = vsub.f32 %v436, %v628
        %v661 = vsub.f32 %v437, %v629
        %v662 = vsub.f32 %v438, %v630
        %v663 = vsub.f32 %v439, %v631
        %v664 = vsub.f32 %v440, %v632
        %v665 = vsub.f32 %v441, %v633
        %v666 = vsub.f32 %v442, %v634
        %v667 = vsub.f32 %v443, %v635
        %v668 = vsub.f32 %v444, %v636
        %v669 = vsub.f32 %v445, %v637
        %v670 = vsub.f32 %v446, %v638
        %v671 = vsub.f32 %v447, %v639
        %v672 = vsub.f32 %v448, %v640
        %v673 = vsub.f32 %v449, %v641
        %v674 = vsub.f32 %v450, %v642
        %v675 = vsub.f32 %v451, %v643
        %v676 = vsub.f32 %v452, %v644
        %v677 = vsub.f32 %v453, %v645
        %v678 = vsub.f32 %v454, %v646
        %v679 = vsub.f32 %v455, %v647
        %v680 = vsub.f32 %v456, %v648
        %v681 = vsub.f32 %v457, %v649
        %682 = vset.pattern.permute.xlu0 2
        %683 = vperm.xlu0 %682, %v232
        %v684 = vpop.permute.xlu0 %683
        %685 = vset.pattern.permute.xlu0 2
        %686 = vperm.xlu0 %685, %v233
        %v687 = vpop.permute.xlu0 %686
        %688 = vset.pattern.permute.xlu0 2
        %689 = vperm.xlu0 %688, %v234
        %v690 = vpop.permute.xlu0 %689
        %691 = vset.pattern.permute.xlu0 2
        %692 = vperm.xlu0 %691, %v235
        %v693 = vpop.permute.xlu0 %692
        %694 = vset.pattern.permute.xlu0 2
        %695 = vperm.xlu0 %694, %v236
        %v696 = vpop.permute.xlu0 %695
        %697 = vset.pattern.permute.xlu0 2
        %698 = vperm.xlu0 %697, %v237
        %v699 = vpop.permute.xlu0 %698
        %700 = vset.pattern.permute.xlu0 2
        %701 = vperm.xlu0 %700, %v238
        %v702 = vpop.permute.xlu0 %701
        %703 = vset.pattern.permute.xlu0 2
        %704 = vperm.xlu0 %703, %v239
        %v705 = vpop.permute.xlu0 %704
        %706 = vset.pattern.permute.xlu0 2
        %707 = vperm.xlu0 %706, %v240
        %v708 = vpop.permute.xlu0 %707
        %709 = vset.pattern.permute.xlu0 2
        %710 = vperm.xlu0 %709, %v241
        %v711 = vpop.permute.xlu0 %710
        %712 = vset.pattern.permute.xlu0 2
        %713 = vperm.xlu0 %712, %v242
        %v714 = vpop.permute.xlu0 %713
        %715 = vset.pattern.permute.xlu0 2
        %716 = vperm.xlu0 %715, %v243
        %v717 = vpop.permute.xlu0 %716
        %718 = vset.pattern.permute.xlu0 2
        %719 = vperm.xlu0 %718, %v244
        %v720 = vpop.permute.xlu0 %719
        %721 = vset.pattern.permute.xlu0 2
        %722 = vperm.xlu0 %721, %v245
        %v723 = vpop.permute.xlu0 %722
        %724 = vset.pattern.permute.xlu0 2
        %725 = vperm.xlu0 %724, %v246
        %v726 = vpop.permute.xlu0 %725
        %727 = vset.pattern.permute.xlu0 2
        %728 = vperm.xlu0 %727, %v247
        %v729 = vpop.permute.xlu0 %728
        %730 = vset.pattern.permute.xlu0 2
        %731 = vperm.xlu0 %730, %v248
        %v732 = vpop.permute.xlu0 %731
        %733 = vset.pattern.permute.xlu0 2
        %734 = vperm.xlu0 %733, %v249
        %v735 = vpop.permute.xlu0 %734
        %736 = vset.pattern.permute.xlu0 2
        %737 = vperm.xlu0 %736, %v250
        %v738 = vpop.permute.xlu0 %737
        %739 = vset.pattern.permute.xlu0 2
        %740 = vperm.xlu0 %739, %v251
        %v741 = vpop.permute.xlu0 %740
        %742 = vset.pattern.permute.xlu0 2
        %743 = vperm.xlu0 %742, %v252
        %v744 = vpop.permute.xlu0 %743
        %745 = vset.pattern.permute.xlu0 2
        %746 = vperm.xlu0 %745, %v253
        %v747 = vpop.permute.xlu0 %746
        %748 = vset.pattern.permute.xlu0 2
        %749 = vperm.xlu0 %748, %v254
        %v750 = vpop.permute.xlu0 %749
        %751 = vset.pattern.permute.xlu0 2
        %752 = vperm.xlu0 %751, %v255
        %v753 = vpop.permute.xlu0 %752
        %754 = vset.pattern.permute.xlu0 2
        %755 = vperm.xlu0 %754, %v256
        %v756 = vpop.permute.xlu0 %755
        %757 = vset.pattern.permute.xlu0 2
        %758 = vperm.xlu0 %757, %v257
        %v759 = vpop.permute.xlu0 %758
        %760 = vset.pattern.permute.xlu0 2
        %761 = vperm.xlu0 %760, %v258
        %v762 = vpop.permute.xlu0 %761
        %763 = vset.pattern.permute.xlu0 2
        %764 = vperm.xlu0 %763, %v259
        %v765 = vpop.permute.xlu0 %764
        %766 = vset.pattern.permute.xlu0 2
        %767 = vperm.xlu0 %766, %v260
        %v768 = vpop.permute.xlu0 %767
        %769 = vset.pattern.permute.xlu0 2
        %770 = vperm.xlu0 %769, %v261
        %v771 = vpop.permute.xlu0 %770
        %772 = vset.pattern.permute.xlu0 2
        %773 = vperm.xlu0 %772, %v262
        %v774 = vpop.permute.xlu0 %773
        %775 = vset.pattern.permute.xlu0 2
        %776 = vperm.xlu0 %775, %v263
        %v777 = vpop.permute.xlu0 %776
        %vm778 = vcmp.eq.s32.totalorder %v265, %v684
        %vm779 = vcmp.eq.s32.totalorder %v265, %v687
        %vm780 = vcmp.eq.s32.totalorder %v265, %v690
        %vm781 = vcmp.eq.s32.totalorder %v265, %v693
        %vm782 = vcmp.eq.s32.totalorder %v265, %v696
        %vm783 = vcmp.eq.s32.totalorder %v265, %v699
        %vm784 = vcmp.eq.s32.totalorder %v265, %v702
        %vm785 = vcmp.eq.s32.totalorder %v265, %v705
        %vm786 = vcmp.eq.s32.totalorder %v265, %v708
        %vm787 = vcmp.eq.s32.totalorder %v265, %v711
        %vm788 = vcmp.eq.s32.totalorder %v265, %v714
        %vm789 = vcmp.eq.s32.totalorder %v265, %v717
        %vm790 = vcmp.eq.s32.totalorder %v265, %v720
        %vm791 = vcmp.eq.s32.totalorder %v265, %v723
        %vm792 = vcmp.eq.s32.totalorder %v265, %v726
        %vm793 = vcmp.eq.s32.totalorder %v265, %v729
        %vm794 = vcmp.eq.s32.totalorder %v265, %v732
        %vm795 = vcmp.eq.s32.totalorder %v265, %v735
        %vm796 = vcmp.eq.s32.totalorder %v265, %v738
        %vm797 = vcmp.eq.s32.totalorder %v265, %v741
        %vm798 = vcmp.eq.s32.totalorder %v265, %v744
        %vm799 = vcmp.eq.s32.totalorder %v265, %v747
        %vm800 = vcmp.eq.s32.totalorder %v265, %v750
        %vm801 = vcmp.eq.s32.totalorder %v265, %v753
        %vm802 = vcmp.eq.s32.totalorder %v265, %v756
        %vm803 = vcmp.eq.s32.totalorder %v265, %v759
        %vm804 = vcmp.eq.s32.totalorder %v265, %v762
        %vm805 = vcmp.eq.s32.totalorder %v265, %v765
        %vm806 = vcmp.eq.s32.totalorder %v265, %v768
        %vm807 = vcmp.eq.s32.totalorder %v265, %v771
        %vm808 = vcmp.eq.s32.totalorder %v265, %v774
        %vm809 = vcmp.eq.s32.totalorder %v265, %v777
        %v810 = vsel %vm778, 1, 0
        %v811 = vsel %vm779, 1, 0
        %v812 = vsel %vm780, 1, 0
        %v813 = vsel %vm781, 1, 0
        %v814 = vsel %vm782, 1, 0
        %v815 = vsel %vm783, 1, 0
        %v816 = vsel %vm784, 1, 0
        %v817 = vsel %vm785, 1, 0
        %v818 = vsel %vm786, 1, 0
        %v819 = vsel %vm787, 1, 0
        %v820 = vsel %vm788, 1, 0
        %v821 = vsel %vm789, 1, 0
        %v822 = vsel %vm790, 1, 0
        %v823 = vsel %vm791, 1, 0
        %v824 = vsel %vm792, 1, 0
        %v825 = vsel %vm793, 1, 0
        %v826 = vsel %vm794, 1, 0
        %v827 = vsel %vm795, 1, 0
        %v828 = vsel %vm796, 1, 0
        %v829 = vsel %vm797, 1, 0
        %v830 = vsel %vm798, 1, 0
        %v831 = vsel %vm799, 1, 0
        %v832 = vsel %vm800, 1, 0
        %v833 = vsel %vm801, 1, 0
        %v834 = vsel %vm802, 1, 0
        %v835 = vsel %vm803, 1, 0
        %v836 = vsel %vm804, 1, 0
        %v837 = vsel %vm805, 1, 0
        %v838 = vsel %vm806, 1, 0
        %v839 = vsel %vm807, 1, 0
        %v840 = vsel %vm808, 1, 0
        %v841 = vsel %vm809, 1, 0
        %v842 = vcvt.s32.f32 %v810
        %v843 = vcvt.s32.f32 %v811
        %v844 = vcvt.s32.f32 %v812
        %v845 = vcvt.s32.f32 %v813
        %v846 = vcvt.s32.f32 %v814
        %v847 = vcvt.s32.f32 %v815
        %v848 = vcvt.s32.f32 %v816
        %v849 = vcvt.s32.f32 %v817
        %v850 = vcvt.s32.f32 %v818
        %v851 = vcvt.s32.f32 %v819
        %v852 = vcvt.s32.f32 %v820
        %v853 = vcvt.s32.f32 %v821
        %v854 = vcvt.s32.f32 %v822
        %v855 = vcvt.s32.f32 %v823
        %v856 = vcvt.s32.f32 %v824
        %v857 = vcvt.s32.f32 %v825
        %v858 = vcvt.s32.f32 %v826
        %v859 = vcvt.s32.f32 %v827
        %v860 = vcvt.s32.f32 %v828
        %v861 = vcvt.s32.f32 %v829
        %v862 = vcvt.s32.f32 %v830
        %v863 = vcvt.s32.f32 %v831
        %v864 = vcvt.s32.f32 %v832
        %v865 = vcvt.s32.f32 %v833
        %v866 = vcvt.s32.f32 %v834
        %v867 = vcvt.s32.f32 %v835
        %v868 = vcvt.s32.f32 %v836
        %v869 = vcvt.s32.f32 %v837
        %v870 = vcvt.s32.f32 %v838
        %v871 = vcvt.s32.f32 %v839
        %v872 = vcvt.s32.f32 %v840
        %v873 = vcvt.s32.f32 %v841
        %v874 = vsub.f32 %v426, %v842
        %v875 = vsub.f32 %v427, %v843
        %v876 = vsub.f32 %v428, %v844
        %v877 = vsub.f32 %v429, %v845
        %v878 = vsub.f32 %v430, %v846
        %v879 = vsub.f32 %v431, %v847
        %v880 = vsub.f32 %v432, %v848
        %v881 = vsub.f32 %v433, %v849
        %v882 = vsub.f32 %v434, %v850
        %v883 = vsub.f32 %v435, %v851
        %v884 = vsub.f32 %v436, %v852
        %v885 = vsub.f32 %v437, %v853
        %v886 = vsub.f32 %v438, %v854
        %v887 = vsub.f32 %v439, %v855
        %v888 = vsub.f32 %v440, %v856
        %v889 = vsub.f32 %v441, %v857
        %v890 = vsub.f32 %v442, %v858
        %v891 = vsub.f32 %v443, %v859
        %v892 = vsub.f32 %v444, %v860
        %v893 = vsub.f32 %v445, %v861
        %v894 = vsub.f32 %v446, %v862
        %v895 = vsub.f32 %v447, %v863
        %v896 = vsub.f32 %v448, %v864
        %v897 = vsub.f32 %v449, %v865
        %v898 = vsub.f32 %v450, %v866
        %v899 = vsub.f32 %v451, %v867
        %v900 = vsub.f32 %v452, %v868
        %v901 = vsub.f32 %v453, %v869
        %v902 = vsub.f32 %v454, %v870
        %v903 = vsub.f32 %v455, %v871
        %v904 = vsub.f32 %v456, %v872
        %v905 = vsub.f32 %v457, %v873
        %v906 = vld [vmem:[#allocation2] sm:$0xff]
        %v907 = vld [vmem:[#allocation2 + $0x8] sm:$0xff]
        %v908 = vld [vmem:[#allocation2 + $0x10] sm:$0xff]
        %v909 = vld [vmem:[#allocation2 + $0x18] sm:$0xff]
        %v910 = vld [vmem:[#allocation2 + $0x20] sm:$0xff]
        %v911 = vld [vmem:[#allocation2 + $0x28] sm:$0xff]
        %v912 = vld [vmem:[#allocation2 + $0x30] sm:$0xff]
        %v913 = vld [vmem:[#allocation2 + $0x38] sm:$0xff]
        %v914 = vld [vmem:[#allocation2 + $0x40] sm:$0xff]
        %v915 = vld [vmem:[#allocation2 + $0x48] sm:$0xff]
        %v916 = vld [vmem:[#allocation2 + $0x50] sm:$0xff]
        %v917 = vld [vmem:[#allocation2 + $0x58] sm:$0xff]
        %v918 = vld [vmem:[#allocation2 + $0x60] sm:$0xff]
        %v919 = vld [vmem:[#allocation2 + $0x68] sm:$0xff]
        %v920 = vld [vmem:[#allocation2 + $0x70] sm:$0xff]
        %v921 = vld [vmem:[#allocation2 + $0x78] sm:$0xff]
        %922 = vmatprep.subr.mxu0 0.0
        %v923 = vand.u32 %v921, 4294901760
        %924 = vmatpush1.msra.mxu0 %v923
        %925 = vmatprep.subr.mxu0 0.0
        %v926 = vand.u32 %v920, 4294901760
        %927 = vmatpush1.msra.mxu0 %v926
        %928 = vmatprep.subr.mxu0 0.0
        %v929 = vand.u32 %v919, 4294901760
        %930 = vmatpush1.msra.mxu0 %v929
        %931 = vmatprep.subr.mxu0 0.0
        %v932 = vand.u32 %v918, 4294901760
        %933 = vmatpush1.msra.mxu0 %v932
        %934 = vmatprep.subr.mxu0 0.0
        %v935 = vand.u32 %v917, 4294901760
        %936 = vmatpush1.msra.mxu0 %v935
        %937 = vmatprep.subr.mxu0 0.0
        %v938 = vand.u32 %v916, 4294901760
        %939 = vmatpush1.msra.mxu0 %v938
        %940 = vmatprep.subr.mxu0 0.0
        %v941 = vand.u32 %v915, 4294901760
        %942 = vmatpush1.msra.mxu0 %v941
        %943 = vmatprep.subr.mxu0 0.0
        %v944 = vand.u32 %v914, 4294901760
        %945 = vmatpush1.msra.mxu0 %v944
        %946 = vmatprep.subr.mxu0 0.0
        %v947 = vand.u32 %v913, 4294901760
        %948 = vmatpush1.msra.mxu0 %v947
        %949 = vmatprep.subr.mxu0 0.0
        %v950 = vand.u32 %v912, 4294901760
        %951 = vmatpush1.msra.mxu0 %v950
        %952 = vmatprep.subr.mxu0 0.0
        %v953 = vand.u32 %v911, 4294901760
        %954 = vmatpush1.msra.mxu0 %v953
        %955 = vmatprep.subr.mxu0 0.0
        %v956 = vand.u32 %v910, 4294901760
        %957 = vmatpush1.msra.mxu0 %v956
        %958 = vmatprep.subr.mxu0 0.0
        %v959 = vand.u32 %v909, 4294901760
        %960 = vmatpush1.msra.mxu0 %v959
        %961 = vmatprep.subr.mxu0 0.0
        %v962 = vand.u32 %v908, 4294901760
        %963 = vmatpush1.msra.mxu0 %v962
        %964 = vmatprep.subr.mxu0 0.0
        %v965 = vand.u32 %v907, 4294901760
        %966 = vmatpush1.msra.mxu0 %v965
        %967 = vmatprep.subr.mxu0 0.0
        %v968 = vand.u32 %v906, 4294901760
        %969 = vmatpush1.msra.mxu0 %v968
        %970 = vmatprep.subr.mxu0 0.0
        %971 = vmatpush2.msra.mxu0 0.0
        %972 = vmatprep.subr.mxu0 0.0
        %973 = vmatpush2.msra.mxu0 0.0
        %974 = vmatprep.subr.mxu0 0.0
        %975 = vmatpush2.msra.mxu0 0.0
        %976 = vmatprep.subr.mxu0 0.0
        %977 = vmatpush2.msra.mxu0 0.0
        %978 = vmatprep.subr.mxu0 0.0
        %979 = vmatpush2.msra.mxu0 0.0
        %980 = vmatprep.subr.mxu0 0.0
        %981 = vmatpush2.msra.mxu0 0.0
        %982 = vmatprep.subr.mxu0 0.0
        %983 = vmatpush2.msra.mxu0 0.0
        %984 = vmatprep.subr.mxu0 0.0
        %985 = vmatpush2.msra.mxu0 0.0
        %986 = vmatprep.subr.mxu0 0.0
        %987 = vmatpush2.msra.mxu0 0.0
        %988 = vmatprep.subr.mxu0 0.0
        %989 = vmatpush2.msra.mxu0 0.0
        %990 = vmatprep.subr.mxu0 0.0
        %991 = vmatpush2.msra.mxu0 0.0
        %992 = vmatprep.subr.mxu0 0.0
        %993 = vmatpush2.msra.mxu0 0.0
        %994 = vmatprep.subr.mxu0 0.0
        %995 = vmatpush2.msra.mxu0 0.0
        %996 = vmatprep.subr.mxu0 0.0
        %997 = vmatpush2.msra.mxu0 0.0
        %998 = vmatprep.subr.mxu0 0.0
        %999 = vmatpush2.msra.mxu0 0.0
        %1000 = vmatprep.subr.mxu0 0.0
        %1001 = vmatpush2.msra.mxu0 0.0
        %1002 = vmatprep.mubr.f32.mxu0 0.0
        %v1003 = vand.u32 %v650, 4294901760
        %v1004 = vsub.f32 %v650, %v1003
        %v1005 = vand.u32 %v1004, 4294901760
        %v1006 = vsub.f32 %v1004, %v1005
        %v1007 = vand.u32 %v1006, 4294901760
        %1008 = vmatmul.mubr.f32.gmra.mxu0 %v1007
        %v1009 = vpop.f32.mrf.mxu0
        %v1010 = vadd.f32 0.0, %v1009
        %v1011 = vpop.f32.mrf.mxu0
        %1012 = vmatprep.mubr.f32.mxu0 0.0
        %v1013 = vand.u32 %v651, 4294901760
        %v1014 = vsub.f32 %v651, %v1013
        %v1015 = vand.u32 %v1014, 4294901760
        %v1016 = vsub.f32 %v1014, %v1015
        %v1017 = vand.u32 %v1016, 4294901760
        %1018 = vmatmul.mubr.f32.gmra.mxu0 %v1017
        %v1019 = vpop.f32.mrf.mxu0
        %v1020 = vadd.f32 0.0, %v1019
        %v1021 = vpop.f32.mrf.mxu0
        %1022 = vmatprep.mubr.f32.mxu0 0.0
        %v1023 = vand.u32 %v652, 4294901760
        %v1024 = vsub.f32 %v652, %v1023
        %v1025 = vand.u32 %v1024, 4294901760
        %v1026 = vsub.f32 %v1024, %v1025
        %v1027 = vand.u32 %v1026, 4294901760
        %1028 = vmatmul.mubr.f32.gmra.mxu0 %v1027
        %v1029 = vpop.f32.mrf.mxu0
        %v1030 = vadd.f32 0.0, %v1029
        %v1031 = vpop.f32.mrf.mxu0
        %1032 = vmatprep.mubr.f32.mxu0 0.0
        %v1033 = vand.u32 %v653, 4294901760
        %v1034 = vsub.f32 %v653, %v1033
        %v1035 = vand.u32 %v1034, 4294901760
        %v1036 = vsub.f32 %v1034, %v1035
        %v1037 = vand.u32 %v1036, 4294901760
        %1038 = vmatmul.mubr.f32.gmra.mxu0 %v1037
        %v1039 = vpop.f32.mrf.mxu0
        %v1040 = vadd.f32 0.0, %v1039
        %v1041 = vpop.f32.mrf.mxu0
        %1042 = vmatprep.mubr.f32.mxu0 0.0
        %v1043 = vand.u32 %v654, 4294901760
        %v1044 = vsub.f32 %v654, %v1043
        %v1045 = vand.u32 %v1044, 4294901760
        %v1046 = vsub.f32 %v1044, %v1045
        %v1047 = vand.u32 %v1046, 4294901760
        %1048 = vmatmul.mubr.f32.gmra.mxu0 %v1047
        %v1049 = vpop.f32.mrf.mxu0
        %v1050 = vadd.f32 0.0, %v1049
        %v1051 = vpop.f32.mrf.mxu0
        %1052 = vmatprep.mubr.f32.mxu0 0.0
        %v1053 = vand.u32 %v655, 4294901760
        %v1054 = vsub.f32 %v655, %v1053
        %v1055 = vand.u32 %v1054, 4294901760
        %v1056 = vsub.f32 %v1054, %v1055
        %v1057 = vand.u32 %v1056, 4294901760
        %1058 = vmatmul.mubr.f32.gmra.mxu0 %v1057
        %v1059 = vpop.f32.mrf.mxu0
        %v1060 = vadd.f32 0.0, %v1059
        %v1061 = vpop.f32.mrf.mxu0
        %1062 = vmatprep.mubr.f32.mxu0 0.0
        %v1063 = vand.u32 %v656, 4294901760
        %v1064 = vsub.f32 %v656, %v1063
        %v1065 = vand.u32 %v1064, 4294901760
        %v1066 = vsub.f32 %v1064, %v1065
        %v1067 = vand.u32 %v1066, 4294901760
        %1068 = vmatmul.mubr.f32.gmra.mxu0 %v1067
        %v1069 = vpop.f32.mrf.mxu0
        %v1070 = vadd.f32 0.0, %v1069
        %v1071 = vpop.f32.mrf.mxu0
        %1072 = vmatprep.mubr.f32.mxu0 0.0
        %v1073 = vand.u32 %v657, 4294901760
        %v1074 = vsub.f32 %v657, %v1073
        %v1075 = vand.u32 %v1074, 4294901760
        %v1076 = vsub.f32 %v1074, %v1075
        %v1077 = vand.u32 %v1076, 4294901760
        %1078 = vmatmul.mubr.f32.gmra.mxu0 %v1077
        %v1079 = vpop.f32.mrf.mxu0
        %v1080 = vadd.f32 0.0, %v1079
        %v1081 = vpop.f32.mrf.mxu0
        %1082 = vmatprep.mubr.f32.mxu0 0.0
        %v1083 = vand.u32 %v658, 4294901760
        %v1084 = vsub.f32 %v658, %v1083
        %v1085 = vand.u32 %v1084, 4294901760
        %v1086 = vsub.f32 %v1084, %v1085
        %v1087 = vand.u32 %v1086, 4294901760
        %1088 = vmatmul.mubr.f32.gmra.mxu0 %v1087
        %v1089 = vpop.f32.mrf.mxu0
        %v1090 = vadd.f32 0.0, %v1089
        %v1091 = vpop.f32.mrf.mxu0
        %1092 = vmatprep.mubr.f32.mxu0 0.0
        %v1093 = vand.u32 %v659, 4294901760
        %v1094 = vsub.f32 %v659, %v1093
        %v1095 = vand.u32 %v1094, 4294901760
        %v1096 = vsub.f32 %v1094, %v1095
        %v1097 = vand.u32 %v1096, 4294901760
        %1098 = vmatmul.mubr.f32.gmra.mxu0 %v1097
        %v1099 = vpop.f32.mrf.mxu0
        %v1100 = vadd.f32 0.0, %v1099
        %v1101 = vpop.f32.mrf.mxu0
        %1102 = vmatprep.mubr.f32.mxu0 0.0
        %v1103 = vand.u32 %v660, 4294901760
        %v1104 = vsub.f32 %v660, %v1103
        %v1105 = vand.u32 %v1104, 4294901760
        %v1106 = vsub.f32 %v1104, %v1105
        %v1107 = vand.u32 %v1106, 4294901760
        %1108 = vmatmul.mubr.f32.gmra.mxu0 %v1107
        %v1109 = vpop.f32.mrf.mxu0
        %v1110 = vadd.f32 0.0, %v1109
        %v1111 = vpop.f32.mrf.mxu0
        %1112 = vmatprep.mubr.f32.mxu0 0.0
        %v1113 = vand.u32 %v661, 4294901760
        %v1114 = vsub.f32 %v661, %v1113
        %v1115 = vand.u32 %v1114, 4294901760
        %v1116 = vsub.f32 %v1114, %v1115
        %v1117 = vand.u32 %v1116, 4294901760
        %1118 = vmatmul.mubr.f32.gmra.mxu0 %v1117
        %v1119 = vpop.f32.mrf.mxu0
        %v1120 = vadd.f32 0.0, %v1119
        %v1121 = vpop.f32.mrf.mxu0
        %1122 = vmatprep.mubr.f32.mxu0 0.0
        %v1123 = vand.u32 %v662, 4294901760
        %v1124 = vsub.f32 %v662, %v1123
        %v1125 = vand.u32 %v1124, 4294901760
        %v1126 = vsub.f32 %v1124, %v1125
        %v1127 = vand.u32 %v1126, 4294901760
        %1128 = vmatmul.mubr.f32.gmra.mxu0 %v1127
        %v1129 = vpop.f32.mrf.mxu0
        %v1130 = vadd.f32 0.0, %v1129
        %v1131 = vpop.f32.mrf.mxu0
        %1132 = vmatprep.mubr.f32.mxu0 0.0
        %v1133 = vand.u32 %v663, 4294901760
        %v1134 = vsub.f32 %v663, %v1133
        %v1135 = vand.u32 %v1134, 4294901760
        %v1136 = vsub.f32 %v1134, %v1135
        %v1137 = vand.u32 %v1136, 4294901760
        %1138 = vmatmul.mubr.f32.gmra.mxu0 %v1137
        %v1139 = vpop.f32.mrf.mxu0
        %v1140 = vadd.f32 0.0, %v1139
        %v1141 = vpop.f32.mrf.mxu0
        %1142 = vmatprep.mubr.f32.mxu0 0.0
        %v1143 = vand.u32 %v664, 4294901760
        %v1144 = vsub.f32 %v664, %v1143
        %v1145 = vand.u32 %v1144, 4294901760
        %v1146 = vsub.f32 %v1144, %v1145
        %v1147 = vand.u32 %v1146, 4294901760
        %1148 = vmatmul.mubr.f32.gmra.mxu0 %v1147
        %v1149 = vpop.f32.mrf.mxu0
        %v1150 = vadd.f32 0.0, %v1149
        %v1151 = vpop.f32.mrf.mxu0
        %1152 = vmatprep.mubr.f32.mxu0 0.0
        %v1153 = vand.u32 %v665, 4294901760
        %v1154 = vsub.f32 %v665, %v1153
        %v1155 = vand.u32 %v1154, 4294901760
        %v1156 = vsub.f32 %v1154, %v1155
        %v1157 = vand.u32 %v1156, 4294901760
        %1158 = vmatmul.mubr.f32.gmra.mxu0 %v1157
        %v1159 = vpop.f32.mrf.mxu0
        %v1160 = vadd.f32 0.0, %v1159
        %v1161 = vpop.f32.mrf.mxu0
        %1162 = vmatprep.mubr.f32.mxu0 0.0
        %v1163 = vand.u32 %v666, 4294901760
        %v1164 = vsub.f32 %v666, %v1163
        %v1165 = vand.u32 %v1164, 4294901760
        %v1166 = vsub.f32 %v1164, %v1165
        %v1167 = vand.u32 %v1166, 4294901760
        %1168 = vmatmul.mubr.f32.gmra.mxu0 %v1167
        %v1169 = vpop.f32.mrf.mxu0
        %v1170 = vadd.f32 0.0, %v1169
        %v1171 = vpop.f32.mrf.mxu0
        %1172 = vmatprep.mubr.f32.mxu0 0.0
        %v1173 = vand.u32 %v667, 4294901760
        %v1174 = vsub.f32 %v667, %v1173
        %v1175 = vand.u32 %v1174, 4294901760
        %v1176 = vsub.f32 %v1174, %v1175
        %v1177 = vand.u32 %v1176, 4294901760
        %1178 = vmatmul.mubr.f32.gmra.mxu0 %v1177
        %v1179 = vpop.f32.mrf.mxu0
        %v1180 = vadd.f32 0.0, %v1179
        %v1181 = vpop.f32.mrf.mxu0
        %1182 = vmatprep.mubr.f32.mxu0 0.0
        %v1183 = vand.u32 %v668, 4294901760
        %v1184 = vsub.f32 %v668, %v1183
        %v1185 = vand.u32 %v1184, 4294901760
        %v1186 = vsub.f32 %v1184, %v1185
        %v1187 = vand.u32 %v1186, 4294901760
        %1188 = vmatmul.mubr.f32.gmra.mxu0 %v1187
        %v1189 = vpop.f32.mrf.mxu0
        %v1190 = vadd.f32 0.0, %v1189
        %v1191 = vpop.f32.mrf.mxu0
        %1192 = vmatprep.mubr.f32.mxu0 0.0
        %v1193 = vand.u32 %v669, 4294901760
        %v1194 = vsub.f32 %v669, %v1193
        %v1195 = vand.u32 %v1194, 4294901760
        %v1196 = vsub.f32 %v1194, %v1195
        %v1197 = vand.u32 %v1196, 4294901760
        %1198 = vmatmul.mubr.f32.gmra.mxu0 %v1197
        %v1199 = vpop.f32.mrf.mxu0
        %v1200 = vadd.f32 0.0, %v1199
        %v1201 = vpop.f32.mrf.mxu0
        %1202 = vmatprep.mubr.f32.mxu0 0.0
        %v1203 = vand.u32 %v670, 4294901760
        %v1204 = vsub.f32 %v670, %v1203
        %v1205 = vand.u32 %v1204, 4294901760
        %v1206 = vsub.f32 %v1204, %v1205
        %v1207 = vand.u32 %v1206, 4294901760
        %1208 = vmatmul.mubr.f32.gmra.mxu0 %v1207
        %v1209 = vpop.f32.mrf.mxu0
        %v1210 = vadd.f32 0.0, %v1209
        %v1211 = vpop.f32.mrf.mxu0
        %1212 = vmatprep.mubr.f32.mxu0 0.0
        %v1213 = vand.u32 %v671, 4294901760
        %v1214 = vsub.f32 %v671, %v1213
        %v1215 = vand.u32 %v1214, 4294901760
        %v1216 = vsub.f32 %v1214, %v1215
        %v1217 = vand.u32 %v1216, 4294901760
        %1218 = vmatmul.mubr.f32.gmra.mxu0 %v1217
        %v1219 = vpop.f32.mrf.mxu0
        %v1220 = vadd.f32 0.0, %v1219
        %v1221 = vpop.f32.mrf.mxu0
        %1222 = vmatprep.mubr.f32.mxu0 0.0
        %v1223 = vand.u32 %v672, 4294901760
        %v1224 = vsub.f32 %v672, %v1223
        %v1225 = vand.u32 %v1224, 4294901760
        %v1226 = vsub.f32 %v1224, %v1225
        %v1227 = vand.u32 %v1226, 4294901760
        %1228 = vmatmul.mubr.f32.gmra.mxu0 %v1227
        %v1229 = vpop.f32.mrf.mxu0
        %v1230 = vadd.f32 0.0, %v1229
        %v1231 = vpop.f32.mrf.mxu0
        %1232 = vmatprep.mubr.f32.mxu0 0.0
        %v1233 = vand.u32 %v673, 4294901760
        %v1234 = vsub.f32 %v673, %v1233
        %v1235 = vand.u32 %v1234, 4294901760
        %v1236 = vsub.f32 %v1234, %v1235
        %v1237 = vand.u32 %v1236, 4294901760
        %1238 = vmatmul.mubr.f32.gmra.mxu0 %v1237
        %v1239 = vpop.f32.mrf.mxu0
        %v1240 = vadd.f32 0.0, %v1239
        %v1241 = vpop.f32.mrf.mxu0
        %1242 = vmatprep.mubr.f32.mxu0 0.0
        %v1243 = vand.u32 %v674, 4294901760
        %v1244 = vsub.f32 %v674, %v1243
        %v1245 = vand.u32 %v1244, 4294901760
        %v1246 = vsub.f32 %v1244, %v1245
        %v1247 = vand.u32 %v1246, 4294901760
        %1248 = vmatmul.mubr.f32.gmra.mxu0 %v1247
        %v1249 = vpop.f32.mrf.mxu0
        %v1250 = vadd.f32 0.0, %v1249
        %v1251 = vpop.f32.mrf.mxu0
        %1252 = vmatprep.mubr.f32.mxu0 0.0
        %v1253 = vand.u32 %v675, 4294901760
        %v1254 = vsub.f32 %v675, %v1253
        %v1255 = vand.u32 %v1254, 4294901760
        %v1256 = vsub.f32 %v1254, %v1255
        %v1257 = vand.u32 %v1256, 4294901760
        %1258 = vmatmul.mubr.f32.gmra.mxu0 %v1257
        %v1259 = vpop.f32.mrf.mxu0
        %v1260 = vadd.f32 0.0, %v1259
        %v1261 = vpop.f32.mrf.mxu0
        %1262 = vmatprep.mubr.f32.mxu0 0.0
        %v1263 = vand.u32 %v676, 4294901760
        %v1264 = vsub.f32 %v676, %v1263
        %v1265 = vand.u32 %v1264, 4294901760
        %v1266 = vsub.f32 %v1264, %v1265
        %v1267 = vand.u32 %v1266, 4294901760
        %1268 = vmatmul.mubr.f32.gmra.mxu0 %v1267
        %v1269 = vpop.f32.mrf.mxu0
        %v1270 = vadd.f32 0.0, %v1269
        %v1271 = vpop.f32.mrf.mxu0
        %1272 = vmatprep.mubr.f32.mxu0 0.0
        %v1273 = vand.u32 %v677, 4294901760
        %v1274 = vsub.f32 %v677, %v1273
        %v1275 = vand.u32 %v1274, 4294901760
        %v1276 = vsub.f32 %v1274, %v1275
        %v1277 = vand.u32 %v1276, 4294901760
        %1278 = vmatmul.mubr.f32.gmra.mxu0 %v1277
        %v1279 = vpop.f32.mrf.mxu0
        %v1280 = vadd.f32 0.0, %v1279
        %v1281 = vpop.f32.mrf.mxu0
        %1282 = vmatprep.mubr.f32.mxu0 0.0
        %v1283 = vand.u32 %v678, 4294901760
        %v1284 = vsub.f32 %v678, %v1283
        %v1285 = vand.u32 %v1284, 4294901760
        %v1286 = vsub.f32 %v1284, %v1285
        %v1287 = vand.u32 %v1286, 4294901760
        %1288 = vmatmul.mubr.f32.gmra.mxu0 %v1287
        %v1289 = vpop.f32.mrf.mxu0
        %v1290 = vadd.f32 0.0, %v1289
        %v1291 = vpop.f32.mrf.mxu0
        %1292 = vmatprep.mubr.f32.mxu0 0.0
        %v1293 = vand.u32 %v679, 4294901760
        %v1294 = vsub.f32 %v679, %v1293
        %v1295 = vand.u32 %v1294, 4294901760
        %v1296 = vsub.f32 %v1294, %v1295
        %v1297 = vand.u32 %v1296, 4294901760
        %1298 = vmatmul.mubr.f32.gmra.mxu0 %v1297
        %v1299 = vpop.f32.mrf.mxu0
        %v1300 = vadd.f32 0.0, %v1299
        %v1301 = vpop.f32.mrf.mxu0
        %1302 = vmatprep.mubr.f32.mxu0 0.0
        %v1303 = vand.u32 %v680, 4294901760
        %v1304 = vsub.f32 %v680, %v1303
        %v1305 = vand.u32 %v1304, 4294901760
        %v1306 = vsub.f32 %v1304, %v1305
        %v1307 = vand.u32 %v1306, 4294901760
        %1308 = vmatmul.mubr.f32.gmra.mxu0 %v1307
        %v1309 = vpop.f32.mrf.mxu0
        %v1310 = vadd.f32 0.0, %v1309
        %v1311 = vpop.f32.mrf.mxu0
        %1312 = vmatprep.mubr.f32.mxu0 0.0
        %v1313 = vand.u32 %v681, 4294901760
        %v1314 = vsub.f32 %v681, %v1313
        %v1315 = vand.u32 %v1314, 4294901760
        %v1316 = vsub.f32 %v1314, %v1315
        %v1317 = vand.u32 %v1316, 4294901760
        %1318 = vmatmul.mubr.f32.gmra.mxu0 %v1317
        %v1319 = vpop.f32.mrf.mxu0
        %v1320 = vadd.f32 0.0, %v1319
        %v1321 = vpop.f32.mrf.mxu0
        %1322 = vdwg.mxu0
        %1323 = vmatprep.subr.mxu0 0.0
        %v1324 = vand.u32 %v921, 4294901760
        %v1325 = vsub.f32 %v921, %v1324
        %v1326 = vand.u32 %v1325, 4294901760
        %v1327 = vsub.f32 %v1325, %v1326
        %v1328 = vand.u32 %v1327, 4294901760
        %1329 = vmatpush1.msra.mxu0 %v1328
        %1330 = vmatprep.subr.mxu0 0.0
        %v1331 = vand.u32 %v920, 4294901760
        %v1332 = vsub.f32 %v920, %v1331
        %v1333 = vand.u32 %v1332, 4294901760
        %v1334 = vsub.f32 %v1332, %v1333
        %v1335 = vand.u32 %v1334, 4294901760
        %1336 = vmatpush1.msra.mxu0 %v1335
        %1337 = vmatprep.subr.mxu0 0.0
        %v1338 = vand.u32 %v919, 4294901760
        %v1339 = vsub.f32 %v919, %v1338
        %v1340 = vand.u32 %v1339, 4294901760
        %v1341 = vsub.f32 %v1339, %v1340
        %v1342 = vand.u32 %v1341, 4294901760
        %1343 = vmatpush1.msra.mxu0 %v1342
        %1344 = vmatprep.subr.mxu0 0.0
        %v1345 = vand.u32 %v918, 4294901760
        %v1346 = vsub.f32 %v918, %v1345
        %v1347 = vand.u32 %v1346, 4294901760
        %v1348 = vsub.f32 %v1346, %v1347
        %v1349 = vand.u32 %v1348, 4294901760
        %1350 = vmatpush1.msra.mxu0 %v1349
        %1351 = vmatprep.subr.mxu0 0.0
        %v1352 = vand.u32 %v917, 4294901760
        %v1353 = vsub.f32 %v917, %v1352
        %v1354 = vand.u32 %v1353, 4294901760
        %v1355 = vsub.f32 %v1353, %v1354
        %v1356 = vand.u32 %v1355, 4294901760
        %1357 = vmatpush1.msra.mxu0 %v1356
        %1358 = vmatprep.subr.mxu0 0.0
        %v1359 = vand.u32 %v916, 4294901760
        %v1360 = vsub.f32 %v916, %v1359
        %v1361 = vand.u32 %v1360, 4294901760
        %v1362 = vsub.f32 %v1360, %v1361
        %v1363 = vand.u32 %v1362, 4294901760
        %1364 = vmatpush1.msra.mxu0 %v1363
        %1365 = vmatprep.subr.mxu0 0.0
        %v1366 = vand.u32 %v915, 4294901760
        %v1367 = vsub.f32 %v915, %v1366
        %v1368 = vand.u32 %v1367, 4294901760
        %v1369 = vsub.f32 %v1367, %v1368
        %v1370 = vand.u32 %v1369, 4294901760
        %1371 = vmatpush1.msra.mxu0 %v1370
        %1372 = vmatprep.subr.mxu0 0.0
        %v1373 = vand.u32 %v914, 4294901760
        %v1374 = vsub.f32 %v914, %v1373
        %v1375 = vand.u32 %v1374, 4294901760
        %v1376 = vsub.f32 %v1374, %v1375
        %v1377 = vand.u32 %v1376, 4294901760
        %1378 = vmatpush1.msra.mxu0 %v1377
        %1379 = vmatprep.subr.mxu0 0.0
        %v1380 = vand.u32 %v913, 4294901760
        %v1381 = vsub.f32 %v913, %v1380
        %v1382 = vand.u32 %v1381, 4294901760
        %v1383 = vsub.f32 %v1381, %v1382
        %v1384 = vand.u32 %v1383, 4294901760
        %1385 = vmatpush1.msra.mxu0 %v1384
        %1386 = vmatprep.subr.mxu0 0.0
        %v1387 = vand.u32 %v912, 4294901760
        %v1388 = vsub.f32 %v912, %v1387
        %v1389 = vand.u32 %v1388, 4294901760
        %v1390 = vsub.f32 %v1388, %v1389
        %v1391 = vand.u32 %v1390, 4294901760
        %1392 = vmatpush1.msra.mxu0 %v1391
        %1393 = vmatprep.subr.mxu0 0.0
        %v1394 = vand.u32 %v911, 4294901760
        %v1395 = vsub.f32 %v911, %v1394
        %v1396 = vand.u32 %v1395, 4294901760
        %v1397 = vsub.f32 %v1395, %v1396
        %v1398 = vand.u32 %v1397, 4294901760
        %1399 = vmatpush1.msra.mxu0 %v1398
        %1400 = vmatprep.subr.mxu0 0.0
        %v1401 = vand.u32 %v910, 4294901760
        %v1402 = vsub.f32 %v910, %v1401
        %v1403 = vand.u32 %v1402, 4294901760
        %v1404 = vsub.f32 %v1402, %v1403
        %v1405 = vand.u32 %v1404, 4294901760
        %1406 = vmatpush1.msra.mxu0 %v1405
        %1407 = vmatprep.subr.mxu0 0.0
        %v1408 = vand.u32 %v909, 4294901760
        %v1409 = vsub.f32 %v909, %v1408
        %v1410 = vand.u32 %v1409, 4294901760
        %v1411 = vsub.f32 %v1409, %v1410
        %v1412 = vand.u32 %v1411, 4294901760
        %1413 = vmatpush1.msra.mxu0 %v1412
        %1414 = vmatprep.subr.mxu0 0.0
        %v1415 = vand.u32 %v908, 4294901760
        %v1416 = vsub.f32 %v908, %v1415
        %v1417 = vand.u32 %v1416, 4294901760
        %v1418 = vsub.f32 %v1416, %v1417
        %v1419 = vand.u32 %v1418, 4294901760
        %1420 = vmatpush1.msra.mxu0 %v1419
        %1421 = vmatprep.subr.mxu0 0.0
        %v1422 = vand.u32 %v907, 4294901760
        %v1423 = vsub.f32 %v907, %v1422
        %v1424 = vand.u32 %v1423, 4294901760
        %v1425 = vsub.f32 %v1423, %v1424
        %v1426 = vand.u32 %v1425, 4294901760
        %1427 = vmatpush1.msra.mxu0 %v1426
        %1428 = vmatprep.subr.mxu0 0.0
        %v1429 = vand.u32 %v906, 4294901760
        %v1430 = vsub.f32 %v906, %v1429
        %v1431 = vand.u32 %v1430, 4294901760
        %v1432 = vsub.f32 %v1430, %v1431
        %v1433 = vand.u32 %v1432, 4294901760
        %1434 = vmatpush1.msra.mxu0 %v1433
        %1435 = vmatprep.subr.mxu0 0.0
        %1436 = vmatpush2.msra.mxu0 0.0
        %1437 = vmatprep.subr.mxu0 0.0
        %1438 = vmatpush2.msra.mxu0 0.0
        %1439 = vmatprep.subr.mxu0 0.0
        %1440 = vmatpush2.msra.mxu0 0.0
        %1441 = vmatprep.subr.mxu0 0.0
        %1442 = vmatpush2.msra.mxu0 0.0
        %1443 = vmatprep.subr.mxu0 0.0
        %1444 = vmatpush2.msra.mxu0 0.0
        %1445 = vmatprep.subr.mxu0 0.0
        %1446 = vmatpush2.msra.mxu0 0.0
        %1447 = vmatprep.subr.mxu0 0.0
        %1448 = vmatpush2.msra.mxu0 0.0
        %1449 = vmatprep.subr.mxu0 0.0
        %1450 = vmatpush2.msra.mxu0 0.0
        %1451 = vmatprep.subr.mxu0 0.0
        %1452 = vmatpush2.msra.mxu0 0.0
        %1453 = vmatprep.subr.mxu0 0.0
        %1454 = vmatpush2.msra.mxu0 0.0
        %1455 = vmatprep.subr.mxu0 0.0
        %1456 = vmatpush2.msra.mxu0 0.0
        %1457 = vmatprep.subr.mxu0 0.0
        %1458 = vmatpush2.msra.mxu0 0.0
        %1459 = vmatprep.subr.mxu0 0.0
        %1460 = vmatpush2.msra.mxu0 0.0
        %1461 = vmatprep.subr.mxu0 0.0
        %1462 = vmatpush2.msra.mxu0 0.0
        %1463 = vmatprep.subr.mxu0 0.0
        %1464 = vmatpush2.msra.mxu0 0.0
        %1465 = vmatprep.subr.mxu0 0.0
        %1466 = vmatpush2.msra.mxu0 0.0
        %1467 = vmatprep.mubr.f32.mxu0 0.0
        %v1468 = vand.u32 %v650, 4294901760
        %1469 = vmatmul.mubr.f32.gmra.mxu0 %v1468
        %v1470 = vpop.f32.mrf.mxu0
        %v1471 = vadd.f32 %v1010, %v1470
        %v1472 = vpop.f32.mrf.mxu0
        %1473 = vmatprep.mubr.f32.mxu0 0.0
        %v1474 = vand.u32 %v651, 4294901760
        %1475 = vmatmul.mubr.f32.gmra.mxu0 %v1474
        %v1476 = vpop.f32.mrf.mxu0
        %v1477 = vadd.f32 %v1020, %v1476
        %v1478 = vpop.f32.mrf.mxu0
        %1479 = vmatprep.mubr.f32.mxu0 0.0
        %v1480 = vand.u32 %v652, 4294901760
        %1481 = vmatmul.mubr.f32.gmra.mxu0 %v1480
        %v1482 = vpop.f32.mrf.mxu0
        %v1483 = vadd.f32 %v1030, %v1482
        %v1484 = vpop.f32.mrf.mxu0
        %1485 = vmatprep.mubr.f32.mxu0 0.0
        %v1486 = vand.u32 %v653, 4294901760
        %1487 = vmatmul.mubr.f32.gmra.mxu0 %v1486
        %v1488 = vpop.f32.mrf.mxu0
        %v1489 = vadd.f32 %v1040, %v1488
        %v1490 = vpop.f32.mrf.mxu0
        %1491 = vmatprep.mubr.f32.mxu0 0.0
        %v1492 = vand.u32 %v654, 4294901760
        %1493 = vmatmul.mubr.f32.gmra.mxu0 %v1492
        %v1494 = vpop.f32.mrf.mxu0
        %v1495 = vadd.f32 %v1050, %v1494
        %v1496 = vpop.f32.mrf.mxu0
        %1497 = vmatprep.mubr.f32.mxu0 0.0
        %v1498 = vand.u32 %v655, 4294901760
        %1499 = vmatmul.mubr.f32.gmra.mxu0 %v1498
        %v1500 = vpop.f32.mrf.mxu0
        %v1501 = vadd.f32 %v1060, %v1500
        %v1502 = vpop.f32.mrf.mxu0
        %1503 = vmatprep.mubr.f32.mxu0 0.0
        %v1504 = vand.u32 %v656, 4294901760
        %1505 = vmatmul.mubr.f32.gmra.mxu0 %v1504
        %v1506 = vpop.f32.mrf.mxu0
        %v1507 = vadd.f32 %v1070, %v1506
        %v1508 = vpop.f32.mrf.mxu0
        %1509 = vmatprep.mubr.f32.mxu0 0.0
        %v1510 = vand.u32 %v657, 4294901760
        %1511 = vmatmul.mubr.f32.gmra.mxu0 %v1510
        %v1512 = vpop.f32.mrf.mxu0
        %v1513 = vadd.f32 %v1080, %v1512
        %v1514 = vpop.f32.mrf.mxu0
        %1515 = vmatprep.mubr.f32.mxu0 0.0
        %v1516 = vand.u32 %v658, 4294901760
        %1517 = vmatmul.mubr.f32.gmra.mxu0 %v1516
        %v1518 = vpop.f32.mrf.mxu0
        %v1519 = vadd.f32 %v1090, %v1518
        %v1520 = vpop.f32.mrf.mxu0
        %1521 = vmatprep.mubr.f32.mxu0 0.0
        %v1522 = vand.u32 %v659, 4294901760
        %1523 = vmatmul.mubr.f32.gmra.mxu0 %v1522
        %v1524 = vpop.f32.mrf.mxu0
        %v1525 = vadd.f32 %v1100, %v1524
        %v1526 = vpop.f32.mrf.mxu0
        %1527 = vmatprep.mubr.f32.mxu0 0.0
        %v1528 = vand.u32 %v660, 4294901760
        %1529 = vmatmul.mubr.f32.gmra.mxu0 %v1528
        %v1530 = vpop.f32.mrf.mxu0
        %v1531 = vadd.f32 %v1110, %v1530
        %v1532 = vpop.f32.mrf.mxu0
        %1533 = vmatprep.mubr.f32.mxu0 0.0
        %v1534 = vand.u32 %v661, 4294901760
        %1535 = vmatmul.mubr.f32.gmra.mxu0 %v1534
        %v1536 = vpop.f32.mrf.mxu0
        %v1537 = vadd.f32 %v1120, %v1536
        %v1538 = vpop.f32.mrf.mxu0
        %1539 = vmatprep.mubr.f32.mxu0 0.0
        %v1540 = vand.u32 %v662, 4294901760
        %1541 = vmatmul.mubr.f32.gmra.mxu0 %v1540
        %v1542 = vpop.f32.mrf.mxu0
        %v1543 = vadd.f32 %v1130, %v1542
        %v1544 = vpop.f32.mrf.mxu0
        %1545 = vmatprep.mubr.f32.mxu0 0.0
        %v1546 = vand.u32 %v663, 4294901760
        %1547 = vmatmul.mubr.f32.gmra.mxu0 %v1546
        %v1548 = vpop.f32.mrf.mxu0
        %v1549 = vadd.f32 %v1140, %v1548
        %v1550 = vpop.f32.mrf.mxu0
        %1551 = vmatprep.mubr.f32.mxu0 0.0
        %v1552 = vand.u32 %v664, 4294901760
        %1553 = vmatmul.mubr.f32.gmra.mxu0 %v1552
        %v1554 = vpop.f32.mrf.mxu0
        %v1555 = vadd.f32 %v1150, %v1554
        %v1556 = vpop.f32.mrf.mxu0
        %1557 = vmatprep.mubr.f32.mxu0 0.0
        %v1558 = vand.u32 %v665, 4294901760
        %1559 = vmatmul.mubr.f32.gmra.mxu0 %v1558
        %v1560 = vpop.f32.mrf.mxu0
        %v1561 = vadd.f32 %v1160, %v1560
        %v1562 = vpop.f32.mrf.mxu0
        %1563 = vmatprep.mubr.f32.mxu0 0.0
        %v1564 = vand.u32 %v666, 4294901760
        %1565 = vmatmul.mubr.f32.gmra.mxu0 %v1564
        %v1566 = vpop.f32.mrf.mxu0
        %v1567 = vadd.f32 %v1170, %v1566
        %v1568 = vpop.f32.mrf.mxu0
        %1569 = vmatprep.mubr.f32.mxu0 0.0
        %v1570 = vand.u32 %v667, 4294901760
        %1571 = vmatmul.mubr.f32.gmra.mxu0 %v1570
        %v1572 = vpop.f32.mrf.mxu0
        %v1573 = vadd.f32 %v1180, %v1572
        %v1574 = vpop.f32.mrf.mxu0
        %1575 = vmatprep.mubr.f32.mxu0 0.0
        %v1576 = vand.u32 %v668, 4294901760
        %1577 = vmatmul.mubr.f32.gmra.mxu0 %v1576
        %v1578 = vpop.f32.mrf.mxu0
        %v1579 = vadd.f32 %v1190, %v1578
        %v1580 = vpop.f32.mrf.mxu0
        %1581 = vmatprep.mubr.f32.mxu0 0.0
        %v1582 = vand.u32 %v669, 4294901760
        %1583 = vmatmul.mubr.f32.gmra.mxu0 %v1582
        %v1584 = vpop.f32.mrf.mxu0
        %v1585 = vadd.f32 %v1200, %v1584
        %v1586 = vpop.f32.mrf.mxu0
        %1587 = vmatprep.mubr.f32.mxu0 0.0
        %v1588 = vand.u32 %v670, 4294901760
        %1589 = vmatmul.mubr.f32.gmra.mxu0 %v1588
        %v1590 = vpop.f32.mrf.mxu0
        %v1591 = vadd.f32 %v1210, %v1590
        %v1592 = vpop.f32.mrf.mxu0
        %1593 = vmatprep.mubr.f32.mxu0 0.0
        %v1594 = vand.u32 %v671, 4294901760
        %1595 = vmatmul.mubr.f32.gmra.mxu0 %v1594
        %v1596 = vpop.f32.mrf.mxu0
        %v1597 = vadd.f32 %v1220, %v1596
        %v1598 = vpop.f32.mrf.mxu0
        %1599 = vmatprep.mubr.f32.mxu0 0.0
        %v1600 = vand.u32 %v672, 4294901760
        %1601 = vmatmul.mubr.f32.gmra.mxu0 %v1600
        %v1602 = vpop.f32.mrf.mxu0
        %v1603 = vadd.f32 %v1230, %v1602
        %v1604 = vpop.f32.mrf.mxu0
        %1605 = vmatprep.mubr.f32.mxu0 0.0
        %v1606 = vand.u32 %v673, 4294901760
        %1607 = vmatmul.mubr.f32.gmra.mxu0 %v1606
        %v1608 = vpop.f32.mrf.mxu0
        %v1609 = vadd.f32 %v1240, %v1608
        %v1610 = vpop.f32.mrf.mxu0
        %1611 = vmatprep.mubr.f32.mxu0 0.0
        %v1612 = vand.u32 %v674, 4294901760
        %1613 = vmatmul.mubr.f32.gmra.mxu0 %v1612
        %v1614 = vpop.f32.mrf.mxu0
        %v1615 = vadd.f32 %v1250, %v1614
        %v1616 = vpop.f32.mrf.mxu0
        %1617 = vmatprep.mubr.f32.mxu0 0.0
        %v1618 = vand.u32 %v675, 4294901760
        %1619 = vmatmul.mubr.f32.gmra.mxu0 %v1618
        %v1620 = vpop.f32.mrf.mxu0
        %v1621 = vadd.f32 %v1260, %v1620
        %v1622 = vpop.f32.mrf.mxu0
        %1623 = vmatprep.mubr.f32.mxu0 0.0
        %v1624 = vand.u32 %v676, 4294901760
        %1625 = vmatmul.mubr.f32.gmra.mxu0 %v1624
        %v1626 = vpop.f32.mrf.mxu0
        %v1627 = vadd.f32 %v1270, %v1626
        %v1628 = vpop.f32.mrf.mxu0
        %1629 = vmatprep.mubr.f32.mxu0 0.0
        %v1630 = vand.u32 %v677, 4294901760
        %1631 = vmatmul.mubr.f32.gmra.mxu0 %v1630
        %v1632 = vpop.f32.mrf.mxu0
        %v1633 = vadd.f32 %v1280, %v1632
        %v1634 = vpop.f32.mrf.mxu0
        %1635 = vmatprep.mubr.f32.mxu0 0.0
        %v1636 = vand.u32 %v678, 4294901760
        %1637 = vmatmul.mubr.f32.gmra.mxu0 %v1636
        %v1638 = vpop.f32.mrf.mxu0
        %v1639 = vadd.f32 %v1290, %v1638
        %v1640 = vpop.f32.mrf.mxu0
        %1641 = vmatprep.mubr.f32.mxu0 0.0
        %v1642 = vand.u32 %v679, 4294901760
        %1643 = vmatmul.mubr.f32.gmra.mxu0 %v1642
        %v1644 = vpop.f32.mrf.mxu0
        %v1645 = vadd.f32 %v1300, %v1644
        %v1646 = vpop.f32.mrf.mxu0
        %1647 = vmatprep.mubr.f32.mxu0 0.0
        %v1648 = vand.u32 %v680, 4294901760
        %1649 = vmatmul.mubr.f32.gmra.mxu0 %v1648
        %v1650 = vpop.f32.mrf.mxu0
        %v1651 = vadd.f32 %v1310, %v1650
        %v1652 = vpop.f32.mrf.mxu0
        %1653 = vmatprep.mubr.f32.mxu0 0.0
        %v1654 = vand.u32 %v681, 4294901760
        %1655 = vmatmul.mubr.f32.gmra.mxu0 %v1654
        %v1656 = vpop.f32.mrf.mxu0
        %v1657 = vadd.f32 %v1320, %v1656
        %v1658 = vpop.f32.mrf.mxu0
        %1659 = vdwg.mxu0
        %1660 = vmatprep.subr.mxu0 0.0
        %v1661 = vand.u32 %v921, 4294901760
        %v1662 = vsub.f32 %v921, %v1661
        %1663 = vmatpush1.msra.mxu0 %v1662
        %1664 = vmatprep.subr.mxu0 0.0
        %v1665 = vand.u32 %v920, 4294901760
        %v1666 = vsub.f32 %v920, %v1665
        %1667 = vmatpush1.msra.mxu0 %v1666
        %1668 = vmatprep.subr.mxu0 0.0
        %v1669 = vand.u32 %v919, 4294901760
        %v1670 = vsub.f32 %v919, %v1669
        %1671 = vmatpush1.msra.mxu0 %v1670
        %1672 = vmatprep.subr.mxu0 0.0
        %v1673 = vand.u32 %v918, 4294901760
        %v1674 = vsub.f32 %v918, %v1673
        %1675 = vmatpush1.msra.mxu0 %v1674
        %1676 = vmatprep.subr.mxu0 0.0
        %v1677 = vand.u32 %v917, 4294901760
        %v1678 = vsub.f32 %v917, %v1677
        %1679 = vmatpush1.msra.mxu0 %v1678
        %1680 = vmatprep.subr.mxu0 0.0
        %v1681 = vand.u32 %v916, 4294901760
        %v1682 = vsub.f32 %v916, %v1681
        %1683 = vmatpush1.msra.mxu0 %v1682
        %1684 = vmatprep.subr.mxu0 0.0
        %v1685 = vand.u32 %v915, 4294901760
        %v1686 = vsub.f32 %v915, %v1685
        %1687 = vmatpush1.msra.mxu0 %v1686
        %1688 = vmatprep.subr.mxu0 0.0
        %v1689 = vand.u32 %v914, 4294901760
        %v1690 = vsub.f32 %v914, %v1689
        %1691 = vmatpush1.msra.mxu0 %v1690
        %1692 = vmatprep.subr.mxu0 0.0
        %v1693 = vand.u32 %v913, 4294901760
        %v1694 = vsub.f32 %v913, %v1693
        %1695 = vmatpush1.msra.mxu0 %v1694
        %1696 = vmatprep.subr.mxu0 0.0
        %v1697 = vand.u32 %v912, 4294901760
        %v1698 = vsub.f32 %v912, %v1697
        %1699 = vmatpush1.msra.mxu0 %v1698
        %1700 = vmatprep.subr.mxu0 0.0
        %v1701 = vand.u32 %v911, 4294901760
        %v1702 = vsub.f32 %v911, %v1701
        %1703 = vmatpush1.msra.mxu0 %v1702
        %1704 = vmatprep.subr.mxu0 0.0
        %v1705 = vand.u32 %v910, 4294901760
        %v1706 = vsub.f32 %v910, %v1705
        %1707 = vmatpush1.msra.mxu0 %v1706
        %1708 = vmatprep.subr.mxu0 0.0
        %v1709 = vand.u32 %v909, 4294901760
        %v1710 = vsub.f32 %v909, %v1709
        %1711 = vmatpush1.msra.mxu0 %v1710
        %1712 = vmatprep.subr.mxu0 0.0
        %v1713 = vand.u32 %v908, 4294901760
        %v1714 = vsub.f32 %v908, %v1713
        %1715 = vmatpush1.msra.mxu0 %v1714
        %1716 = vmatprep.subr.mxu0 0.0
        %v1717 = vand.u32 %v907, 4294901760
        %v1718 = vsub.f32 %v907, %v1717
        %1719 = vmatpush1.msra.mxu0 %v1718
        %1720 = vmatprep.subr.mxu0 0.0
        %v1721 = vand.u32 %v906, 4294901760
        %v1722 = vsub.f32 %v906, %v1721
        %1723 = vmatpush1.msra.mxu0 %v1722
        %1724 = vmatprep.subr.mxu0 0.0
        %1725 = vmatpush2.msra.mxu0 0.0
        %1726 = vmatprep.subr.mxu0 0.0
        %1727 = vmatpush2.msra.mxu0 0.0
        %1728 = vmatprep.subr.mxu0 0.0
        %1729 = vmatpush2.msra.mxu0 0.0
        %1730 = vmatprep.subr.mxu0 0.0
        %1731 = vmatpush2.msra.mxu0 0.0
        %1732 = vmatprep.subr.mxu0 0.0
        %1733 = vmatpush2.msra.mxu0 0.0
        %1734 = vmatprep.subr.mxu0 0.0
        %1735 = vmatpush2.msra.mxu0 0.0
        %1736 = vmatprep.subr.mxu0 0.0
        %1737 = vmatpush2.msra.mxu0 0.0
        %1738 = vmatprep.subr.mxu0 0.0
        %1739 = vmatpush2.msra.mxu0 0.0
        %1740 = vmatprep.subr.mxu0 0.0
        %1741 = vmatpush2.msra.mxu0 0.0
        %1742 = vmatprep.subr.mxu0 0.0
        %1743 = vmatpush2.msra.mxu0 0.0
        %1744 = vmatprep.subr.mxu0 0.0
        %1745 = vmatpush2.msra.mxu0 0.0
        %1746 = vmatprep.subr.mxu0 0.0
        %1747 = vmatpush2.msra.mxu0 0.0
        %1748 = vmatprep.subr.mxu0 0.0
        %1749 = vmatpush2.msra.mxu0 0.0
        %1750 = vmatprep.subr.mxu0 0.0
        %1751 = vmatpush2.msra.mxu0 0.0
        %1752 = vmatprep.subr.mxu0 0.0
        %1753 = vmatpush2.msra.mxu0 0.0
        %1754 = vmatprep.subr.mxu0 0.0
        %1755 = vmatpush2.msra.mxu0 0.0
        %1756 = vmatprep.mubr.f32.mxu0 0.0
        %v1757 = vand.u32 %v650, 4294901760
        %v1758 = vsub.f32 %v650, %v1757
        %1759 = vmatmul.mubr.f32.gmra.mxu0 %v1758
        %v1760 = vpop.f32.mrf.mxu0
        %v1761 = vadd.f32 %v1471, %v1760
        %v1762 = vpop.f32.mrf.mxu0
        %1763 = vmatprep.mubr.f32.mxu0 0.0
        %v1764 = vand.u32 %v651, 4294901760
        %v1765 = vsub.f32 %v651, %v1764
        %1766 = vmatmul.mubr.f32.gmra.mxu0 %v1765
        %v1767 = vpop.f32.mrf.mxu0
        %v1768 = vadd.f32 %v1477, %v1767
        %v1769 = vpop.f32.mrf.mxu0
        %1770 = vmatprep.mubr.f32.mxu0 0.0
        %v1771 = vand.u32 %v652, 4294901760
        %v1772 = vsub.f32 %v652, %v1771
        %1773 = vmatmul.mubr.f32.gmra.mxu0 %v1772
        %v1774 = vpop.f32.mrf.mxu0
        %v1775 = vadd.f32 %v1483, %v1774
        %v1776 = vpop.f32.mrf.mxu0
        %1777 = vmatprep.mubr.f32.mxu0 0.0
        %v1778 = vand.u32 %v653, 4294901760
        %v1779 = vsub.f32 %v653, %v1778
        %1780 = vmatmul.mubr.f32.gmra.mxu0 %v1779
        %v1781 = vpop.f32.mrf.mxu0
        %v1782 = vadd.f32 %v1489, %v1781
        %v1783 = vpop.f32.mrf.mxu0
        %1784 = vmatprep.mubr.f32.mxu0 0.0
        %v1785 = vand.u32 %v654, 4294901760
        %v1786 = vsub.f32 %v654, %v1785
        %1787 = vmatmul.mubr.f32.gmra.mxu0 %v1786
        %v1788 = vpop.f32.mrf.mxu0
        %v1789 = vadd.f32 %v1495, %v1788
        %v1790 = vpop.f32.mrf.mxu0
        %1791 = vmatprep.mubr.f32.mxu0 0.0
        %v1792 = vand.u32 %v655, 4294901760
        %v1793 = vsub.f32 %v655, %v1792
        %1794 = vmatmul.mubr.f32.gmra.mxu0 %v1793
        %v1795 = vpop.f32.mrf.mxu0
        %v1796 = vadd.f32 %v1501, %v1795
        %v1797 = vpop.f32.mrf.mxu0
        %1798 = vmatprep.mubr.f32.mxu0 0.0
        %v1799 = vand.u32 %v656, 4294901760
        %v1800 = vsub.f32 %v656, %v1799
        %1801 = vmatmul.mubr.f32.gmra.mxu0 %v1800
        %v1802 = vpop.f32.mrf.mxu0
        %v1803 = vadd.f32 %v1507, %v1802
        %v1804 = vpop.f32.mrf.mxu0
        %1805 = vmatprep.mubr.f32.mxu0 0.0
        %v1806 = vand.u32 %v657, 4294901760
        %v1807 = vsub.f32 %v657, %v1806
        %1808 = vmatmul.mubr.f32.gmra.mxu0 %v1807
        %v1809 = vpop.f32.mrf.mxu0
        %v1810 = vadd.f32 %v1513, %v1809
        %v1811 = vpop.f32.mrf.mxu0
        %1812 = vmatprep.mubr.f32.mxu0 0.0
        %v1813 = vand.u32 %v658, 4294901760
        %v1814 = vsub.f32 %v658, %v1813
        %1815 = vmatmul.mubr.f32.gmra.mxu0 %v1814
        %v1816 = vpop.f32.mrf.mxu0
        %v1817 = vadd.f32 %v1519, %v1816
        %v1818 = vpop.f32.mrf.mxu0
        %1819 = vmatprep.mubr.f32.mxu0 0.0
        %v1820 = vand.u32 %v659, 4294901760
        %v1821 = vsub.f32 %v659, %v1820
        %1822 = vmatmul.mubr.f32.gmra.mxu0 %v1821
        %v1823 = vpop.f32.mrf.mxu0
        %v1824 = vadd.f32 %v1525, %v1823
        %v1825 = vpop.f32.mrf.mxu0
        %1826 = vmatprep.mubr.f32.mxu0 0.0
        %v1827 = vand.u32 %v660, 4294901760
        %v1828 = vsub.f32 %v660, %v1827
        %1829 = vmatmul.mubr.f32.gmra.mxu0 %v1828
        %v1830 = vpop.f32.mrf.mxu0
        %v1831 = vadd.f32 %v1531, %v1830
        %v1832 = vpop.f32.mrf.mxu0
        %1833 = vmatprep.mubr.f32.mxu0 0.0
        %v1834 = vand.u32 %v661, 4294901760
        %v1835 = vsub.f32 %v661, %v1834
        %1836 = vmatmul.mubr.f32.gmra.mxu0 %v1835
        %v1837 = vpop.f32.mrf.mxu0
        %v1838 = vadd.f32 %v1537, %v1837
        %v1839 = vpop.f32.mrf.mxu0
        %1840 = vmatprep.mubr.f32.mxu0 0.0
        %v1841 = vand.u32 %v662, 4294901760
        %v1842 = vsub.f32 %v662, %v1841
        %1843 = vmatmul.mubr.f32.gmra.mxu0 %v1842
        %v1844 = vpop.f32.mrf.mxu0
        %v1845 = vadd.f32 %v1543, %v1844
        %v1846 = vpop.f32.mrf.mxu0
        %1847 = vmatprep.mubr.f32.mxu0 0.0
        %v1848 = vand.u32 %v663, 4294901760
        %v1849 = vsub.f32 %v663, %v1848
        %1850 = vmatmul.mubr.f32.gmra.mxu0 %v1849
        %v1851 = vpop.f32.mrf.mxu0
        %v1852 = vadd.f32 %v1549, %v1851
        %v1853 = vpop.f32.mrf.mxu0
        %1854 = vmatprep.mubr.f32.mxu0 0.0
        %v1855 = vand.u32 %v664, 4294901760
        %v1856 = vsub.f32 %v664, %v1855
        %1857 = vmatmul.mubr.f32.gmra.mxu0 %v1856
        %v1858 = vpop.f32.mrf.mxu0
        %v1859 = vadd.f32 %v1555, %v1858
        %v1860 = vpop.f32.mrf.mxu0
        %1861 = vmatprep.mubr.f32.mxu0 0.0
        %v1862 = vand.u32 %v665, 4294901760
        %v1863 = vsub.f32 %v665, %v1862
        %1864 = vmatmul.mubr.f32.gmra.mxu0 %v1863
        %v1865 = vpop.f32.mrf.mxu0
        %v1866 = vadd.f32 %v1561, %v1865
        %v1867 = vpop.f32.mrf.mxu0
        %1868 = vmatprep.mubr.f32.mxu0 0.0
        %v1869 = vand.u32 %v666, 4294901760
        %v1870 = vsub.f32 %v666, %v1869
        %1871 = vmatmul.mubr.f32.gmra.mxu0 %v1870
        %v1872 = vpop.f32.mrf.mxu0
        %v1873 = vadd.f32 %v1567, %v1872
        %v1874 = vpop.f32.mrf.mxu0
        %1875 = vmatprep.mubr.f32.mxu0 0.0
        %v1876 = vand.u32 %v667, 4294901760
        %v1877 = vsub.f32 %v667, %v1876
        %1878 = vmatmul.mubr.f32.gmra.mxu0 %v1877
        %v1879 = vpop.f32.mrf.mxu0
        %v1880 = vadd.f32 %v1573, %v1879
        %v1881 = vpop.f32.mrf.mxu0
        %1882 = vmatprep.mubr.f32.mxu0 0.0
        %v1883 = vand.u32 %v668, 4294901760
        %v1884 = vsub.f32 %v668, %v1883
        %1885 = vmatmul.mubr.f32.gmra.mxu0 %v1884
        %v1886 = vpop.f32.mrf.mxu0
        %v1887 = vadd.f32 %v1579, %v1886
        %v1888 = vpop.f32.mrf.mxu0
        %1889 = vmatprep.mubr.f32.mxu0 0.0
        %v1890 = vand.u32 %v669, 4294901760
        %v1891 = vsub.f32 %v669, %v1890
        %1892 = vmatmul.mubr.f32.gmra.mxu0 %v1891
        %v1893 = vpop.f32.mrf.mxu0
        %v1894 = vadd.f32 %v1585, %v1893
        %v1895 = vpop.f32.mrf.mxu0
        %1896 = vmatprep.mubr.f32.mxu0 0.0
        %v1897 = vand.u32 %v670, 4294901760
        %v1898 = vsub.f32 %v670, %v1897
        %1899 = vmatmul.mubr.f32.gmra.mxu0 %v1898
        %v1900 = vpop.f32.mrf.mxu0
        %v1901 = vadd.f32 %v1591, %v1900
        %v1902 = vpop.f32.mrf.mxu0
        %1903 = vmatprep.mubr.f32.mxu0 0.0
        %v1904 = vand.u32 %v671, 4294901760
        %v1905 = vsub.f32 %v671, %v1904
        %1906 = vmatmul.mubr.f32.gmra.mxu0 %v1905
        %v1907 = vpop.f32.mrf.mxu0
        %v1908 = vadd.f32 %v1597, %v1907
        %v1909 = vpop.f32.mrf.mxu0
        %1910 = vmatprep.mubr.f32.mxu0 0.0
        %v1911 = vand.u32 %v672, 4294901760
        %v1912 = vsub.f32 %v672, %v1911
        %1913 = vmatmul.mubr.f32.gmra.mxu0 %v1912
        %v1914 = vpop.f32.mrf.mxu0
        %v1915 = vadd.f32 %v1603, %v1914
        %v1916 = vpop.f32.mrf.mxu0
        %1917 = vmatprep.mubr.f32.mxu0 0.0
        %v1918 = vand.u32 %v673, 4294901760
        %v1919 = vsub.f32 %v673, %v1918
        %1920 = vmatmul.mubr.f32.gmra.mxu0 %v1919
        %v1921 = vpop.f32.mrf.mxu0
        %v1922 = vadd.f32 %v1609, %v1921
        %v1923 = vpop.f32.mrf.mxu0
        %1924 = vmatprep.mubr.f32.mxu0 0.0
        %v1925 = vand.u32 %v674, 4294901760
        %v1926 = vsub.f32 %v674, %v1925
        %1927 = vmatmul.mubr.f32.gmra.mxu0 %v1926
        %v1928 = vpop.f32.mrf.mxu0
        %v1929 = vadd.f32 %v1615, %v1928
        %v1930 = vpop.f32.mrf.mxu0
        %1931 = vmatprep.mubr.f32.mxu0 0.0
        %v1932 = vand.u32 %v675, 4294901760
        %v1933 = vsub.f32 %v675, %v1932
        %1934 = vmatmul.mubr.f32.gmra.mxu0 %v1933
        %v1935 = vpop.f32.mrf.mxu0
        %v1936 = vadd.f32 %v1621, %v1935
        %v1937 = vpop.f32.mrf.mxu0
        %1938 = vmatprep.mubr.f32.mxu0 0.0
        %v1939 = vand.u32 %v676, 4294901760
        %v1940 = vsub.f32 %v676, %v1939
        %1941 = vmatmul.mubr.f32.gmra.mxu0 %v1940
        %v1942 = vpop.f32.mrf.mxu0
        %v1943 = vadd.f32 %v1627, %v1942
        %v1944 = vpop.f32.mrf.mxu0
        %1945 = vmatprep.mubr.f32.mxu0 0.0
        %v1946 = vand.u32 %v677, 4294901760
        %v1947 = vsub.f32 %v677, %v1946
        %1948 = vmatmul.mubr.f32.gmra.mxu0 %v1947
        %v1949 = vpop.f32.mrf.mxu0
        %v1950 = vadd.f32 %v1633, %v1949
        %v1951 = vpop.f32.mrf.mxu0
        %1952 = vmatprep.mubr.f32.mxu0 0.0
        %v1953 = vand.u32 %v678, 4294901760
        %v1954 = vsub.f32 %v678, %v1953
        %1955 = vmatmul.mubr.f32.gmra.mxu0 %v1954
        %v1956 = vpop.f32.mrf.mxu0
        %v1957 = vadd.f32 %v1639, %v1956
        %v1958 = vpop.f32.mrf.mxu0
        %1959 = vmatprep.mubr.f32.mxu0 0.0
        %v1960 = vand.u32 %v679, 4294901760
        %v1961 = vsub.f32 %v679, %v1960
        %1962 = vmatmul.mubr.f32.gmra.mxu0 %v1961
        %v1963 = vpop.f32.mrf.mxu0
        %v1964 = vadd.f32 %v1645, %v1963
        %v1965 = vpop.f32.mrf.mxu0
        %1966 = vmatprep.mubr.f32.mxu0 0.0
        %v1967 = vand.u32 %v680, 4294901760
        %v1968 = vsub.f32 %v680, %v1967
        %1969 = vmatmul.mubr.f32.gmra.mxu0 %v1968
        %v1970 = vpop.f32.mrf.mxu0
        %v1971 = vadd.f32 %v1651, %v1970
        %v1972 = vpop.f32.mrf.mxu0
        %1973 = vmatprep.mubr.f32.mxu0 0.0
        %v1974 = vand.u32 %v681, 4294901760
        %v1975 = vsub.f32 %v681, %v1974
        %1976 = vmatmul.mubr.f32.gmra.mxu0 %v1975
        %v1977 = vpop.f32.mrf.mxu0
        %v1978 = vadd.f32 %v1657, %v1977
        %v1979 = vpop.f32.mrf.mxu0
        %1980 = vdwg.mxu0
        %1981 = vmatprep.subr.mxu0 0.0
        %v1982 = vand.u32 %v921, 4294901760
        %1983 = vmatpush1.msra.mxu0 %v1982
        %1984 = vmatprep.subr.mxu0 0.0
        %v1985 = vand.u32 %v920, 4294901760
        %1986 = vmatpush1.msra.mxu0 %v1985
        %1987 = vmatprep.subr.mxu0 0.0
        %v1988 = vand.u32 %v919, 4294901760
        %1989 = vmatpush1.msra.mxu0 %v1988
        %1990 = vmatprep.subr.mxu0 0.0
        %v1991 = vand.u32 %v918, 4294901760
        %1992 = vmatpush1.msra.mxu0 %v1991
        %1993 = vmatprep.subr.mxu0 0.0
        %v1994 = vand.u32 %v917, 4294901760
        %1995 = vmatpush1.msra.mxu0 %v1994
        %1996 = vmatprep.subr.mxu0 0.0
        %v1997 = vand.u32 %v916, 4294901760
        %1998 = vmatpush1.msra.mxu0 %v1997
        %1999 = vmatprep.subr.mxu0 0.0
        %v2000 = vand.u32 %v915, 4294901760
        %2001 = vmatpush1.msra.mxu0 %v2000
        %2002 = vmatprep.subr.mxu0 0.0
        %v2003 = vand.u32 %v914, 4294901760
        %2004 = vmatpush1.msra.mxu0 %v2003
        %2005 = vmatprep.subr.mxu0 0.0
        %v2006 = vand.u32 %v913, 4294901760
        %2007 = vmatpush1.msra.mxu0 %v2006
        %2008 = vmatprep.subr.mxu0 0.0
        %v2009 = vand.u32 %v912, 4294901760
        %2010 = vmatpush1.msra.mxu0 %v2009
        %2011 = vmatprep.subr.mxu0 0.0
        %v2012 = vand.u32 %v911, 4294901760
        %2013 = vmatpush1.msra.mxu0 %v2012
        %2014 = vmatprep.subr.mxu0 0.0
        %v2015 = vand.u32 %v910, 4294901760
        %2016 = vmatpush1.msra.mxu0 %v2015
        %2017 = vmatprep.subr.mxu0 0.0
        %v2018 = vand.u32 %v909, 4294901760
        %2019 = vmatpush1.msra.mxu0 %v2018
        %2020 = vmatprep.subr.mxu0 0.0
        %v2021 = vand.u32 %v908, 4294901760
        %2022 = vmatpush1.msra.mxu0 %v2021
        %2023 = vmatprep.subr.mxu0 0.0
        %v2024 = vand.u32 %v907, 4294901760
        %2025 = vmatpush1.msra.mxu0 %v2024
        %2026 = vmatprep.subr.mxu0 0.0
        %v2027 = vand.u32 %v906, 4294901760
        %2028 = vmatpush1.msra.mxu0 %v2027
        %2029 = vmatprep.subr.mxu0 0.0
        %2030 = vmatpush2.msra.mxu0 0.0
        %2031 = vmatprep.subr.mxu0 0.0
        %2032 = vmatpush2.msra.mxu0 0.0
        %2033 = vmatprep.subr.mxu0 0.0
        %2034 = vmatpush2.msra.mxu0 0.0
        %2035 = vmatprep.subr.mxu0 0.0
        %2036 = vmatpush2.msra.mxu0 0.0
        %2037 = vmatprep.subr.mxu0 0.0
        %2038 = vmatpush2.msra.mxu0 0.0
        %2039 = vmatprep.subr.mxu0 0.0
        %2040 = vmatpush2.msra.mxu0 0.0
        %2041 = vmatprep.subr.mxu0 0.0
        %2042 = vmatpush2.msra.mxu0 0.0
        %2043 = vmatprep.subr.mxu0 0.0
        %2044 = vmatpush2.msra.mxu0 0.0
        %2045 = vmatprep.subr.mxu0 0.0
        %2046 = vmatpush2.msra.mxu0 0.0
        %2047 = vmatprep.subr.mxu0 0.0
        %2048 = vmatpush2.msra.mxu0 0.0
        %2049 = vmatprep.subr.mxu0 0.0
        %2050 = vmatpush2.msra.mxu0 0.0
        %2051 = vmatprep.subr.mxu0 0.0
        %2052 = vmatpush2.msra.mxu0 0.0
        %2053 = vmatprep.subr.mxu0 0.0
        %2054 = vmatpush2.msra.mxu0 0.0
        %2055 = vmatprep.subr.mxu0 0.0
        %2056 = vmatpush2.msra.mxu0 0.0
        %2057 = vmatprep.subr.mxu0 0.0
        %2058 = vmatpush2.msra.mxu0 0.0
        %2059 = vmatprep.subr.mxu0 0.0
        %2060 = vmatpush2.msra.mxu0 0.0
        %2061 = vmatprep.mubr.f32.mxu0 0.0
        %v2062 = vand.u32 %v650, 4294901760
        %v2063 = vsub.f32 %v650, %v2062
        %v2064 = vand.u32 %v2063, 4294901760
        %2065 = vmatmul.mubr.f32.gmra.mxu0 %v2064
        %v2066 = vpop.f32.mrf.mxu0
        %v2067 = vadd.f32 %v1761, %v2066
        %v2068 = vpop.f32.mrf.mxu0
        %2069 = vmatprep.mubr.f32.mxu0 0.0
        %v2070 = vand.u32 %v651, 4294901760
        %v2071 = vsub.f32 %v651, %v2070
        %v2072 = vand.u32 %v2071, 4294901760
        %2073 = vmatmul.mubr.f32.gmra.mxu0 %v2072
        %v2074 = vpop.f32.mrf.mxu0
        %v2075 = vadd.f32 %v1768, %v2074
        %v2076 = vpop.f32.mrf.mxu0
        %2077 = vmatprep.mubr.f32.mxu0 0.0
        %v2078 = vand.u32 %v652, 4294901760
        %v2079 = vsub.f32 %v652, %v2078
        %v2080 = vand.u32 %v2079, 4294901760
        %2081 = vmatmul.mubr.f32.gmra.mxu0 %v2080
        %v2082 = vpop.f32.mrf.mxu0
        %v2083 = vadd.f32 %v1775, %v2082
        %v2084 = vpop.f32.mrf.mxu0
        %2085 = vmatprep.mubr.f32.mxu0 0.0
        %v2086 = vand.u32 %v653, 4294901760
        %v2087 = vsub.f32 %v653, %v2086
        %v2088 = vand.u32 %v2087, 4294901760
        %2089 = vmatmul.mubr.f32.gmra.mxu0 %v2088
        %v2090 = vpop.f32.mrf.mxu0
        %v2091 = vadd.f32 %v1782, %v2090
        %v2092 = vpop.f32.mrf.mxu0
        %2093 = vmatprep.mubr.f32.mxu0 0.0
        %v2094 = vand.u32 %v654, 4294901760
        %v2095 = vsub.f32 %v654, %v2094
        %v2096 = vand.u32 %v2095, 4294901760
        %2097 = vmatmul.mubr.f32.gmra.mxu0 %v2096
        %v2098 = vpop.f32.mrf.mxu0
        %v2099 = vadd.f32 %v1789, %v2098
        %v2100 = vpop.f32.mrf.mxu0
        %2101 = vmatprep.mubr.f32.mxu0 0.0
        %v2102 = vand.u32 %v655, 4294901760
        %v2103 = vsub.f32 %v655, %v2102
        %v2104 = vand.u32 %v2103, 4294901760
        %2105 = vmatmul.mubr.f32.gmra.mxu0 %v2104
        %v2106 = vpop.f32.mrf.mxu0
        %v2107 = vadd.f32 %v1796, %v2106
        %v2108 = vpop.f32.mrf.mxu0
        %2109 = vmatprep.mubr.f32.mxu0 0.0
        %v2110 = vand.u32 %v656, 4294901760
        %v2111 = vsub.f32 %v656, %v2110
        %v2112 = vand.u32 %v2111, 4294901760
        %2113 = vmatmul.mubr.f32.gmra.mxu0 %v2112
        %v2114 = vpop.f32.mrf.mxu0
        %v2115 = vadd.f32 %v1803, %v2114
        %v2116 = vpop.f32.mrf.mxu0
        %2117 = vmatprep.mubr.f32.mxu0 0.0
        %v2118 = vand.u32 %v657, 4294901760
        %v2119 = vsub.f32 %v657, %v2118
        %v2120 = vand.u32 %v2119, 4294901760
        %2121 = vmatmul.mubr.f32.gmra.mxu0 %v2120
        %v2122 = vpop.f32.mrf.mxu0
        %v2123 = vadd.f32 %v1810, %v2122
        %v2124 = vpop.f32.mrf.mxu0
        %2125 = vmatprep.mubr.f32.mxu0 0.0
        %v2126 = vand.u32 %v658, 4294901760
        %v2127 = vsub.f32 %v658, %v2126
        %v2128 = vand.u32 %v2127, 4294901760
        %2129 = vmatmul.mubr.f32.gmra.mxu0 %v2128
        %v2130 = vpop.f32.mrf.mxu0
        %v2131 = vadd.f32 %v1817, %v2130
        %v2132 = vpop.f32.mrf.mxu0
        %2133 = vmatprep.mubr.f32.mxu0 0.0
        %v2134 = vand.u32 %v659, 4294901760
        %v2135 = vsub.f32 %v659, %v2134
        %v2136 = vand.u32 %v2135, 4294901760
        %2137 = vmatmul.mubr.f32.gmra.mxu0 %v2136
        %v2138 = vpop.f32.mrf.mxu0
        %v2139 = vadd.f32 %v1824, %v2138
        %v2140 = vpop.f32.mrf.mxu0
        %2141 = vmatprep.mubr.f32.mxu0 0.0
        %v2142 = vand.u32 %v660, 4294901760
        %v2143 = vsub.f32 %v660, %v2142
        %v2144 = vand.u32 %v2143, 4294901760
        %2145 = vmatmul.mubr.f32.gmra.mxu0 %v2144
        %v2146 = vpop.f32.mrf.mxu0
        %v2147 = vadd.f32 %v1831, %v2146
        %v2148 = vpop.f32.mrf.mxu0
        %2149 = vmatprep.mubr.f32.mxu0 0.0
        %v2150 = vand.u32 %v661, 4294901760
        %v2151 = vsub.f32 %v661, %v2150
        %v2152 = vand.u32 %v2151, 4294901760
        %2153 = vmatmul.mubr.f32.gmra.mxu0 %v2152
        %v2154 = vpop.f32.mrf.mxu0
        %v2155 = vadd.f32 %v1838, %v2154
        %v2156 = vpop.f32.mrf.mxu0
        %2157 = vmatprep.mubr.f32.mxu0 0.0
        %v2158 = vand.u32 %v662, 4294901760
        %v2159 = vsub.f32 %v662, %v2158
        %v2160 = vand.u32 %v2159, 4294901760
        %2161 = vmatmul.mubr.f32.gmra.mxu0 %v2160
        %v2162 = vpop.f32.mrf.mxu0
        %v2163 = vadd.f32 %v1845, %v2162
        %v2164 = vpop.f32.mrf.mxu0
        %2165 = vmatprep.mubr.f32.mxu0 0.0
        %v2166 = vand.u32 %v663, 4294901760
        %v2167 = vsub.f32 %v663, %v2166
        %v2168 = vand.u32 %v2167, 4294901760
        %2169 = vmatmul.mubr.f32.gmra.mxu0 %v2168
        %v2170 = vpop.f32.mrf.mxu0
        %v2171 = vadd.f32 %v1852, %v2170
        %v2172 = vpop.f32.mrf.mxu0
        %2173 = vmatprep.mubr.f32.mxu0 0.0
        %v2174 = vand.u32 %v664, 4294901760
        %v2175 = vsub.f32 %v664, %v2174
        %v2176 = vand.u32 %v2175, 4294901760
        %2177 = vmatmul.mubr.f32.gmra.mxu0 %v2176
        %v2178 = vpop.f32.mrf.mxu0
        %v2179 = vadd.f32 %v1859, %v2178
        %v2180 = vpop.f32.mrf.mxu0
        %2181 = vmatprep.mubr.f32.mxu0 0.0
        %v2182 = vand.u32 %v665, 4294901760
        %v2183 = vsub.f32 %v665, %v2182
        %v2184 = vand.u32 %v2183, 4294901760
        %2185 = vmatmul.mubr.f32.gmra.mxu0 %v2184
        %v2186 = vpop.f32.mrf.mxu0
        %v2187 = vadd.f32 %v1866, %v2186
        %v2188 = vpop.f32.mrf.mxu0
        %2189 = vmatprep.mubr.f32.mxu0 0.0
        %v2190 = vand.u32 %v666, 4294901760
        %v2191 = vsub.f32 %v666, %v2190
        %v2192 = vand.u32 %v2191, 4294901760
        %2193 = vmatmul.mubr.f32.gmra.mxu0 %v2192
        %v2194 = vpop.f32.mrf.mxu0
        %v2195 = vadd.f32 %v1873, %v2194
        %v2196 = vpop.f32.mrf.mxu0
        %2197 = vmatprep.mubr.f32.mxu0 0.0
        %v2198 = vand.u32 %v667, 4294901760
        %v2199 = vsub.f32 %v667, %v2198
        %v2200 = vand.u32 %v2199, 4294901760
        %2201 = vmatmul.mubr.f32.gmra.mxu0 %v2200
        %v2202 = vpop.f32.mrf.mxu0
        %v2203 = vadd.f32 %v1880, %v2202
        %v2204 = vpop.f32.mrf.mxu0
        %2205 = vmatprep.mubr.f32.mxu0 0.0
        %v2206 = vand.u32 %v668, 4294901760
        %v2207 = vsub.f32 %v668, %v2206
        %v2208 = vand.u32 %v2207, 4294901760
        %2209 = vmatmul.mubr.f32.gmra.mxu0 %v2208
        %v2210 = vpop.f32.mrf.mxu0
        %v2211 = vadd.f32 %v1887, %v2210
        %v2212 = vpop.f32.mrf.mxu0
        %2213 = vmatprep.mubr.f32.mxu0 0.0
        %v2214 = vand.u32 %v669, 4294901760
        %v2215 = vsub.f32 %v669, %v2214
        %v2216 = vand.u32 %v2215, 4294901760
        %2217 = vmatmul.mubr.f32.gmra.mxu0 %v2216
        %v2218 = vpop.f32.mrf.mxu0
        %v2219 = vadd.f32 %v1894, %v2218
        %v2220 = vpop.f32.mrf.mxu0
        %2221 = vmatprep.mubr.f32.mxu0 0.0
        %v2222 = vand.u32 %v670, 4294901760
        %v2223 = vsub.f32 %v670, %v2222
        %v2224 = vand.u32 %v2223, 4294901760
        %2225 = vmatmul.mubr.f32.gmra.mxu0 %v2224
        %v2226 = vpop.f32.mrf.mxu0
        %v2227 = vadd.f32 %v1901, %v2226
        %v2228 = vpop.f32.mrf.mxu0
        %2229 = vmatprep.mubr.f32.mxu0 0.0
        %v2230 = vand.u32 %v671, 4294901760
        %v2231 = vsub.f32 %v671, %v2230
        %v2232 = vand.u32 %v2231, 4294901760
        %2233 = vmatmul.mubr.f32.gmra.mxu0 %v2232
        %v2234 = vpop.f32.mrf.mxu0
        %v2235 = vadd.f32 %v1908, %v2234
        %v2236 = vpop.f32.mrf.mxu0
        %2237 = vmatprep.mubr.f32.mxu0 0.0
        %v2238 = vand.u32 %v672, 4294901760
        %v2239 = vsub.f32 %v672, %v2238
        %v2240 = vand.u32 %v2239, 4294901760
        %2241 = vmatmul.mubr.f32.gmra.mxu0 %v2240
        %v2242 = vpop.f32.mrf.mxu0
        %v2243 = vadd.f32 %v1915, %v2242
        %v2244 = vpop.f32.mrf.mxu0
        %2245 = vmatprep.mubr.f32.mxu0 0.0
        %v2246 = vand.u32 %v673, 4294901760
        %v2247 = vsub.f32 %v673, %v2246
        %v2248 = vand.u32 %v2247, 4294901760
        %2249 = vmatmul.mubr.f32.gmra.mxu0 %v2248
        %v2250 = vpop.f32.mrf.mxu0
        %v2251 = vadd.f32 %v1922, %v2250
        %v2252 = vpop.f32.mrf.mxu0
        %2253 = vmatprep.mubr.f32.mxu0 0.0
        %v2254 = vand.u32 %v674, 4294901760
        %v2255 = vsub.f32 %v674, %v2254
        %v2256 = vand.u32 %v2255, 4294901760
        %2257 = vmatmul.mubr.f32.gmra.mxu0 %v2256
        %v2258 = vpop.f32.mrf.mxu0
        %v2259 = vadd.f32 %v1929, %v2258
        %v2260 = vpop.f32.mrf.mxu0
        %2261 = vmatprep.mubr.f32.mxu0 0.0
        %v2262 = vand.u32 %v675, 4294901760
        %v2263 = vsub.f32 %v675, %v2262
        %v2264 = vand.u32 %v2263, 4294901760
        %2265 = vmatmul.mubr.f32.gmra.mxu0 %v2264
        %v2266 = vpop.f32.mrf.mxu0
        %v2267 = vadd.f32 %v1936, %v2266
        %v2268 = vpop.f32.mrf.mxu0
        %2269 = vmatprep.mubr.f32.mxu0 0.0
        %v2270 = vand.u32 %v676, 4294901760
        %v2271 = vsub.f32 %v676, %v2270
        %v2272 = vand.u32 %v2271, 4294901760
        %2273 = vmatmul.mubr.f32.gmra.mxu0 %v2272
        %v2274 = vpop.f32.mrf.mxu0
        %v2275 = vadd.f32 %v1943, %v2274
        %v2276 = vpop.f32.mrf.mxu0
        %2277 = vmatprep.mubr.f32.mxu0 0.0
        %v2278 = vand.u32 %v677, 4294901760
        %v2279 = vsub.f32 %v677, %v2278
        %v2280 = vand.u32 %v2279, 4294901760
        %2281 = vmatmul.mubr.f32.gmra.mxu0 %v2280
        %v2282 = vpop.f32.mrf.mxu0
        %v2283 = vadd.f32 %v1950, %v2282
        %v2284 = vpop.f32.mrf.mxu0
        %2285 = vmatprep.mubr.f32.mxu0 0.0
        %v2286 = vand.u32 %v678, 4294901760
        %v2287 = vsub.f32 %v678, %v2286
        %v2288 = vand.u32 %v2287, 4294901760
        %2289 = vmatmul.mubr.f32.gmra.mxu0 %v2288
        %v2290 = vpop.f32.mrf.mxu0
        %v2291 = vadd.f32 %v1957, %v2290
        %v2292 = vpop.f32.mrf.mxu0
        %2293 = vmatprep.mubr.f32.mxu0 0.0
        %v2294 = vand.u32 %v679, 4294901760
        %v2295 = vsub.f32 %v679, %v2294
        %v2296 = vand.u32 %v2295, 4294901760
        %2297 = vmatmul.mubr.f32.gmra.mxu0 %v2296
        %v2298 = vpop.f32.mrf.mxu0
        %v2299 = vadd.f32 %v1964, %v2298
        %v2300 = vpop.f32.mrf.mxu0
        %2301 = vmatprep.mubr.f32.mxu0 0.0
        %v2302 = vand.u32 %v680, 4294901760
        %v2303 = vsub.f32 %v680, %v2302
        %v2304 = vand.u32 %v2303, 4294901760
        %2305 = vmatmul.mubr.f32.gmra.mxu0 %v2304
        %v2306 = vpop.f32.mrf.mxu0
        %v2307 = vadd.f32 %v1971, %v2306
        %v2308 = vpop.f32.mrf.mxu0
        %2309 = vmatprep.mubr.f32.mxu0 0.0
        %v2310 = vand.u32 %v681, 4294901760
        %v2311 = vsub.f32 %v681, %v2310
        %v2312 = vand.u32 %v2311, 4294901760
        %2313 = vmatmul.mubr.f32.gmra.mxu0 %v2312
        %v2314 = vpop.f32.mrf.mxu0
        %v2315 = vadd.f32 %v1978, %v2314
        %v2316 = vpop.f32.mrf.mxu0
        %2317 = vdwg.mxu0
        %2318 = vmatprep.subr.mxu0 0.0
        %v2319 = vand.u32 %v921, 4294901760
        %v2320 = vsub.f32 %v921, %v2319
        %v2321 = vand.u32 %v2320, 4294901760
        %2322 = vmatpush1.msra.mxu0 %v2321
        %2323 = vmatprep.subr.mxu0 0.0
        %v2324 = vand.u32 %v920, 4294901760
        %v2325 = vsub.f32 %v920, %v2324
        %v2326 = vand.u32 %v2325, 4294901760
        %2327 = vmatpush1.msra.mxu0 %v2326
        %2328 = vmatprep.subr.mxu0 0.0
        %v2329 = vand.u32 %v919, 4294901760
        %v2330 = vsub.f32 %v919, %v2329
        %v2331 = vand.u32 %v2330, 4294901760
        %2332 = vmatpush1.msra.mxu0 %v2331
        %2333 = vmatprep.subr.mxu0 0.0
        %v2334 = vand.u32 %v918, 4294901760
        %v2335 = vsub.f32 %v918, %v2334
        %v2336 = vand.u32 %v2335, 4294901760
        %2337 = vmatpush1.msra.mxu0 %v2336
        %2338 = vmatprep.subr.mxu0 0.0
        %v2339 = vand.u32 %v917, 4294901760
        %v2340 = vsub.f32 %v917, %v2339
        %v2341 = vand.u32 %v2340, 4294901760
        %2342 = vmatpush1.msra.mxu0 %v2341
        %2343 = vmatprep.subr.mxu0 0.0
        %v2344 = vand.u32 %v916, 4294901760
        %v2345 = vsub.f32 %v916, %v2344
        %v2346 = vand.u32 %v2345, 4294901760
        %2347 = vmatpush1.msra.mxu0 %v2346
        %2348 = vmatprep.subr.mxu0 0.0
        %v2349 = vand.u32 %v915, 4294901760
        %v2350 = vsub.f32 %v915, %v2349
        %v2351 = vand.u32 %v2350, 4294901760
        %2352 = vmatpush1.msra.mxu0 %v2351
        %2353 = vmatprep.subr.mxu0 0.0
        %v2354 = vand.u32 %v914, 4294901760
        %v2355 = vsub.f32 %v914, %v2354
        %v2356 = vand.u32 %v2355, 4294901760
        %2357 = vmatpush1.msra.mxu0 %v2356
        %2358 = vmatprep.subr.mxu0 0.0
        %v2359 = vand.u32 %v913, 4294901760
        %v2360 = vsub.f32 %v913, %v2359
        %v2361 = vand.u32 %v2360, 4294901760
        %2362 = vmatpush1.msra.mxu0 %v2361
        %2363 = vmatprep.subr.mxu0 0.0
        %v2364 = vand.u32 %v912, 4294901760
        %v2365 = vsub.f32 %v912, %v2364
        %v2366 = vand.u32 %v2365, 4294901760
        %2367 = vmatpush1.msra.mxu0 %v2366
        %2368 = vmatprep.subr.mxu0 0.0
        %v2369 = vand.u32 %v911, 4294901760
        %v2370 = vsub.f32 %v911, %v2369
        %v2371 = vand.u32 %v2370, 4294901760
        %2372 = vmatpush1.msra.mxu0 %v2371
        %2373 = vmatprep.subr.mxu0 0.0
        %v2374 = vand.u32 %v910, 4294901760
        %v2375 = vsub.f32 %v910, %v2374
        %v2376 = vand.u32 %v2375, 4294901760
        %2377 = vmatpush1.msra.mxu0 %v2376
        %2378 = vmatprep.subr.mxu0 0.0
        %v2379 = vand.u32 %v909, 4294901760
        %v2380 = vsub.f32 %v909, %v2379
        %v2381 = vand.u32 %v2380, 4294901760
        %2382 = vmatpush1.msra.mxu0 %v2381
        %2383 = vmatprep.subr.mxu0 0.0
        %v2384 = vand.u32 %v908, 4294901760
        %v2385 = vsub.f32 %v908, %v2384
        %v2386 = vand.u32 %v2385, 4294901760
        %2387 = vmatpush1.msra.mxu0 %v2386
        %2388 = vmatprep.subr.mxu0 0.0
        %v2389 = vand.u32 %v907, 4294901760
        %v2390 = vsub.f32 %v907, %v2389
        %v2391 = vand.u32 %v2390, 4294901760
        %2392 = vmatpush1.msra.mxu0 %v2391
        %2393 = vmatprep.subr.mxu0 0.0
        %v2394 = vand.u32 %v906, 4294901760
        %v2395 = vsub.f32 %v906, %v2394
        %v2396 = vand.u32 %v2395, 4294901760
        %2397 = vmatpush1.msra.mxu0 %v2396
        %2398 = vmatprep.subr.mxu0 0.0
        %2399 = vmatpush2.msra.mxu0 0.0
        %2400 = vmatprep.subr.mxu0 0.0
        %2401 = vmatpush2.msra.mxu0 0.0
        %2402 = vmatprep.subr.mxu0 0.0
        %2403 = vmatpush2.msra.mxu0 0.0
        %2404 = vmatprep.subr.mxu0 0.0
        %2405 = vmatpush2.msra.mxu0 0.0
        %2406 = vmatprep.subr.mxu0 0.0
        %2407 = vmatpush2.msra.mxu0 0.0
        %2408 = vmatprep.subr.mxu0 0.0
        %2409 = vmatpush2.msra.mxu0 0.0
        %2410 = vmatprep.subr.mxu0 0.0
        %2411 = vmatpush2.msra.mxu0 0.0
        %2412 = vmatprep.subr.mxu0 0.0
        %2413 = vmatpush2.msra.mxu0 0.0
        %2414 = vmatprep.subr.mxu0 0.0
        %2415 = vmatpush2.msra.mxu0 0.0
        %2416 = vmatprep.subr.mxu0 0.0
        %2417 = vmatpush2.msra.mxu0 0.0
        %2418 = vmatprep.subr.mxu0 0.0
        %2419 = vmatpush2.msra.mxu0 0.0
        %2420 = vmatprep.subr.mxu0 0.0
        %2421 = vmatpush2.msra.mxu0 0.0
        %2422 = vmatprep.subr.mxu0 0.0
        %2423 = vmatpush2.msra.mxu0 0.0
        %2424 = vmatprep.subr.mxu0 0.0
        %2425 = vmatpush2.msra.mxu0 0.0
        %2426 = vmatprep.subr.mxu0 0.0
        %2427 = vmatpush2.msra.mxu0 0.0
        %2428 = vmatprep.subr.mxu0 0.0
        %2429 = vmatpush2.msra.mxu0 0.0
        %2430 = vmatprep.mubr.f32.mxu0 0.0
        %v2431 = vand.u32 %v650, 4294901760
        %2432 = vmatmul.mubr.f32.gmra.mxu0 %v2431
        %v2433 = vpop.f32.mrf.mxu0
        %v2434 = vadd.f32 %v2067, %v2433
        %v2435 = vpop.f32.mrf.mxu0
        %2436 = vmatprep.mubr.f32.mxu0 0.0
        %v2437 = vand.u32 %v651, 4294901760
        %2438 = vmatmul.mubr.f32.gmra.mxu0 %v2437
        %v2439 = vpop.f32.mrf.mxu0
        %v2440 = vadd.f32 %v2075, %v2439
        %v2441 = vpop.f32.mrf.mxu0
        %2442 = vmatprep.mubr.f32.mxu0 0.0
        %v2443 = vand.u32 %v652, 4294901760
        %2444 = vmatmul.mubr.f32.gmra.mxu0 %v2443
        %v2445 = vpop.f32.mrf.mxu0
        %v2446 = vadd.f32 %v2083, %v2445
        %v2447 = vpop.f32.mrf.mxu0
        %2448 = vmatprep.mubr.f32.mxu0 0.0
        %v2449 = vand.u32 %v653, 4294901760
        %2450 = vmatmul.mubr.f32.gmra.mxu0 %v2449
        %v2451 = vpop.f32.mrf.mxu0
        %v2452 = vadd.f32 %v2091, %v2451
        %v2453 = vpop.f32.mrf.mxu0
        %2454 = vmatprep.mubr.f32.mxu0 0.0
        %v2455 = vand.u32 %v654, 4294901760
        %2456 = vmatmul.mubr.f32.gmra.mxu0 %v2455
        %v2457 = vpop.f32.mrf.mxu0
        %v2458 = vadd.f32 %v2099, %v2457
        %v2459 = vpop.f32.mrf.mxu0
        %2460 = vmatprep.mubr.f32.mxu0 0.0
        %v2461 = vand.u32 %v655, 4294901760
        %2462 = vmatmul.mubr.f32.gmra.mxu0 %v2461
        %v2463 = vpop.f32.mrf.mxu0
        %v2464 = vadd.f32 %v2107, %v2463
        %v2465 = vpop.f32.mrf.mxu0
        %2466 = vmatprep.mubr.f32.mxu0 0.0
        %v2467 = vand.u32 %v656, 4294901760
        %2468 = vmatmul.mubr.f32.gmra.mxu0 %v2467
        %v2469 = vpop.f32.mrf.mxu0
        %v2470 = vadd.f32 %v2115, %v2469
        %v2471 = vpop.f32.mrf.mxu0
        %2472 = vmatprep.mubr.f32.mxu0 0.0
        %v2473 = vand.u32 %v657, 4294901760
        %2474 = vmatmul.mubr.f32.gmra.mxu0 %v2473
        %v2475 = vpop.f32.mrf.mxu0
        %v2476 = vadd.f32 %v2123, %v2475
        %v2477 = vpop.f32.mrf.mxu0
        %2478 = vmatprep.mubr.f32.mxu0 0.0
        %v2479 = vand.u32 %v658, 4294901760
        %2480 = vmatmul.mubr.f32.gmra.mxu0 %v2479
        %v2481 = vpop.f32.mrf.mxu0
        %v2482 = vadd.f32 %v2131, %v2481
        %v2483 = vpop.f32.mrf.mxu0
        %2484 = vmatprep.mubr.f32.mxu0 0.0
        %v2485 = vand.u32 %v659, 4294901760
        %2486 = vmatmul.mubr.f32.gmra.mxu0 %v2485
        %v2487 = vpop.f32.mrf.mxu0
        %v2488 = vadd.f32 %v2139, %v2487
        %v2489 = vpop.f32.mrf.mxu0
        %2490 = vmatprep.mubr.f32.mxu0 0.0
        %v2491 = vand.u32 %v660, 4294901760
        %2492 = vmatmul.mubr.f32.gmra.mxu0 %v2491
        %v2493 = vpop.f32.mrf.mxu0
        %v2494 = vadd.f32 %v2147, %v2493
        %v2495 = vpop.f32.mrf.mxu0
        %2496 = vmatprep.mubr.f32.mxu0 0.0
        %v2497 = vand.u32 %v661, 4294901760
        %2498 = vmatmul.mubr.f32.gmra.mxu0 %v2497
        %v2499 = vpop.f32.mrf.mxu0
        %v2500 = vadd.f32 %v2155, %v2499
        %v2501 = vpop.f32.mrf.mxu0
        %2502 = vmatprep.mubr.f32.mxu0 0.0
        %v2503 = vand.u32 %v662, 4294901760
        %2504 = vmatmul.mubr.f32.gmra.mxu0 %v2503
        %v2505 = vpop.f32.mrf.mxu0
        %v2506 = vadd.f32 %v2163, %v2505
        %v2507 = vpop.f32.mrf.mxu0
        %2508 = vmatprep.mubr.f32.mxu0 0.0
        %v2509 = vand.u32 %v663, 4294901760
        %2510 = vmatmul.mubr.f32.gmra.mxu0 %v2509
        %v2511 = vpop.f32.mrf.mxu0
        %v2512 = vadd.f32 %v2171, %v2511
        %v2513 = vpop.f32.mrf.mxu0
        %2514 = vmatprep.mubr.f32.mxu0 0.0
        %v2515 = vand.u32 %v664, 4294901760
        %2516 = vmatmul.mubr.f32.gmra.mxu0 %v2515
        %v2517 = vpop.f32.mrf.mxu0
        %v2518 = vadd.f32 %v2179, %v2517
        %v2519 = vpop.f32.mrf.mxu0
        %2520 = vmatprep.mubr.f32.mxu0 0.0
        %v2521 = vand.u32 %v665, 4294901760
        %2522 = vmatmul.mubr.f32.gmra.mxu0 %v2521
        %v2523 = vpop.f32.mrf.mxu0
        %v2524 = vadd.f32 %v2187, %v2523
        %v2525 = vpop.f32.mrf.mxu0
        %2526 = vmatprep.mubr.f32.mxu0 0.0
        %v2527 = vand.u32 %v666, 4294901760
        %2528 = vmatmul.mubr.f32.gmra.mxu0 %v2527
        %v2529 = vpop.f32.mrf.mxu0
        %v2530 = vadd.f32 %v2195, %v2529
        %v2531 = vpop.f32.mrf.mxu0
        %2532 = vmatprep.mubr.f32.mxu0 0.0
        %v2533 = vand.u32 %v667, 4294901760
        %2534 = vmatmul.mubr.f32.gmra.mxu0 %v2533
        %v2535 = vpop.f32.mrf.mxu0
        %v2536 = vadd.f32 %v2203, %v2535
        %v2537 = vpop.f32.mrf.mxu0
        %2538 = vmatprep.mubr.f32.mxu0 0.0
        %v2539 = vand.u32 %v668, 4294901760
        %2540 = vmatmul.mubr.f32.gmra.mxu0 %v2539
        %v2541 = vpop.f32.mrf.mxu0
        %v2542 = vadd.f32 %v2211, %v2541
        %v2543 = vpop.f32.mrf.mxu0
        %2544 = vmatprep.mubr.f32.mxu0 0.0
        %v2545 = vand.u32 %v669, 4294901760
        %2546 = vmatmul.mubr.f32.gmra.mxu0 %v2545
        %v2547 = vpop.f32.mrf.mxu0
        %v2548 = vadd.f32 %v2219, %v2547
        %v2549 = vpop.f32.mrf.mxu0
        %2550 = vmatprep.mubr.f32.mxu0 0.0
        %v2551 = vand.u32 %v670, 4294901760
        %2552 = vmatmul.mubr.f32.gmra.mxu0 %v2551
        %v2553 = vpop.f32.mrf.mxu0
        %v2554 = vadd.f32 %v2227, %v2553
        %v2555 = vpop.f32.mrf.mxu0
        %2556 = vmatprep.mubr.f32.mxu0 0.0
        %v2557 = vand.u32 %v671, 4294901760
        %2558 = vmatmul.mubr.f32.gmra.mxu0 %v2557
        %v2559 = vpop.f32.mrf.mxu0
        %v2560 = vadd.f32 %v2235, %v2559
        %v2561 = vpop.f32.mrf.mxu0
        %2562 = vmatprep.mubr.f32.mxu0 0.0
        %v2563 = vand.u32 %v672, 4294901760
        %2564 = vmatmul.mubr.f32.gmra.mxu0 %v2563
        %v2565 = vpop.f32.mrf.mxu0
        %v2566 = vadd.f32 %v2243, %v2565
        %v2567 = vpop.f32.mrf.mxu0
        %2568 = vmatprep.mubr.f32.mxu0 0.0
        %v2569 = vand.u32 %v673, 4294901760
        %2570 = vmatmul.mubr.f32.gmra.mxu0 %v2569
        %v2571 = vpop.f32.mrf.mxu0
        %v2572 = vadd.f32 %v2251, %v2571
        %v2573 = vpop.f32.mrf.mxu0
        %2574 = vmatprep.mubr.f32.mxu0 0.0
        %v2575 = vand.u32 %v674, 4294901760
        %2576 = vmatmul.mubr.f32.gmra.mxu0 %v2575
        %v2577 = vpop.f32.mrf.mxu0
        %v2578 = vadd.f32 %v2259, %v2577
        %v2579 = vpop.f32.mrf.mxu0
        %2580 = vmatprep.mubr.f32.mxu0 0.0
        %v2581 = vand.u32 %v675, 4294901760
        %2582 = vmatmul.mubr.f32.gmra.mxu0 %v2581
        %v2583 = vpop.f32.mrf.mxu0
        %v2584 = vadd.f32 %v2267, %v2583
        %v2585 = vpop.f32.mrf.mxu0
        %2586 = vmatprep.mubr.f32.mxu0 0.0
        %v2587 = vand.u32 %v676, 4294901760
        %2588 = vmatmul.mubr.f32.gmra.mxu0 %v2587
        %v2589 = vpop.f32.mrf.mxu0
        %v2590 = vadd.f32 %v2275, %v2589
        %v2591 = vpop.f32.mrf.mxu0
        %2592 = vmatprep.mubr.f32.mxu0 0.0
        %v2593 = vand.u32 %v677, 4294901760
        %2594 = vmatmul.mubr.f32.gmra.mxu0 %v2593
        %v2595 = vpop.f32.mrf.mxu0
        %v2596 = vadd.f32 %v2283, %v2595
        %v2597 = vpop.f32.mrf.mxu0
        %2598 = vmatprep.mubr.f32.mxu0 0.0
        %v2599 = vand.u32 %v678, 4294901760
        %2600 = vmatmul.mubr.f32.gmra.mxu0 %v2599
        %v2601 = vpop.f32.mrf.mxu0
        %v2602 = vadd.f32 %v2291, %v2601
        %v2603 = vpop.f32.mrf.mxu0
        %2604 = vmatprep.mubr.f32.mxu0 0.0
        %v2605 = vand.u32 %v679, 4294901760
        %2606 = vmatmul.mubr.f32.gmra.mxu0 %v2605
        %v2607 = vpop.f32.mrf.mxu0
        %v2608 = vadd.f32 %v2299, %v2607
        %v2609 = vpop.f32.mrf.mxu0
        %2610 = vmatprep.mubr.f32.mxu0 0.0
        %v2611 = vand.u32 %v680, 4294901760
        %2612 = vmatmul.mubr.f32.gmra.mxu0 %v2611
        %v2613 = vpop.f32.mrf.mxu0
        %v2614 = vadd.f32 %v2307, %v2613
        %v2615 = vpop.f32.mrf.mxu0
        %2616 = vmatprep.mubr.f32.mxu0 0.0
        %v2617 = vand.u32 %v681, 4294901760
        %2618 = vmatmul.mubr.f32.gmra.mxu0 %v2617
        %v2619 = vpop.f32.mrf.mxu0
        %v2620 = vadd.f32 %v2315, %v2619
        %v2621 = vpop.f32.mrf.mxu0
        %2622 = vdwg.mxu0
        %2623 = vmatprep.subr.mxu0 0.0
        %v2624 = vand.u32 %v921, 4294901760
        %2625 = vmatpush1.msra.mxu0 %v2624
        %2626 = vmatprep.subr.mxu0 0.0
        %v2627 = vand.u32 %v920, 4294901760
        %2628 = vmatpush1.msra.mxu0 %v2627
        %2629 = vmatprep.subr.mxu0 0.0
        %v2630 = vand.u32 %v919, 4294901760
        %2631 = vmatpush1.msra.mxu0 %v2630
        %2632 = vmatprep.subr.mxu0 0.0
        %v2633 = vand.u32 %v918, 4294901760
        %2634 = vmatpush1.msra.mxu0 %v2633
        %2635 = vmatprep.subr.mxu0 0.0
        %v2636 = vand.u32 %v917, 4294901760
        %2637 = vmatpush1.msra.mxu0 %v2636
        %2638 = vmatprep.subr.mxu0 0.0
        %v2639 = vand.u32 %v916, 4294901760
        %2640 = vmatpush1.msra.mxu0 %v2639
        %2641 = vmatprep.subr.mxu0 0.0
        %v2642 = vand.u32 %v915, 4294901760
        %2643 = vmatpush1.msra.mxu0 %v2642
        %2644 = vmatprep.subr.mxu0 0.0
        %v2645 = vand.u32 %v914, 4294901760
        %2646 = vmatpush1.msra.mxu0 %v2645
        %2647 = vmatprep.subr.mxu0 0.0
        %v2648 = vand.u32 %v913, 4294901760
        %2649 = vmatpush1.msra.mxu0 %v2648
        %2650 = vmatprep.subr.mxu0 0.0
        %v2651 = vand.u32 %v912, 4294901760
        %2652 = vmatpush1.msra.mxu0 %v2651
        %2653 = vmatprep.subr.mxu0 0.0
        %v2654 = vand.u32 %v911, 4294901760
        %2655 = vmatpush1.msra.mxu0 %v2654
        %2656 = vmatprep.subr.mxu0 0.0
        %v2657 = vand.u32 %v910, 4294901760
        %2658 = vmatpush1.msra.mxu0 %v2657
        %2659 = vmatprep.subr.mxu0 0.0
        %v2660 = vand.u32 %v909, 4294901760
        %2661 = vmatpush1.msra.mxu0 %v2660
        %2662 = vmatprep.subr.mxu0 0.0
        %v2663 = vand.u32 %v908, 4294901760
        %2664 = vmatpush1.msra.mxu0 %v2663
        %2665 = vmatprep.subr.mxu0 0.0
        %v2666 = vand.u32 %v907, 4294901760
        %2667 = vmatpush1.msra.mxu0 %v2666
        %2668 = vmatprep.subr.mxu0 0.0
        %v2669 = vand.u32 %v906, 4294901760
        %2670 = vmatpush1.msra.mxu0 %v2669
        %2671 = vmatprep.subr.mxu0 0.0
        %2672 = vmatpush2.msra.mxu0 0.0
        %2673 = vmatprep.subr.mxu0 0.0
        %2674 = vmatpush2.msra.mxu0 0.0
        %2675 = vmatprep.subr.mxu0 0.0
        %2676 = vmatpush2.msra.mxu0 0.0
        %2677 = vmatprep.subr.mxu0 0.0
        %2678 = vmatpush2.msra.mxu0 0.0
        %2679 = vmatprep.subr.mxu0 0.0
        %2680 = vmatpush2.msra.mxu0 0.0
        %2681 = vmatprep.subr.mxu0 0.0
        %2682 = vmatpush2.msra.mxu0 0.0
        %2683 = vmatprep.subr.mxu0 0.0
        %2684 = vmatpush2.msra.mxu0 0.0
        %2685 = vmatprep.subr.mxu0 0.0
        %2686 = vmatpush2.msra.mxu0 0.0
        %2687 = vmatprep.subr.mxu0 0.0
        %2688 = vmatpush2.msra.mxu0 0.0
        %2689 = vmatprep.subr.mxu0 0.0
        %2690 = vmatpush2.msra.mxu0 0.0
        %2691 = vmatprep.subr.mxu0 0.0
        %2692 = vmatpush2.msra.mxu0 0.0
        %2693 = vmatprep.subr.mxu0 0.0
        %2694 = vmatpush2.msra.mxu0 0.0
        %2695 = vmatprep.subr.mxu0 0.0
        %2696 = vmatpush2.msra.mxu0 0.0
        %2697 = vmatprep.subr.mxu0 0.0
        %2698 = vmatpush2.msra.mxu0 0.0
        %2699 = vmatprep.subr.mxu0 0.0
        %2700 = vmatpush2.msra.mxu0 0.0
        %2701 = vmatprep.subr.mxu0 0.0
        %2702 = vmatpush2.msra.mxu0 0.0
        %2703 = vmatprep.mubr.f32.mxu0 0.0
        %v2704 = vand.u32 %v650, 4294901760
        %2705 = vmatmul.mubr.f32.gmra.mxu0 %v2704
        %v2706 = vpop.f32.mrf.mxu0
        %v2707 = vadd.f32 %v2434, %v2706
        %v2708 = vpop.f32.mrf.mxu0
        %2709 = vmatprep.mubr.f32.mxu0 0.0
        %v2710 = vand.u32 %v651, 4294901760
        %2711 = vmatmul.mubr.f32.gmra.mxu0 %v2710
        %v2712 = vpop.f32.mrf.mxu0
        %v2713 = vadd.f32 %v2440, %v2712
        %v2714 = vpop.f32.mrf.mxu0
        %2715 = vmatprep.mubr.f32.mxu0 0.0
        %v2716 = vand.u32 %v652, 4294901760
        %2717 = vmatmul.mubr.f32.gmra.mxu0 %v2716
        %v2718 = vpop.f32.mrf.mxu0
        %v2719 = vadd.f32 %v2446, %v2718
        %v2720 = vpop.f32.mrf.mxu0
        %2721 = vmatprep.mubr.f32.mxu0 0.0
        %v2722 = vand.u32 %v653, 4294901760
        %2723 = vmatmul.mubr.f32.gmra.mxu0 %v2722
        %v2724 = vpop.f32.mrf.mxu0
        %v2725 = vadd.f32 %v2452, %v2724
        %v2726 = vpop.f32.mrf.mxu0
        %2727 = vmatprep.mubr.f32.mxu0 0.0
        %v2728 = vand.u32 %v654, 4294901760
        %2729 = vmatmul.mubr.f32.gmra.mxu0 %v2728
        %v2730 = vpop.f32.mrf.mxu0
        %v2731 = vadd.f32 %v2458, %v2730
        %v2732 = vpop.f32.mrf.mxu0
        %2733 = vmatprep.mubr.f32.mxu0 0.0
        %v2734 = vand.u32 %v655, 4294901760
        %2735 = vmatmul.mubr.f32.gmra.mxu0 %v2734
        %v2736 = vpop.f32.mrf.mxu0
        %v2737 = vadd.f32 %v2464, %v2736
        %v2738 = vpop.f32.mrf.mxu0
        %2739 = vmatprep.mubr.f32.mxu0 0.0
        %v2740 = vand.u32 %v656, 4294901760
        %2741 = vmatmul.mubr.f32.gmra.mxu0 %v2740
        %v2742 = vpop.f32.mrf.mxu0
        %v2743 = vadd.f32 %v2470, %v2742
        %v2744 = vpop.f32.mrf.mxu0
        %2745 = vmatprep.mubr.f32.mxu0 0.0
        %v2746 = vand.u32 %v657, 4294901760
        %2747 = vmatmul.mubr.f32.gmra.mxu0 %v2746
        %v2748 = vpop.f32.mrf.mxu0
        %v2749 = vadd.f32 %v2476, %v2748
        %v2750 = vpop.f32.mrf.mxu0
        %2751 = vmatprep.mubr.f32.mxu0 0.0
        %v2752 = vand.u32 %v658, 4294901760
        %2753 = vmatmul.mubr.f32.gmra.mxu0 %v2752
        %v2754 = vpop.f32.mrf.mxu0
        %v2755 = vadd.f32 %v2482, %v2754
        %v2756 = vpop.f32.mrf.mxu0
        %2757 = vmatprep.mubr.f32.mxu0 0.0
        %v2758 = vand.u32 %v659, 4294901760
        %2759 = vmatmul.mubr.f32.gmra.mxu0 %v2758
        %v2760 = vpop.f32.mrf.mxu0
        %v2761 = vadd.f32 %v2488, %v2760
        %v2762 = vpop.f32.mrf.mxu0
        %2763 = vmatprep.mubr.f32.mxu0 0.0
        %v2764 = vand.u32 %v660, 4294901760
        %2765 = vmatmul.mubr.f32.gmra.mxu0 %v2764
        %v2766 = vpop.f32.mrf.mxu0
        %v2767 = vadd.f32 %v2494, %v2766
        %v2768 = vpop.f32.mrf.mxu0
        %2769 = vmatprep.mubr.f32.mxu0 0.0
        %v2770 = vand.u32 %v661, 4294901760
        %2771 = vmatmul.mubr.f32.gmra.mxu0 %v2770
        %v2772 = vpop.f32.mrf.mxu0
        %v2773 = vadd.f32 %v2500, %v2772
        %v2774 = vpop.f32.mrf.mxu0
        %2775 = vmatprep.mubr.f32.mxu0 0.0
        %v2776 = vand.u32 %v662, 4294901760
        %2777 = vmatmul.mubr.f32.gmra.mxu0 %v2776
        %v2778 = vpop.f32.mrf.mxu0
        %v2779 = vadd.f32 %v2506, %v2778
        %v2780 = vpop.f32.mrf.mxu0
        %2781 = vmatprep.mubr.f32.mxu0 0.0
        %v2782 = vand.u32 %v663, 4294901760
        %2783 = vmatmul.mubr.f32.gmra.mxu0 %v2782
        %v2784 = vpop.f32.mrf.mxu0
        %v2785 = vadd.f32 %v2512, %v2784
        %v2786 = vpop.f32.mrf.mxu0
        %2787 = vmatprep.mubr.f32.mxu0 0.0
        %v2788 = vand.u32 %v664, 4294901760
        %2789 = vmatmul.mubr.f32.gmra.mxu0 %v2788
        %v2790 = vpop.f32.mrf.mxu0
        %v2791 = vadd.f32 %v2518, %v2790
        %v2792 = vpop.f32.mrf.mxu0
        %2793 = vmatprep.mubr.f32.mxu0 0.0
        %v2794 = vand.u32 %v665, 4294901760
        %2795 = vmatmul.mubr.f32.gmra.mxu0 %v2794
        %v2796 = vpop.f32.mrf.mxu0
        %v2797 = vadd.f32 %v2524, %v2796
        %v2798 = vpop.f32.mrf.mxu0
        %2799 = vmatprep.mubr.f32.mxu0 0.0
        %v2800 = vand.u32 %v666, 4294901760
        %2801 = vmatmul.mubr.f32.gmra.mxu0 %v2800
        %v2802 = vpop.f32.mrf.mxu0
        %v2803 = vadd.f32 %v2530, %v2802
        %v2804 = vpop.f32.mrf.mxu0
        %2805 = vmatprep.mubr.f32.mxu0 0.0
        %v2806 = vand.u32 %v667, 4294901760
        %2807 = vmatmul.mubr.f32.gmra.mxu0 %v2806
        %v2808 = vpop.f32.mrf.mxu0
        %v2809 = vadd.f32 %v2536, %v2808
        %v2810 = vpop.f32.mrf.mxu0
        %2811 = vmatprep.mubr.f32.mxu0 0.0
        %v2812 = vand.u32 %v668, 4294901760
        %2813 = vmatmul.mubr.f32.gmra.mxu0 %v2812
        %v2814 = vpop.f32.mrf.mxu0
        %v2815 = vadd.f32 %v2542, %v2814
        %v2816 = vpop.f32.mrf.mxu0
        %2817 = vmatprep.mubr.f32.mxu0 0.0
        %v2818 = vand.u32 %v669, 4294901760
        %2819 = vmatmul.mubr.f32.gmra.mxu0 %v2818
        %v2820 = vpop.f32.mrf.mxu0
        %v2821 = vadd.f32 %v2548, %v2820
        %v2822 = vpop.f32.mrf.mxu0
        %2823 = vmatprep.mubr.f32.mxu0 0.0
        %v2824 = vand.u32 %v670, 4294901760
        %2825 = vmatmul.mubr.f32.gmra.mxu0 %v2824
        %v2826 = vpop.f32.mrf.mxu0
        %v2827 = vadd.f32 %v2554, %v2826
        %v2828 = vpop.f32.mrf.mxu0
        %2829 = vmatprep.mubr.f32.mxu0 0.0
        %v2830 = vand.u32 %v671, 4294901760
        %2831 = vmatmul.mubr.f32.gmra.mxu0 %v2830
        %v2832 = vpop.f32.mrf.mxu0
        %v2833 = vadd.f32 %v2560, %v2832
        %v2834 = vpop.f32.mrf.mxu0
        %2835 = vmatprep.mubr.f32.mxu0 0.0
        %v2836 = vand.u32 %v672, 4294901760
        %2837 = vmatmul.mubr.f32.gmra.mxu0 %v2836
        %v2838 = vpop.f32.mrf.mxu0
        %v2839 = vadd.f32 %v2566, %v2838
        %v2840 = vpop.f32.mrf.mxu0
        %2841 = vmatprep.mubr.f32.mxu0 0.0
        %v2842 = vand.u32 %v673, 4294901760
        %2843 = vmatmul.mubr.f32.gmra.mxu0 %v2842
        %v2844 = vpop.f32.mrf.mxu0
        %v2845 = vadd.f32 %v2572, %v2844
        %v2846 = vpop.f32.mrf.mxu0
        %2847 = vmatprep.mubr.f32.mxu0 0.0
        %v2848 = vand.u32 %v674, 4294901760
        %2849 = vmatmul.mubr.f32.gmra.mxu0 %v2848
        %v2850 = vpop.f32.mrf.mxu0
        %v2851 = vadd.f32 %v2578, %v2850
        %v2852 = vpop.f32.mrf.mxu0
        %2853 = vmatprep.mubr.f32.mxu0 0.0
        %v2854 = vand.u32 %v675, 4294901760
        %2855 = vmatmul.mubr.f32.gmra.mxu0 %v2854
        %v2856 = vpop.f32.mrf.mxu0
        %v2857 = vadd.f32 %v2584, %v2856
        %v2858 = vpop.f32.mrf.mxu0
        %2859 = vmatprep.mubr.f32.mxu0 0.0
        %v2860 = vand.u32 %v676, 4294901760
        %2861 = vmatmul.mubr.f32.gmra.mxu0 %v2860
        %v2862 = vpop.f32.mrf.mxu0
        %v2863 = vadd.f32 %v2590, %v2862
        %v2864 = vpop.f32.mrf.mxu0
        %2865 = vmatprep.mubr.f32.mxu0 0.0
        %v2866 = vand.u32 %v677, 4294901760
        %2867 = vmatmul.mubr.f32.gmra.mxu0 %v2866
        %v2868 = vpop.f32.mrf.mxu0
        %v2869 = vadd.f32 %v2596, %v2868
        %v2870 = vpop.f32.mrf.mxu0
        %2871 = vmatprep.mubr.f32.mxu0 0.0
        %v2872 = vand.u32 %v678, 4294901760
        %2873 = vmatmul.mubr.f32.gmra.mxu0 %v2872
        %v2874 = vpop.f32.mrf.mxu0
        %v2875 = vadd.f32 %v2602, %v2874
        %v2876 = vpop.f32.mrf.mxu0
        %2877 = vmatprep.mubr.f32.mxu0 0.0
        %v2878 = vand.u32 %v679, 4294901760
        %2879 = vmatmul.mubr.f32.gmra.mxu0 %v2878
        %v2880 = vpop.f32.mrf.mxu0
        %v2881 = vadd.f32 %v2608, %v2880
        %v2882 = vpop.f32.mrf.mxu0
        %2883 = vmatprep.mubr.f32.mxu0 0.0
        %v2884 = vand.u32 %v680, 4294901760
        %2885 = vmatmul.mubr.f32.gmra.mxu0 %v2884
        %v2886 = vpop.f32.mrf.mxu0
        %v2887 = vadd.f32 %v2614, %v2886
        %v2888 = vpop.f32.mrf.mxu0
        %2889 = vmatprep.mubr.f32.mxu0 0.0
        %v2890 = vand.u32 %v681, 4294901760
        %2891 = vmatmul.mubr.f32.gmra.mxu0 %v2890
        %v2892 = vpop.f32.mrf.mxu0
        %v2893 = vadd.f32 %v2620, %v2892
        %v2894 = vpop.f32.mrf.mxu0
        %2895 = vdwg.mxu0
        %2896 = vmatprep.subr.mxu0 0.0
        %v2897 = vand.u32 %v921, 4294901760
        %2898 = vmatpush1.msra.mxu0 %v2897
        %2899 = vmatprep.subr.mxu0 0.0
        %v2900 = vand.u32 %v920, 4294901760
        %2901 = vmatpush1.msra.mxu0 %v2900
        %2902 = vmatprep.subr.mxu0 0.0
        %v2903 = vand.u32 %v919, 4294901760
        %2904 = vmatpush1.msra.mxu0 %v2903
        %2905 = vmatprep.subr.mxu0 0.0
        %v2906 = vand.u32 %v918, 4294901760
        %2907 = vmatpush1.msra.mxu0 %v2906
        %2908 = vmatprep.subr.mxu0 0.0
        %v2909 = vand.u32 %v917, 4294901760
        %2910 = vmatpush1.msra.mxu0 %v2909
        %2911 = vmatprep.subr.mxu0 0.0
        %v2912 = vand.u32 %v916, 4294901760
        %2913 = vmatpush1.msra.mxu0 %v2912
        %2914 = vmatprep.subr.mxu0 0.0
        %v2915 = vand.u32 %v915, 4294901760
        %2916 = vmatpush1.msra.mxu0 %v2915
        %2917 = vmatprep.subr.mxu0 0.0
        %v2918 = vand.u32 %v914, 4294901760
        %2919 = vmatpush1.msra.mxu0 %v2918
        %2920 = vmatprep.subr.mxu0 0.0
        %v2921 = vand.u32 %v913, 4294901760
        %2922 = vmatpush1.msra.mxu0 %v2921
        %2923 = vmatprep.subr.mxu0 0.0
        %v2924 = vand.u32 %v912, 4294901760
        %2925 = vmatpush1.msra.mxu0 %v2924
        %2926 = vmatprep.subr.mxu0 0.0
        %v2927 = vand.u32 %v911, 4294901760
        %2928 = vmatpush1.msra.mxu0 %v2927
        %2929 = vmatprep.subr.mxu0 0.0
        %v2930 = vand.u32 %v910, 4294901760
        %2931 = vmatpush1.msra.mxu0 %v2930
        %2932 = vmatprep.subr.mxu0 0.0
        %v2933 = vand.u32 %v909, 4294901760
        %2934 = vmatpush1.msra.mxu0 %v2933
        %2935 = vmatprep.subr.mxu0 0.0
        %v2936 = vand.u32 %v908, 4294901760
        %2937 = vmatpush1.msra.mxu0 %v2936
        %2938 = vmatprep.subr.mxu0 0.0
        %v2939 = vand.u32 %v907, 4294901760
        %2940 = vmatpush1.msra.mxu0 %v2939
        %2941 = vmatprep.subr.mxu0 0.0
        %v2942 = vand.u32 %v906, 4294901760
        %2943 = vmatpush1.msra.mxu0 %v2942
        %2944 = vmatprep.subr.mxu0 0.0
        %2945 = vmatpush2.msra.mxu0 0.0
        %2946 = vmatprep.subr.mxu0 0.0
        %2947 = vmatpush2.msra.mxu0 0.0
        %2948 = vmatprep.subr.mxu0 0.0
        %2949 = vmatpush2.msra.mxu0 0.0
        %2950 = vmatprep.subr.mxu0 0.0
        %2951 = vmatpush2.msra.mxu0 0.0
        %2952 = vmatprep.subr.mxu0 0.0
        %2953 = vmatpush2.msra.mxu0 0.0
        %2954 = vmatprep.subr.mxu0 0.0
        %2955 = vmatpush2.msra.mxu0 0.0
        %2956 = vmatprep.subr.mxu0 0.0
        %2957 = vmatpush2.msra.mxu0 0.0
        %2958 = vmatprep.subr.mxu0 0.0
        %2959 = vmatpush2.msra.mxu0 0.0
        %2960 = vmatprep.subr.mxu0 0.0
        %2961 = vmatpush2.msra.mxu0 0.0
        %2962 = vmatprep.subr.mxu0 0.0
        %2963 = vmatpush2.msra.mxu0 0.0
        %2964 = vmatprep.subr.mxu0 0.0
        %2965 = vmatpush2.msra.mxu0 0.0
        %2966 = vmatprep.subr.mxu0 0.0
        %2967 = vmatpush2.msra.mxu0 0.0
        %2968 = vmatprep.subr.mxu0 0.0
        %2969 = vmatpush2.msra.mxu0 0.0
        %2970 = vmatprep.subr.mxu0 0.0
        %2971 = vmatpush2.msra.mxu0 0.0
        %2972 = vmatprep.subr.mxu0 0.0
        %2973 = vmatpush2.msra.mxu0 0.0
        %2974 = vmatprep.subr.mxu0 0.0
        %2975 = vmatpush2.msra.mxu0 0.0
        %2976 = vmatprep.mubr.f32.mxu0 0.0
        %v2977 = vand.u32 %v874, 4294901760
        %v2978 = vsub.f32 %v874, %v2977
        %v2979 = vand.u32 %v2978, 4294901760
        %v2980 = vsub.f32 %v2978, %v2979
        %v2981 = vand.u32 %v2980, 4294901760
        %2982 = vmatmul.mubr.f32.gmra.mxu0 %v2981
        %v2983 = vpop.f32.mrf.mxu0
        %v2984 = vadd.f32 0.0, %v2983
        %v2985 = vpop.f32.mrf.mxu0
        %2986 = vmatprep.mubr.f32.mxu0 0.0
        %v2987 = vand.u32 %v875, 4294901760
        %v2988 = vsub.f32 %v875, %v2987
        %v2989 = vand.u32 %v2988, 4294901760
        %v2990 = vsub.f32 %v2988, %v2989
        %v2991 = vand.u32 %v2990, 4294901760
        %2992 = vmatmul.mubr.f32.gmra.mxu0 %v2991
        %v2993 = vpop.f32.mrf.mxu0
        %v2994 = vadd.f32 0.0, %v2993
        %v2995 = vpop.f32.mrf.mxu0
        %2996 = vmatprep.mubr.f32.mxu0 0.0
        %v2997 = vand.u32 %v876, 4294901760
        %v2998 = vsub.f32 %v876, %v2997
        %v2999 = vand.u32 %v2998, 4294901760
        %v3000 = vsub.f32 %v2998, %v2999
        %v3001 = vand.u32 %v3000, 4294901760
        %3002 = vmatmul.mubr.f32.gmra.mxu0 %v3001
        %v3003 = vpop.f32.mrf.mxu0
        %v3004 = vadd.f32 0.0, %v3003
        %v3005 = vpop.f32.mrf.mxu0
        %3006 = vmatprep.mubr.f32.mxu0 0.0
        %v3007 = vand.u32 %v877, 4294901760
        %v3008 = vsub.f32 %v877, %v3007
        %v3009 = vand.u32 %v3008, 4294901760
        %v3010 = vsub.f32 %v3008, %v3009
        %v3011 = vand.u32 %v3010, 4294901760
        %3012 = vmatmul.mubr.f32.gmra.mxu0 %v3011
        %v3013 = vpop.f32.mrf.mxu0
        %v3014 = vadd.f32 0.0, %v3013
        %v3015 = vpop.f32.mrf.mxu0
        %3016 = vmatprep.mubr.f32.mxu0 0.0
        %v3017 = vand.u32 %v878, 4294901760
        %v3018 = vsub.f32 %v878, %v3017
        %v3019 = vand.u32 %v3018, 4294901760
        %v3020 = vsub.f32 %v3018, %v3019
        %v3021 = vand.u32 %v3020, 4294901760
        %3022 = vmatmul.mubr.f32.gmra.mxu0 %v3021
        %v3023 = vpop.f32.mrf.mxu0
        %v3024 = vadd.f32 0.0, %v3023
        %v3025 = vpop.f32.mrf.mxu0
        %3026 = vmatprep.mubr.f32.mxu0 0.0
        %v3027 = vand.u32 %v879, 4294901760
        %v3028 = vsub.f32 %v879, %v3027
        %v3029 = vand.u32 %v3028, 4294901760
        %v3030 = vsub.f32 %v3028, %v3029
        %v3031 = vand.u32 %v3030, 4294901760
        %3032 = vmatmul.mubr.f32.gmra.mxu0 %v3031
        %v3033 = vpop.f32.mrf.mxu0
        %v3034 = vadd.f32 0.0, %v3033
        %v3035 = vpop.f32.mrf.mxu0
        %3036 = vmatprep.mubr.f32.mxu0 0.0
        %v3037 = vand.u32 %v880, 4294901760
        %v3038 = vsub.f32 %v880, %v3037
        %v3039 = vand.u32 %v3038, 4294901760
        %v3040 = vsub.f32 %v3038, %v3039
        %v3041 = vand.u32 %v3040, 4294901760
        %3042 = vmatmul.mubr.f32.gmra.mxu0 %v3041
        %v3043 = vpop.f32.mrf.mxu0
        %v3044 = vadd.f32 0.0, %v3043
        %v3045 = vpop.f32.mrf.mxu0
        %3046 = vmatprep.mubr.f32.mxu0 0.0
        %v3047 = vand.u32 %v881, 4294901760
        %v3048 = vsub.f32 %v881, %v3047
        %v3049 = vand.u32 %v3048, 4294901760
        %v3050 = vsub.f32 %v3048, %v3049
        %v3051 = vand.u32 %v3050, 4294901760
        %3052 = vmatmul.mubr.f32.gmra.mxu0 %v3051
        %v3053 = vpop.f32.mrf.mxu0
        %v3054 = vadd.f32 0.0, %v3053
        %v3055 = vpop.f32.mrf.mxu0
        %3056 = vmatprep.mubr.f32.mxu0 0.0
        %v3057 = vand.u32 %v882, 4294901760
        %v3058 = vsub.f32 %v882, %v3057
        %v3059 = vand.u32 %v3058, 4294901760
        %v3060 = vsub.f32 %v3058, %v3059
        %v3061 = vand.u32 %v3060, 4294901760
        %3062 = vmatmul.mubr.f32.gmra.mxu0 %v3061
        %v3063 = vpop.f32.mrf.mxu0
        %v3064 = vadd.f32 0.0, %v3063
        %v3065 = vpop.f32.mrf.mxu0
        %3066 = vmatprep.mubr.f32.mxu0 0.0
        %v3067 = vand.u32 %v883, 4294901760
        %v3068 = vsub.f32 %v883, %v3067
        %v3069 = vand.u32 %v3068, 4294901760
        %v3070 = vsub.f32 %v3068, %v3069
        %v3071 = vand.u32 %v3070, 4294901760
        %3072 = vmatmul.mubr.f32.gmra.mxu0 %v3071
        %v3073 = vpop.f32.mrf.mxu0
        %v3074 = vadd.f32 0.0, %v3073
        %v3075 = vpop.f32.mrf.mxu0
        %3076 = vmatprep.mubr.f32.mxu0 0.0
        %v3077 = vand.u32 %v884, 4294901760
        %v3078 = vsub.f32 %v884, %v3077
        %v3079 = vand.u32 %v3078, 4294901760
        %v3080 = vsub.f32 %v3078, %v3079
        %v3081 = vand.u32 %v3080, 4294901760
        %3082 = vmatmul.mubr.f32.gmra.mxu0 %v3081
        %v3083 = vpop.f32.mrf.mxu0
        %v3084 = vadd.f32 0.0, %v3083
        %v3085 = vpop.f32.mrf.mxu0
        %3086 = vmatprep.mubr.f32.mxu0 0.0
        %v3087 = vand.u32 %v885, 4294901760
        %v3088 = vsub.f32 %v885, %v3087
        %v3089 = vand.u32 %v3088, 4294901760
        %v3090 = vsub.f32 %v3088, %v3089
        %v3091 = vand.u32 %v3090, 4294901760
        %3092 = vmatmul.mubr.f32.gmra.mxu0 %v3091
        %v3093 = vpop.f32.mrf.mxu0
        %v3094 = vadd.f32 0.0, %v3093
        %v3095 = vpop.f32.mrf.mxu0
        %3096 = vmatprep.mubr.f32.mxu0 0.0
        %v3097 = vand.u32 %v886, 4294901760
        %v3098 = vsub.f32 %v886, %v3097
        %v3099 = vand.u32 %v3098, 4294901760
        %v3100 = vsub.f32 %v3098, %v3099
        %v3101 = vand.u32 %v3100, 4294901760
        %3102 = vmatmul.mubr.f32.gmra.mxu0 %v3101
        %v3103 = vpop.f32.mrf.mxu0
        %v3104 = vadd.f32 0.0, %v3103
        %v3105 = vpop.f32.mrf.mxu0
        %3106 = vmatprep.mubr.f32.mxu0 0.0
        %v3107 = vand.u32 %v887, 4294901760
        %v3108 = vsub.f32 %v887, %v3107
        %v3109 = vand.u32 %v3108, 4294901760
        %v3110 = vsub.f32 %v3108, %v3109
        %v3111 = vand.u32 %v3110, 4294901760
        %3112 = vmatmul.mubr.f32.gmra.mxu0 %v3111
        %v3113 = vpop.f32.mrf.mxu0
        %v3114 = vadd.f32 0.0, %v3113
        %v3115 = vpop.f32.mrf.mxu0
        %3116 = vmatprep.mubr.f32.mxu0 0.0
        %v3117 = vand.u32 %v888, 4294901760
        %v3118 = vsub.f32 %v888, %v3117
        %v3119 = vand.u32 %v3118, 4294901760
        %v3120 = vsub.f32 %v3118, %v3119
        %v3121 = vand.u32 %v3120, 4294901760
        %3122 = vmatmul.mubr.f32.gmra.mxu0 %v3121
        %v3123 = vpop.f32.mrf.mxu0
        %v3124 = vadd.f32 0.0, %v3123
        %v3125 = vpop.f32.mrf.mxu0
        %3126 = vmatprep.mubr.f32.mxu0 0.0
        %v3127 = vand.u32 %v889, 4294901760
        %v3128 = vsub.f32 %v889, %v3127
        %v3129 = vand.u32 %v3128, 4294901760
        %v3130 = vsub.f32 %v3128, %v3129
        %v3131 = vand.u32 %v3130, 4294901760
        %3132 = vmatmul.mubr.f32.gmra.mxu0 %v3131
        %v3133 = vpop.f32.mrf.mxu0
        %v3134 = vadd.f32 0.0, %v3133
        %v3135 = vpop.f32.mrf.mxu0
        %3136 = vmatprep.mubr.f32.mxu0 0.0
        %v3137 = vand.u32 %v890, 4294901760
        %v3138 = vsub.f32 %v890, %v3137
        %v3139 = vand.u32 %v3138, 4294901760
        %v3140 = vsub.f32 %v3138, %v3139
        %v3141 = vand.u32 %v3140, 4294901760
        %3142 = vmatmul.mubr.f32.gmra.mxu0 %v3141
        %v3143 = vpop.f32.mrf.mxu0
        %v3144 = vadd.f32 0.0, %v3143
        %v3145 = vpop.f32.mrf.mxu0
        %3146 = vmatprep.mubr.f32.mxu0 0.0
        %v3147 = vand.u32 %v891, 4294901760
        %v3148 = vsub.f32 %v891, %v3147
        %v3149 = vand.u32 %v3148, 4294901760
        %v3150 = vsub.f32 %v3148, %v3149
        %v3151 = vand.u32 %v3150, 4294901760
        %3152 = vmatmul.mubr.f32.gmra.mxu0 %v3151
        %v3153 = vpop.f32.mrf.mxu0
        %v3154 = vadd.f32 0.0, %v3153
        %v3155 = vpop.f32.mrf.mxu0
        %3156 = vmatprep.mubr.f32.mxu0 0.0
        %v3157 = vand.u32 %v892, 4294901760
        %v3158 = vsub.f32 %v892, %v3157
        %v3159 = vand.u32 %v3158, 4294901760
        %v3160 = vsub.f32 %v3158, %v3159
        %v3161 = vand.u32 %v3160, 4294901760
        %3162 = vmatmul.mubr.f32.gmra.mxu0 %v3161
        %v3163 = vpop.f32.mrf.mxu0
        %v3164 = vadd.f32 0.0, %v3163
        %v3165 = vpop.f32.mrf.mxu0
        %3166 = vmatprep.mubr.f32.mxu0 0.0
        %v3167 = vand.u32 %v893, 4294901760
        %v3168 = vsub.f32 %v893, %v3167
        %v3169 = vand.u32 %v3168, 4294901760
        %v3170 = vsub.f32 %v3168, %v3169
        %v3171 = vand.u32 %v3170, 4294901760
        %3172 = vmatmul.mubr.f32.gmra.mxu0 %v3171
        %v3173 = vpop.f32.mrf.mxu0
        %v3174 = vadd.f32 0.0, %v3173
        %v3175 = vpop.f32.mrf.mxu0
        %3176 = vmatprep.mubr.f32.mxu0 0.0
        %v3177 = vand.u32 %v894, 4294901760
        %v3178 = vsub.f32 %v894, %v3177
        %v3179 = vand.u32 %v3178, 4294901760
        %v3180 = vsub.f32 %v3178, %v3179
        %v3181 = vand.u32 %v3180, 4294901760
        %3182 = vmatmul.mubr.f32.gmra.mxu0 %v3181
        %v3183 = vpop.f32.mrf.mxu0
        %v3184 = vadd.f32 0.0, %v3183
        %v3185 = vpop.f32.mrf.mxu0
        %3186 = vmatprep.mubr.f32.mxu0 0.0
        %v3187 = vand.u32 %v895, 4294901760
        %v3188 = vsub.f32 %v895, %v3187
        %v3189 = vand.u32 %v3188, 4294901760
        %v3190 = vsub.f32 %v3188, %v3189
        %v3191 = vand.u32 %v3190, 4294901760
        %3192 = vmatmul.mubr.f32.gmra.mxu0 %v3191
        %v3193 = vpop.f32.mrf.mxu0
        %v3194 = vadd.f32 0.0, %v3193
        %v3195 = vpop.f32.mrf.mxu0
        %3196 = vmatprep.mubr.f32.mxu0 0.0
        %v3197 = vand.u32 %v896, 4294901760
        %v3198 = vsub.f32 %v896, %v3197
        %v3199 = vand.u32 %v3198, 4294901760
        %v3200 = vsub.f32 %v3198, %v3199
        %v3201 = vand.u32 %v3200, 4294901760
        %3202 = vmatmul.mubr.f32.gmra.mxu0 %v3201
        %v3203 = vpop.f32.mrf.mxu0
        %v3204 = vadd.f32 0.0, %v3203
        %v3205 = vpop.f32.mrf.mxu0
        %3206 = vmatprep.mubr.f32.mxu0 0.0
        %v3207 = vand.u32 %v897, 4294901760
        %v3208 = vsub.f32 %v897, %v3207
        %v3209 = vand.u32 %v3208, 4294901760
        %v3210 = vsub.f32 %v3208, %v3209
        %v3211 = vand.u32 %v3210, 4294901760
        %3212 = vmatmul.mubr.f32.gmra.mxu0 %v3211
        %v3213 = vpop.f32.mrf.mxu0
        %v3214 = vadd.f32 0.0, %v3213
        %v3215 = vpop.f32.mrf.mxu0
        %3216 = vmatprep.mubr.f32.mxu0 0.0
        %v3217 = vand.u32 %v898, 4294901760
        %v3218 = vsub.f32 %v898, %v3217
        %v3219 = vand.u32 %v3218, 4294901760
        %v3220 = vsub.f32 %v3218, %v3219
        %v3221 = vand.u32 %v3220, 4294901760
        %3222 = vmatmul.mubr.f32.gmra.mxu0 %v3221
        %v3223 = vpop.f32.mrf.mxu0
        %v3224 = vadd.f32 0.0, %v3223
        %v3225 = vpop.f32.mrf.mxu0
        %3226 = vmatprep.mubr.f32.mxu0 0.0
        %v3227 = vand.u32 %v899, 4294901760
        %v3228 = vsub.f32 %v899, %v3227
        %v3229 = vand.u32 %v3228, 4294901760
        %v3230 = vsub.f32 %v3228, %v3229
        %v3231 = vand.u32 %v3230, 4294901760
        %3232 = vmatmul.mubr.f32.gmra.mxu0 %v3231
        %v3233 = vpop.f32.mrf.mxu0
        %v3234 = vadd.f32 0.0, %v3233
        %v3235 = vpop.f32.mrf.mxu0
        %3236 = vmatprep.mubr.f32.mxu0 0.0
        %v3237 = vand.u32 %v900, 4294901760
        %v3238 = vsub.f32 %v900, %v3237
        %v3239 = vand.u32 %v3238, 4294901760
        %v3240 = vsub.f32 %v3238, %v3239
        %v3241 = vand.u32 %v3240, 4294901760
        %3242 = vmatmul.mubr.f32.gmra.mxu0 %v3241
        %v3243 = vpop.f32.mrf.mxu0
        %v3244 = vadd.f32 0.0, %v3243
        %v3245 = vpop.f32.mrf.mxu0
        %3246 = vmatprep.mubr.f32.mxu0 0.0
        %v3247 = vand.u32 %v901, 4294901760
        %v3248 = vsub.f32 %v901, %v3247
        %v3249 = vand.u32 %v3248, 4294901760
        %v3250 = vsub.f32 %v3248, %v3249
        %v3251 = vand.u32 %v3250, 4294901760
        %3252 = vmatmul.mubr.f32.gmra.mxu0 %v3251
        %v3253 = vpop.f32.mrf.mxu0
        %v3254 = vadd.f32 0.0, %v3253
        %v3255 = vpop.f32.mrf.mxu0
        %3256 = vmatprep.mubr.f32.mxu0 0.0
        %v3257 = vand.u32 %v902, 4294901760
        %v3258 = vsub.f32 %v902, %v3257
        %v3259 = vand.u32 %v3258, 4294901760
        %v3260 = vsub.f32 %v3258, %v3259
        %v3261 = vand.u32 %v3260, 4294901760
        %3262 = vmatmul.mubr.f32.gmra.mxu0 %v3261
        %v3263 = vpop.f32.mrf.mxu0
        %v3264 = vadd.f32 0.0, %v3263
        %v3265 = vpop.f32.mrf.mxu0
        %3266 = vmatprep.mubr.f32.mxu0 0.0
        %v3267 = vand.u32 %v903, 4294901760
        %v3268 = vsub.f32 %v903, %v3267
        %v3269 = vand.u32 %v3268, 4294901760
        %v3270 = vsub.f32 %v3268, %v3269
        %v3271 = vand.u32 %v3270, 4294901760
        %3272 = vmatmul.mubr.f32.gmra.mxu0 %v3271
        %v3273 = vpop.f32.mrf.mxu0
        %v3274 = vadd.f32 0.0, %v3273
        %v3275 = vpop.f32.mrf.mxu0
        %3276 = vmatprep.mubr.f32.mxu0 0.0
        %v3277 = vand.u32 %v904, 4294901760
        %v3278 = vsub.f32 %v904, %v3277
        %v3279 = vand.u32 %v3278, 4294901760
        %v3280 = vsub.f32 %v3278, %v3279
        %v3281 = vand.u32 %v3280, 4294901760
        %3282 = vmatmul.mubr.f32.gmra.mxu0 %v3281
        %v3283 = vpop.f32.mrf.mxu0
        %v3284 = vadd.f32 0.0, %v3283
        %v3285 = vpop.f32.mrf.mxu0
        %3286 = vmatprep.mubr.f32.mxu0 0.0
        %v3287 = vand.u32 %v905, 4294901760
        %v3288 = vsub.f32 %v905, %v3287
        %v3289 = vand.u32 %v3288, 4294901760
        %v3290 = vsub.f32 %v3288, %v3289
        %v3291 = vand.u32 %v3290, 4294901760
        %3292 = vmatmul.mubr.f32.gmra.mxu0 %v3291
        %v3293 = vpop.f32.mrf.mxu0
        %v3294 = vadd.f32 0.0, %v3293
        %v3295 = vpop.f32.mrf.mxu0
        %3296 = vdwg.mxu0
        %3297 = vmatprep.subr.mxu0 0.0
        %v3298 = vand.u32 %v921, 4294901760
        %v3299 = vsub.f32 %v921, %v3298
        %v3300 = vand.u32 %v3299, 4294901760
        %v3301 = vsub.f32 %v3299, %v3300
        %v3302 = vand.u32 %v3301, 4294901760
        %3303 = vmatpush1.msra.mxu0 %v3302
        %3304 = vmatprep.subr.mxu0 0.0
        %v3305 = vand.u32 %v920, 4294901760
        %v3306 = vsub.f32 %v920, %v3305
        %v3307 = vand.u32 %v3306, 4294901760
        %v3308 = vsub.f32 %v3306, %v3307
        %v3309 = vand.u32 %v3308, 4294901760
        %3310 = vmatpush1.msra.mxu0 %v3309
        %3311 = vmatprep.subr.mxu0 0.0
        %v3312 = vand.u32 %v919, 4294901760
        %v3313 = vsub.f32 %v919, %v3312
        %v3314 = vand.u32 %v3313, 4294901760
        %v3315 = vsub.f32 %v3313, %v3314
        %v3316 = vand.u32 %v3315, 4294901760
        %3317 = vmatpush1.msra.mxu0 %v3316
        %3318 = vmatprep.subr.mxu0 0.0
        %v3319 = vand.u32 %v918, 4294901760
        %v3320 = vsub.f32 %v918, %v3319
        %v3321 = vand.u32 %v3320, 4294901760
        %v3322 = vsub.f32 %v3320, %v3321
        %v3323 = vand.u32 %v3322, 4294901760
        %3324 = vmatpush1.msra.mxu0 %v3323
        %3325 = vmatprep.subr.mxu0 0.0
        %v3326 = vand.u32 %v917, 4294901760
        %v3327 = vsub.f32 %v917, %v3326
        %v3328 = vand.u32 %v3327, 4294901760
        %v3329 = vsub.f32 %v3327, %v3328
        %v3330 = vand.u32 %v3329, 4294901760
        %3331 = vmatpush1.msra.mxu0 %v3330
        %3332 = vmatprep.subr.mxu0 0.0
        %v3333 = vand.u32 %v916, 4294901760
        %v3334 = vsub.f32 %v916, %v3333
        %v3335 = vand.u32 %v3334, 4294901760
        %v3336 = vsub.f32 %v3334, %v3335
        %v3337 = vand.u32 %v3336, 4294901760
        %3338 = vmatpush1.msra.mxu0 %v3337
        %3339 = vmatprep.subr.mxu0 0.0
        %v3340 = vand.u32 %v915, 4294901760
        %v3341 = vsub.f32 %v915, %v3340
        %v3342 = vand.u32 %v3341, 4294901760
        %v3343 = vsub.f32 %v3341, %v3342
        %v3344 = vand.u32 %v3343, 4294901760
        %3345 = vmatpush1.msra.mxu0 %v3344
        %3346 = vmatprep.subr.mxu0 0.0
        %v3347 = vand.u32 %v914, 4294901760
        %v3348 = vsub.f32 %v914, %v3347
        %v3349 = vand.u32 %v3348, 4294901760
        %v3350 = vsub.f32 %v3348, %v3349
        %v3351 = vand.u32 %v3350, 4294901760
        %3352 = vmatpush1.msra.mxu0 %v3351
        %3353 = vmatprep.subr.mxu0 0.0
        %v3354 = vand.u32 %v913, 4294901760
        %v3355 = vsub.f32 %v913, %v3354
        %v3356 = vand.u32 %v3355, 4294901760
        %v3357 = vsub.f32 %v3355, %v3356
        %v3358 = vand.u32 %v3357, 4294901760
        %3359 = vmatpush1.msra.mxu0 %v3358
        %3360 = vmatprep.subr.mxu0 0.0
        %v3361 = vand.u32 %v912, 4294901760
        %v3362 = vsub.f32 %v912, %v3361
        %v3363 = vand.u32 %v3362, 4294901760
        %v3364 = vsub.f32 %v3362, %v3363
        %v3365 = vand.u32 %v3364, 4294901760
        %3366 = vmatpush1.msra.mxu0 %v3365
        %3367 = vmatprep.subr.mxu0 0.0
        %v3368 = vand.u32 %v911, 4294901760
        %v3369 = vsub.f32 %v911, %v3368
        %v3370 = vand.u32 %v3369, 4294901760
        %v3371 = vsub.f32 %v3369, %v3370
        %v3372 = vand.u32 %v3371, 4294901760
        %3373 = vmatpush1.msra.mxu0 %v3372
        %3374 = vmatprep.subr.mxu0 0.0
        %v3375 = vand.u32 %v910, 4294901760
        %v3376 = vsub.f32 %v910, %v3375
        %v3377 = vand.u32 %v3376, 4294901760
        %v3378 = vsub.f32 %v3376, %v3377
        %v3379 = vand.u32 %v3378, 4294901760
        %3380 = vmatpush1.msra.mxu0 %v3379
        %3381 = vmatprep.subr.mxu0 0.0
        %v3382 = vand.u32 %v909, 4294901760
        %v3383 = vsub.f32 %v909, %v3382
        %v3384 = vand.u32 %v3383, 4294901760
        %v3385 = vsub.f32 %v3383, %v3384
        %v3386 = vand.u32 %v3385, 4294901760
        %3387 = vmatpush1.msra.mxu0 %v3386
        %3388 = vmatprep.subr.mxu0 0.0
        %v3389 = vand.u32 %v908, 4294901760
        %v3390 = vsub.f32 %v908, %v3389
        %v3391 = vand.u32 %v3390, 4294901760
        %v3392 = vsub.f32 %v3390, %v3391
        %v3393 = vand.u32 %v3392, 4294901760
        %3394 = vmatpush1.msra.mxu0 %v3393
        %3395 = vmatprep.subr.mxu0 0.0
        %v3396 = vand.u32 %v907, 4294901760
        %v3397 = vsub.f32 %v907, %v3396
        %v3398 = vand.u32 %v3397, 4294901760
        %v3399 = vsub.f32 %v3397, %v3398
        %v3400 = vand.u32 %v3399, 4294901760
        %3401 = vmatpush1.msra.mxu0 %v3400
        %3402 = vmatprep.subr.mxu0 0.0
        %v3403 = vand.u32 %v906, 4294901760
        %v3404 = vsub.f32 %v906, %v3403
        %v3405 = vand.u32 %v3404, 4294901760
        %v3406 = vsub.f32 %v3404, %v3405
        %v3407 = vand.u32 %v3406, 4294901760
        %3408 = vmatpush1.msra.mxu0 %v3407
        %3409 = vmatprep.subr.mxu0 0.0
        %3410 = vmatpush2.msra.mxu0 0.0
        %3411 = vmatprep.subr.mxu0 0.0
        %3412 = vmatpush2.msra.mxu0 0.0
        %3413 = vmatprep.subr.mxu0 0.0
        %3414 = vmatpush2.msra.mxu0 0.0
        %3415 = vmatprep.subr.mxu0 0.0
        %3416 = vmatpush2.msra.mxu0 0.0
        %3417 = vmatprep.subr.mxu0 0.0
        %3418 = vmatpush2.msra.mxu0 0.0
        %3419 = vmatprep.subr.mxu0 0.0
        %3420 = vmatpush2.msra.mxu0 0.0
        %3421 = vmatprep.subr.mxu0 0.0
        %3422 = vmatpush2.msra.mxu0 0.0
        %3423 = vmatprep.subr.mxu0 0.0
        %3424 = vmatpush2.msra.mxu0 0.0
        %3425 = vmatprep.subr.mxu0 0.0
        %3426 = vmatpush2.msra.mxu0 0.0
        %3427 = vmatprep.subr.mxu0 0.0
        %3428 = vmatpush2.msra.mxu0 0.0
        %3429 = vmatprep.subr.mxu0 0.0
        %3430 = vmatpush2.msra.mxu0 0.0
        %3431 = vmatprep.subr.mxu0 0.0
        %3432 = vmatpush2.msra.mxu0 0.0
        %3433 = vmatprep.subr.mxu0 0.0
        %3434 = vmatpush2.msra.mxu0 0.0
        %3435 = vmatprep.subr.mxu0 0.0
        %3436 = vmatpush2.msra.mxu0 0.0
        %3437 = vmatprep.subr.mxu0 0.0
        %3438 = vmatpush2.msra.mxu0 0.0
        %3439 = vmatprep.subr.mxu0 0.0
        %3440 = vmatpush2.msra.mxu0 0.0
        %3441 = vmatprep.mubr.f32.mxu0 0.0
        %v3442 = vand.u32 %v874, 4294901760
        %3443 = vmatmul.mubr.f32.gmra.mxu0 %v3442
        %v3444 = vpop.f32.mrf.mxu0
        %v3445 = vadd.f32 %v2984, %v3444
        %v3446 = vpop.f32.mrf.mxu0
        %3447 = vmatprep.mubr.f32.mxu0 0.0
        %v3448 = vand.u32 %v875, 4294901760
        %3449 = vmatmul.mubr.f32.gmra.mxu0 %v3448
        %v3450 = vpop.f32.mrf.mxu0
        %v3451 = vadd.f32 %v2994, %v3450
        %v3452 = vpop.f32.mrf.mxu0
        %3453 = vmatprep.mubr.f32.mxu0 0.0
        %v3454 = vand.u32 %v876, 4294901760
        %3455 = vmatmul.mubr.f32.gmra.mxu0 %v3454
        %v3456 = vpop.f32.mrf.mxu0
        %v3457 = vadd.f32 %v3004, %v3456
        %v3458 = vpop.f32.mrf.mxu0
        %3459 = vmatprep.mubr.f32.mxu0 0.0
        %v3460 = vand.u32 %v877, 4294901760
        %3461 = vmatmul.mubr.f32.gmra.mxu0 %v3460
        %v3462 = vpop.f32.mrf.mxu0
        %v3463 = vadd.f32 %v3014, %v3462
        %v3464 = vpop.f32.mrf.mxu0
        %3465 = vmatprep.mubr.f32.mxu0 0.0
        %v3466 = vand.u32 %v878, 4294901760
        %3467 = vmatmul.mubr.f32.gmra.mxu0 %v3466
        %v3468 = vpop.f32.mrf.mxu0
        %v3469 = vadd.f32 %v3024, %v3468
        %v3470 = vpop.f32.mrf.mxu0
        %3471 = vmatprep.mubr.f32.mxu0 0.0
        %v3472 = vand.u32 %v879, 4294901760
        %3473 = vmatmul.mubr.f32.gmra.mxu0 %v3472
        %v3474 = vpop.f32.mrf.mxu0
        %v3475 = vadd.f32 %v3034, %v3474
        %v3476 = vpop.f32.mrf.mxu0
        %3477 = vmatprep.mubr.f32.mxu0 0.0
        %v3478 = vand.u32 %v880, 4294901760
        %3479 = vmatmul.mubr.f32.gmra.mxu0 %v3478
        %v3480 = vpop.f32.mrf.mxu0
        %v3481 = vadd.f32 %v3044, %v3480
        %v3482 = vpop.f32.mrf.mxu0
        %3483 = vmatprep.mubr.f32.mxu0 0.0
        %v3484 = vand.u32 %v881, 4294901760
        %3485 = vmatmul.mubr.f32.gmra.mxu0 %v3484
        %v3486 = vpop.f32.mrf.mxu0
        %v3487 = vadd.f32 %v3054, %v3486
        %v3488 = vpop.f32.mrf.mxu0
        %3489 = vmatprep.mubr.f32.mxu0 0.0
        %v3490 = vand.u32 %v882, 4294901760
        %3491 = vmatmul.mubr.f32.gmra.mxu0 %v3490
        %v3492 = vpop.f32.mrf.mxu0
        %v3493 = vadd.f32 %v3064, %v3492
        %v3494 = vpop.f32.mrf.mxu0
        %3495 = vmatprep.mubr.f32.mxu0 0.0
        %v3496 = vand.u32 %v883, 4294901760
        %3497 = vmatmul.mubr.f32.gmra.mxu0 %v3496
        %v3498 = vpop.f32.mrf.mxu0
        %v3499 = vadd.f32 %v3074, %v3498
        %v3500 = vpop.f32.mrf.mxu0
        %3501 = vmatprep.mubr.f32.mxu0 0.0
        %v3502 = vand.u32 %v884, 4294901760
        %3503 = vmatmul.mubr.f32.gmra.mxu0 %v3502
        %v3504 = vpop.f32.mrf.mxu0
        %v3505 = vadd.f32 %v3084, %v3504
        %v3506 = vpop.f32.mrf.mxu0
        %3507 = vmatprep.mubr.f32.mxu0 0.0
        %v3508 = vand.u32 %v885, 4294901760
        %3509 = vmatmul.mubr.f32.gmra.mxu0 %v3508
        %v3510 = vpop.f32.mrf.mxu0
        %v3511 = vadd.f32 %v3094, %v3510
        %v3512 = vpop.f32.mrf.mxu0
        %3513 = vmatprep.mubr.f32.mxu0 0.0
        %v3514 = vand.u32 %v886, 4294901760
        %3515 = vmatmul.mubr.f32.gmra.mxu0 %v3514
        %v3516 = vpop.f32.mrf.mxu0
        %v3517 = vadd.f32 %v3104, %v3516
        %v3518 = vpop.f32.mrf.mxu0
        %3519 = vmatprep.mubr.f32.mxu0 0.0
        %v3520 = vand.u32 %v887, 4294901760
        %3521 = vmatmul.mubr.f32.gmra.mxu0 %v3520
        %v3522 = vpop.f32.mrf.mxu0
        %v3523 = vadd.f32 %v3114, %v3522
        %v3524 = vpop.f32.mrf.mxu0
        %3525 = vmatprep.mubr.f32.mxu0 0.0
        %v3526 = vand.u32 %v888, 4294901760
        %3527 = vmatmul.mubr.f32.gmra.mxu0 %v3526
        %v3528 = vpop.f32.mrf.mxu0
        %v3529 = vadd.f32 %v3124, %v3528
        %v3530 = vpop.f32.mrf.mxu0
        %3531 = vmatprep.mubr.f32.mxu0 0.0
        %v3532 = vand.u32 %v889, 4294901760
        %3533 = vmatmul.mubr.f32.gmra.mxu0 %v3532
        %v3534 = vpop.f32.mrf.mxu0
        %v3535 = vadd.f32 %v3134, %v3534
        %v3536 = vpop.f32.mrf.mxu0
        %3537 = vmatprep.mubr.f32.mxu0 0.0
        %v3538 = vand.u32 %v890, 4294901760
        %3539 = vmatmul.mubr.f32.gmra.mxu0 %v3538
        %v3540 = vpop.f32.mrf.mxu0
        %v3541 = vadd.f32 %v3144, %v3540
        %v3542 = vpop.f32.mrf.mxu0
        %3543 = vmatprep.mubr.f32.mxu0 0.0
        %v3544 = vand.u32 %v891, 4294901760
        %3545 = vmatmul.mubr.f32.gmra.mxu0 %v3544
        %v3546 = vpop.f32.mrf.mxu0
        %v3547 = vadd.f32 %v3154, %v3546
        %v3548 = vpop.f32.mrf.mxu0
        %3549 = vmatprep.mubr.f32.mxu0 0.0
        %v3550 = vand.u32 %v892, 4294901760
        %3551 = vmatmul.mubr.f32.gmra.mxu0 %v3550
        %v3552 = vpop.f32.mrf.mxu0
        %v3553 = vadd.f32 %v3164, %v3552
        %v3554 = vpop.f32.mrf.mxu0
        %3555 = vmatprep.mubr.f32.mxu0 0.0
        %v3556 = vand.u32 %v893, 4294901760
        %3557 = vmatmul.mubr.f32.gmra.mxu0 %v3556
        %v3558 = vpop.f32.mrf.mxu0
        %v3559 = vadd.f32 %v3174, %v3558
        %v3560 = vpop.f32.mrf.mxu0
        %3561 = vmatprep.mubr.f32.mxu0 0.0
        %v3562 = vand.u32 %v894, 4294901760
        %3563 = vmatmul.mubr.f32.gmra.mxu0 %v3562
        %v3564 = vpop.f32.mrf.mxu0
        %v3565 = vadd.f32 %v3184, %v3564
        %v3566 = vpop.f32.mrf.mxu0
        %3567 = vmatprep.mubr.f32.mxu0 0.0
        %v3568 = vand.u32 %v895, 4294901760
        %3569 = vmatmul.mubr.f32.gmra.mxu0 %v3568
        %v3570 = vpop.f32.mrf.mxu0
        %v3571 = vadd.f32 %v3194, %v3570
        %v3572 = vpop.f32.mrf.mxu0
        %3573 = vmatprep.mubr.f32.mxu0 0.0
        %v3574 = vand.u32 %v896, 4294901760
        %3575 = vmatmul.mubr.f32.gmra.mxu0 %v3574
        %v3576 = vpop.f32.mrf.mxu0
        %v3577 = vadd.f32 %v3204, %v3576
        %v3578 = vpop.f32.mrf.mxu0
        %3579 = vmatprep.mubr.f32.mxu0 0.0
        %v3580 = vand.u32 %v897, 4294901760
        %3581 = vmatmul.mubr.f32.gmra.mxu0 %v3580
        %v3582 = vpop.f32.mrf.mxu0
        %v3583 = vadd.f32 %v3214, %v3582
        %v3584 = vpop.f32.mrf.mxu0
        %3585 = vmatprep.mubr.f32.mxu0 0.0
        %v3586 = vand.u32 %v898, 4294901760
        %3587 = vmatmul.mubr.f32.gmra.mxu0 %v3586
        %v3588 = vpop.f32.mrf.mxu0
        %v3589 = vadd.f32 %v3224, %v3588
        %v3590 = vpop.f32.mrf.mxu0
        %3591 = vmatprep.mubr.f32.mxu0 0.0
        %v3592 = vand.u32 %v899, 4294901760
        %3593 = vmatmul.mubr.f32.gmra.mxu0 %v3592
        %v3594 = vpop.f32.mrf.mxu0
        %v3595 = vadd.f32 %v3234, %v3594
        %v3596 = vpop.f32.mrf.mxu0
        %3597 = vmatprep.mubr.f32.mxu0 0.0
        %v3598 = vand.u32 %v900, 4294901760
        %3599 = vmatmul.mubr.f32.gmra.mxu0 %v3598
        %v3600 = vpop.f32.mrf.mxu0
        %v3601 = vadd.f32 %v3244, %v3600
        %v3602 = vpop.f32.mrf.mxu0
        %3603 = vmatprep.mubr.f32.mxu0 0.0
        %v3604 = vand.u32 %v901, 4294901760
        %3605 = vmatmul.mubr.f32.gmra.mxu0 %v3604
        %v3606 = vpop.f32.mrf.mxu0
        %v3607 = vadd.f32 %v3254, %v3606
        %v3608 = vpop.f32.mrf.mxu0
        %3609 = vmatprep.mubr.f32.mxu0 0.0
        %v3610 = vand.u32 %v902, 4294901760
        %3611 = vmatmul.mubr.f32.gmra.mxu0 %v3610
        %v3612 = vpop.f32.mrf.mxu0
        %v3613 = vadd.f32 %v3264, %v3612
        %v3614 = vpop.f32.mrf.mxu0
        %3615 = vmatprep.mubr.f32.mxu0 0.0
        %v3616 = vand.u32 %v903, 4294901760
        %3617 = vmatmul.mubr.f32.gmra.mxu0 %v3616
        %v3618 = vpop.f32.mrf.mxu0
        %v3619 = vadd.f32 %v3274, %v3618
        %v3620 = vpop.f32.mrf.mxu0
        %3621 = vmatprep.mubr.f32.mxu0 0.0
        %v3622 = vand.u32 %v904, 4294901760
        %3623 = vmatmul.mubr.f32.gmra.mxu0 %v3622
        %v3624 = vpop.f32.mrf.mxu0
        %v3625 = vadd.f32 %v3284, %v3624
        %v3626 = vpop.f32.mrf.mxu0
        %3627 = vmatprep.mubr.f32.mxu0 0.0
        %v3628 = vand.u32 %v905, 4294901760
        %3629 = vmatmul.mubr.f32.gmra.mxu0 %v3628
        %v3630 = vpop.f32.mrf.mxu0
        %v3631 = vadd.f32 %v3294, %v3630
        %v3632 = vpop.f32.mrf.mxu0
        %3633 = vdwg.mxu0
        %3634 = vmatprep.subr.mxu0 0.0
        %v3635 = vand.u32 %v921, 4294901760
        %v3636 = vsub.f32 %v921, %v3635
        %3637 = vmatpush1.msra.mxu0 %v3636
        %3638 = vmatprep.subr.mxu0 0.0
        %v3639 = vand.u32 %v920, 4294901760
        %v3640 = vsub.f32 %v920, %v3639
        %3641 = vmatpush1.msra.mxu0 %v3640
        %3642 = vmatprep.subr.mxu0 0.0
        %v3643 = vand.u32 %v919, 4294901760
        %v3644 = vsub.f32 %v919, %v3643
        %3645 = vmatpush1.msra.mxu0 %v3644
        %3646 = vmatprep.subr.mxu0 0.0
        %v3647 = vand.u32 %v918, 4294901760
        %v3648 = vsub.f32 %v918, %v3647
        %3649 = vmatpush1.msra.mxu0 %v3648
        %3650 = vmatprep.subr.mxu0 0.0
        %v3651 = vand.u32 %v917, 4294901760
        %v3652 = vsub.f32 %v917, %v3651
        %3653 = vmatpush1.msra.mxu0 %v3652
        %3654 = vmatprep.subr.mxu0 0.0
        %v3655 = vand.u32 %v916, 4294901760
        %v3656 = vsub.f32 %v916, %v3655
        %3657 = vmatpush1.msra.mxu0 %v3656
        %3658 = vmatprep.subr.mxu0 0.0
        %v3659 = vand.u32 %v915, 4294901760
        %v3660 = vsub.f32 %v915, %v3659
        %3661 = vmatpush1.msra.mxu0 %v3660
        %3662 = vmatprep.subr.mxu0 0.0
        %v3663 = vand.u32 %v914, 4294901760
        %v3664 = vsub.f32 %v914, %v3663
        %3665 = vmatpush1.msra.mxu0 %v3664
        %3666 = vmatprep.subr.mxu0 0.0
        %v3667 = vand.u32 %v913, 4294901760
        %v3668 = vsub.f32 %v913, %v3667
        %3669 = vmatpush1.msra.mxu0 %v3668
        %3670 = vmatprep.subr.mxu0 0.0
        %v3671 = vand.u32 %v912, 4294901760
        %v3672 = vsub.f32 %v912, %v3671
        %3673 = vmatpush1.msra.mxu0 %v3672
        %3674 = vmatprep.subr.mxu0 0.0
        %v3675 = vand.u32 %v911, 4294901760
        %v3676 = vsub.f32 %v911, %v3675
        %3677 = vmatpush1.msra.mxu0 %v3676
        %3678 = vmatprep.subr.mxu0 0.0
        %v3679 = vand.u32 %v910, 4294901760
        %v3680 = vsub.f32 %v910, %v3679
        %3681 = vmatpush1.msra.mxu0 %v3680
        %3682 = vmatprep.subr.mxu0 0.0
        %v3683 = vand.u32 %v909, 4294901760
        %v3684 = vsub.f32 %v909, %v3683
        %3685 = vmatpush1.msra.mxu0 %v3684
        %3686 = vmatprep.subr.mxu0 0.0
        %v3687 = vand.u32 %v908, 4294901760
        %v3688 = vsub.f32 %v908, %v3687
        %3689 = vmatpush1.msra.mxu0 %v3688
        %3690 = vmatprep.subr.mxu0 0.0
        %v3691 = vand.u32 %v907, 4294901760
        %v3692 = vsub.f32 %v907, %v3691
        %3693 = vmatpush1.msra.mxu0 %v3692
        %3694 = vmatprep.subr.mxu0 0.0
        %v3695 = vand.u32 %v906, 4294901760
        %v3696 = vsub.f32 %v906, %v3695
        %3697 = vmatpush1.msra.mxu0 %v3696
        %3698 = vmatprep.subr.mxu0 0.0
        %3699 = vmatpush2.msra.mxu0 0.0
        %3700 = vmatprep.subr.mxu0 0.0
        %3701 = vmatpush2.msra.mxu0 0.0
        %3702 = vmatprep.subr.mxu0 0.0
        %3703 = vmatpush2.msra.mxu0 0.0
        %3704 = vmatprep.subr.mxu0 0.0
        %3705 = vmatpush2.msra.mxu0 0.0
        %3706 = vmatprep.subr.mxu0 0.0
        %3707 = vmatpush2.msra.mxu0 0.0
        %3708 = vmatprep.subr.mxu0 0.0
        %3709 = vmatpush2.msra.mxu0 0.0
        %3710 = vmatprep.subr.mxu0 0.0
        %3711 = vmatpush2.msra.mxu0 0.0
        %3712 = vmatprep.subr.mxu0 0.0
        %3713 = vmatpush2.msra.mxu0 0.0
        %3714 = vmatprep.subr.mxu0 0.0
        %3715 = vmatpush2.msra.mxu0 0.0
        %3716 = vmatprep.subr.mxu0 0.0
        %3717 = vmatpush2.msra.mxu0 0.0
        %3718 = vmatprep.subr.mxu0 0.0
        %3719 = vmatpush2.msra.mxu0 0.0
        %3720 = vmatprep.subr.mxu0 0.0
        %3721 = vmatpush2.msra.mxu0 0.0
        %3722 = vmatprep.subr.mxu0 0.0
        %3723 = vmatpush2.msra.mxu0 0.0
        %3724 = vmatprep.subr.mxu0 0.0
        %3725 = vmatpush2.msra.mxu0 0.0
        %3726 = vmatprep.subr.mxu0 0.0
        %3727 = vmatpush2.msra.mxu0 0.0
        %3728 = vmatprep.subr.mxu0 0.0
        %3729 = vmatpush2.msra.mxu0 0.0
        %3730 = vmatprep.mubr.f32.mxu0 0.0
        %v3731 = vand.u32 %v874, 4294901760
        %v3732 = vsub.f32 %v874, %v3731
        %3733 = vmatmul.mubr.f32.gmra.mxu0 %v3732
        %v3734 = vpop.f32.mrf.mxu0
        %v3735 = vadd.f32 %v3445, %v3734
        %v3736 = vpop.f32.mrf.mxu0
        %3737 = vmatprep.mubr.f32.mxu0 0.0
        %v3738 = vand.u32 %v875, 4294901760
        %v3739 = vsub.f32 %v875, %v3738
        %3740 = vmatmul.mubr.f32.gmra.mxu0 %v3739
        %v3741 = vpop.f32.mrf.mxu0
        %v3742 = vadd.f32 %v3451, %v3741
        %v3743 = vpop.f32.mrf.mxu0
        %3744 = vmatprep.mubr.f32.mxu0 0.0
        %v3745 = vand.u32 %v876, 4294901760
        %v3746 = vsub.f32 %v876, %v3745
        %3747 = vmatmul.mubr.f32.gmra.mxu0 %v3746
        %v3748 = vpop.f32.mrf.mxu0
        %v3749 = vadd.f32 %v3457, %v3748
        %v3750 = vpop.f32.mrf.mxu0
        %3751 = vmatprep.mubr.f32.mxu0 0.0
        %v3752 = vand.u32 %v877, 4294901760
        %v3753 = vsub.f32 %v877, %v3752
        %3754 = vmatmul.mubr.f32.gmra.mxu0 %v3753
        %v3755 = vpop.f32.mrf.mxu0
        %v3756 = vadd.f32 %v3463, %v3755
        %v3757 = vpop.f32.mrf.mxu0
        %3758 = vmatprep.mubr.f32.mxu0 0.0
        %v3759 = vand.u32 %v878, 4294901760
        %v3760 = vsub.f32 %v878, %v3759
        %3761 = vmatmul.mubr.f32.gmra.mxu0 %v3760
        %v3762 = vpop.f32.mrf.mxu0
        %v3763 = vadd.f32 %v3469, %v3762
        %v3764 = vpop.f32.mrf.mxu0
        %3765 = vmatprep.mubr.f32.mxu0 0.0
        %v3766 = vand.u32 %v879, 4294901760
        %v3767 = vsub.f32 %v879, %v3766
        %3768 = vmatmul.mubr.f32.gmra.mxu0 %v3767
        %v3769 = vpop.f32.mrf.mxu0
        %v3770 = vadd.f32 %v3475, %v3769
        %v3771 = vpop.f32.mrf.mxu0
        %3772 = vmatprep.mubr.f32.mxu0 0.0
        %v3773 = vand.u32 %v880, 4294901760
        %v3774 = vsub.f32 %v880, %v3773
        %3775 = vmatmul.mubr.f32.gmra.mxu0 %v3774
        %v3776 = vpop.f32.mrf.mxu0
        %v3777 = vadd.f32 %v3481, %v3776
        %v3778 = vpop.f32.mrf.mxu0
        %3779 = vmatprep.mubr.f32.mxu0 0.0
        %v3780 = vand.u32 %v881, 4294901760
        %v3781 = vsub.f32 %v881, %v3780
        %3782 = vmatmul.mubr.f32.gmra.mxu0 %v3781
        %v3783 = vpop.f32.mrf.mxu0
        %v3784 = vadd.f32 %v3487, %v3783
        %v3785 = vpop.f32.mrf.mxu0
        %3786 = vmatprep.mubr.f32.mxu0 0.0
        %v3787 = vand.u32 %v882, 4294901760
        %v3788 = vsub.f32 %v882, %v3787
        %3789 = vmatmul.mubr.f32.gmra.mxu0 %v3788
        %v3790 = vpop.f32.mrf.mxu0
        %v3791 = vadd.f32 %v3493, %v3790
        %v3792 = vpop.f32.mrf.mxu0
        %3793 = vmatprep.mubr.f32.mxu0 0.0
        %v3794 = vand.u32 %v883, 4294901760
        %v3795 = vsub.f32 %v883, %v3794
        %3796 = vmatmul.mubr.f32.gmra.mxu0 %v3795
        %v3797 = vpop.f32.mrf.mxu0
        %v3798 = vadd.f32 %v3499, %v3797
        %v3799 = vpop.f32.mrf.mxu0
        %3800 = vmatprep.mubr.f32.mxu0 0.0
        %v3801 = vand.u32 %v884, 4294901760
        %v3802 = vsub.f32 %v884, %v3801
        %3803 = vmatmul.mubr.f32.gmra.mxu0 %v3802
        %v3804 = vpop.f32.mrf.mxu0
        %v3805 = vadd.f32 %v3505, %v3804
        %v3806 = vpop.f32.mrf.mxu0
        %3807 = vmatprep.mubr.f32.mxu0 0.0
        %v3808 = vand.u32 %v885, 4294901760
        %v3809 = vsub.f32 %v885, %v3808
        %3810 = vmatmul.mubr.f32.gmra.mxu0 %v3809
        %v3811 = vpop.f32.mrf.mxu0
        %v3812 = vadd.f32 %v3511, %v3811
        %v3813 = vpop.f32.mrf.mxu0
        %3814 = vmatprep.mubr.f32.mxu0 0.0
        %v3815 = vand.u32 %v886, 4294901760
        %v3816 = vsub.f32 %v886, %v3815
        %3817 = vmatmul.mubr.f32.gmra.mxu0 %v3816
        %v3818 = vpop.f32.mrf.mxu0
        %v3819 = vadd.f32 %v3517, %v3818
        %v3820 = vpop.f32.mrf.mxu0
        %3821 = vmatprep.mubr.f32.mxu0 0.0
        %v3822 = vand.u32 %v887, 4294901760
        %v3823 = vsub.f32 %v887, %v3822
        %3824 = vmatmul.mubr.f32.gmra.mxu0 %v3823
        %v3825 = vpop.f32.mrf.mxu0
        %v3826 = vadd.f32 %v3523, %v3825
        %v3827 = vpop.f32.mrf.mxu0
        %3828 = vmatprep.mubr.f32.mxu0 0.0
        %v3829 = vand.u32 %v888, 4294901760
        %v3830 = vsub.f32 %v888, %v3829
        %3831 = vmatmul.mubr.f32.gmra.mxu0 %v3830
        %v3832 = vpop.f32.mrf.mxu0
        %v3833 = vadd.f32 %v3529, %v3832
        %v3834 = vpop.f32.mrf.mxu0
        %3835 = vmatprep.mubr.f32.mxu0 0.0
        %v3836 = vand.u32 %v889, 4294901760
        %v3837 = vsub.f32 %v889, %v3836
        %3838 = vmatmul.mubr.f32.gmra.mxu0 %v3837
        %v3839 = vpop.f32.mrf.mxu0
        %v3840 = vadd.f32 %v3535, %v3839
        %v3841 = vpop.f32.mrf.mxu0
        %3842 = vmatprep.mubr.f32.mxu0 0.0
        %v3843 = vand.u32 %v890, 4294901760
        %v3844 = vsub.f32 %v890, %v3843
        %3845 = vmatmul.mubr.f32.gmra.mxu0 %v3844
        %v3846 = vpop.f32.mrf.mxu0
        %v3847 = vadd.f32 %v3541, %v3846
        %v3848 = vpop.f32.mrf.mxu0
        %3849 = vmatprep.mubr.f32.mxu0 0.0
        %v3850 = vand.u32 %v891, 4294901760
        %v3851 = vsub.f32 %v891, %v3850
        %3852 = vmatmul.mubr.f32.gmra.mxu0 %v3851
        %v3853 = vpop.f32.mrf.mxu0
        %v3854 = vadd.f32 %v3547, %v3853
        %v3855 = vpop.f32.mrf.mxu0
        %3856 = vmatprep.mubr.f32.mxu0 0.0
        %v3857 = vand.u32 %v892, 4294901760
        %v3858 = vsub.f32 %v892, %v3857
        %3859 = vmatmul.mubr.f32.gmra.mxu0 %v3858
        %v3860 = vpop.f32.mrf.mxu0
        %v3861 = vadd.f32 %v3553, %v3860
        %v3862 = vpop.f32.mrf.mxu0
        %3863 = vmatprep.mubr.f32.mxu0 0.0
        %v3864 = vand.u32 %v893, 4294901760
        %v3865 = vsub.f32 %v893, %v3864
        %3866 = vmatmul.mubr.f32.gmra.mxu0 %v3865
        %v3867 = vpop.f32.mrf.mxu0
        %v3868 = vadd.f32 %v3559, %v3867
        %v3869 = vpop.f32.mrf.mxu0
        %3870 = vmatprep.mubr.f32.mxu0 0.0
        %v3871 = vand.u32 %v894, 4294901760
        %v3872 = vsub.f32 %v894, %v3871
        %3873 = vmatmul.mubr.f32.gmra.mxu0 %v3872
        %v3874 = vpop.f32.mrf.mxu0
        %v3875 = vadd.f32 %v3565, %v3874
        %v3876 = vpop.f32.mrf.mxu0
        %3877 = vmatprep.mubr.f32.mxu0 0.0
        %v3878 = vand.u32 %v895, 4294901760
        %v3879 = vsub.f32 %v895, %v3878
        %3880 = vmatmul.mubr.f32.gmra.mxu0 %v3879
        %v3881 = vpop.f32.mrf.mxu0
        %v3882 = vadd.f32 %v3571, %v3881
        %v3883 = vpop.f32.mrf.mxu0
        %3884 = vmatprep.mubr.f32.mxu0 0.0
        %v3885 = vand.u32 %v896, 4294901760
        %v3886 = vsub.f32 %v896, %v3885
        %3887 = vmatmul.mubr.f32.gmra.mxu0 %v3886
        %v3888 = vpop.f32.mrf.mxu0
        %v3889 = vadd.f32 %v3577, %v3888
        %v3890 = vpop.f32.mrf.mxu0
        %3891 = vmatprep.mubr.f32.mxu0 0.0
        %v3892 = vand.u32 %v897, 4294901760
        %v3893 = vsub.f32 %v897, %v3892
        %3894 = vmatmul.mubr.f32.gmra.mxu0 %v3893
        %v3895 = vpop.f32.mrf.mxu0
        %v3896 = vadd.f32 %v3583, %v3895
        %v3897 = vpop.f32.mrf.mxu0
        %3898 = vmatprep.mubr.f32.mxu0 0.0
        %v3899 = vand.u32 %v898, 4294901760
        %v3900 = vsub.f32 %v898, %v3899
        %3901 = vmatmul.mubr.f32.gmra.mxu0 %v3900
        %v3902 = vpop.f32.mrf.mxu0
        %v3903 = vadd.f32 %v3589, %v3902
        %v3904 = vpop.f32.mrf.mxu0
        %3905 = vmatprep.mubr.f32.mxu0 0.0
        %v3906 = vand.u32 %v899, 4294901760
        %v3907 = vsub.f32 %v899, %v3906
        %3908 = vmatmul.mubr.f32.gmra.mxu0 %v3907
        %v3909 = vpop.f32.mrf.mxu0
        %v3910 = vadd.f32 %v3595, %v3909
        %v3911 = vpop.f32.mrf.mxu0
        %3912 = vmatprep.mubr.f32.mxu0 0.0
        %v3913 = vand.u32 %v900, 4294901760
        %v3914 = vsub.f32 %v900, %v3913
        %3915 = vmatmul.mubr.f32.gmra.mxu0 %v3914
        %v3916 = vpop.f32.mrf.mxu0
        %v3917 = vadd.f32 %v3601, %v3916
        %v3918 = vpop.f32.mrf.mxu0
        %3919 = vmatprep.mubr.f32.mxu0 0.0
        %v3920 = vand.u32 %v901, 4294901760
        %v3921 = vsub.f32 %v901, %v3920
        %3922 = vmatmul.mubr.f32.gmra.mxu0 %v3921
        %v3923 = vpop.f32.mrf.mxu0
        %v3924 = vadd.f32 %v3607, %v3923
        %v3925 = vpop.f32.mrf.mxu0
        %3926 = vmatprep.mubr.f32.mxu0 0.0
        %v3927 = vand.u32 %v902, 4294901760
        %v3928 = vsub.f32 %v902, %v3927
        %3929 = vmatmul.mubr.f32.gmra.mxu0 %v3928
        %v3930 = vpop.f32.mrf.mxu0
        %v3931 = vadd.f32 %v3613, %v3930
        %v3932 = vpop.f32.mrf.mxu0
        %3933 = vmatprep.mubr.f32.mxu0 0.0
        %v3934 = vand.u32 %v903, 4294901760
        %v3935 = vsub.f32 %v903, %v3934
        %3936 = vmatmul.mubr.f32.gmra.mxu0 %v3935
        %v3937 = vpop.f32.mrf.mxu0
        %v3938 = vadd.f32 %v3619, %v3937
        %v3939 = vpop.f32.mrf.mxu0
        %3940 = vmatprep.mubr.f32.mxu0 0.0
        %v3941 = vand.u32 %v904, 4294901760
        %v3942 = vsub.f32 %v904, %v3941
        %3943 = vmatmul.mubr.f32.gmra.mxu0 %v3942
        %v3944 = vpop.f32.mrf.mxu0
        %v3945 = vadd.f32 %v3625, %v3944
        %v3946 = vpop.f32.mrf.mxu0
        %3947 = vmatprep.mubr.f32.mxu0 0.0
        %v3948 = vand.u32 %v905, 4294901760
        %v3949 = vsub.f32 %v905, %v3948
        %3950 = vmatmul.mubr.f32.gmra.mxu0 %v3949
        %v3951 = vpop.f32.mrf.mxu0
        %v3952 = vadd.f32 %v3631, %v3951
        %v3953 = vpop.f32.mrf.mxu0
        %3954 = vdwg.mxu0
        %3955 = vmatprep.subr.mxu0 0.0
        %v3956 = vand.u32 %v921, 4294901760
        %3957 = vmatpush1.msra.mxu0 %v3956
        %3958 = vmatprep.subr.mxu0 0.0
        %v3959 = vand.u32 %v920, 4294901760
        %3960 = vmatpush1.msra.mxu0 %v3959
        %3961 = vmatprep.subr.mxu0 0.0
        %v3962 = vand.u32 %v919, 4294901760
        %3963 = vmatpush1.msra.mxu0 %v3962
        %3964 = vmatprep.subr.mxu0 0.0
        %v3965 = vand.u32 %v918, 4294901760
        %3966 = vmatpush1.msra.mxu0 %v3965
        %3967 = vmatprep.subr.mxu0 0.0
        %v3968 = vand.u32 %v917, 4294901760
        %3969 = vmatpush1.msra.mxu0 %v3968
        %3970 = vmatprep.subr.mxu0 0.0
        %v3971 = vand.u32 %v916, 4294901760
        %3972 = vmatpush1.msra.mxu0 %v3971
        %3973 = vmatprep.subr.mxu0 0.0
        %v3974 = vand.u32 %v915, 4294901760
        %3975 = vmatpush1.msra.mxu0 %v3974
        %3976 = vmatprep.subr.mxu0 0.0
        %v3977 = vand.u32 %v914, 4294901760
        %3978 = vmatpush1.msra.mxu0 %v3977
        %3979 = vmatprep.subr.mxu0 0.0
        %v3980 = vand.u32 %v913, 4294901760
        %3981 = vmatpush1.msra.mxu0 %v3980
        %3982 = vmatprep.subr.mxu0 0.0
        %v3983 = vand.u32 %v912, 4294901760
        %3984 = vmatpush1.msra.mxu0 %v3983
        %3985 = vmatprep.subr.mxu0 0.0
        %v3986 = vand.u32 %v911, 4294901760
        %3987 = vmatpush1.msra.mxu0 %v3986
        %3988 = vmatprep.subr.mxu0 0.0
        %v3989 = vand.u32 %v910, 4294901760
        %3990 = vmatpush1.msra.mxu0 %v3989
        %3991 = vmatprep.subr.mxu0 0.0
        %v3992 = vand.u32 %v909, 4294901760
        %3993 = vmatpush1.msra.mxu0 %v3992
        %3994 = vmatprep.subr.mxu0 0.0
        %v3995 = vand.u32 %v908, 4294901760
        %3996 = vmatpush1.msra.mxu0 %v3995
        %3997 = vmatprep.subr.mxu0 0.0
        %v3998 = vand.u32 %v907, 4294901760
        %3999 = vmatpush1.msra.mxu0 %v3998
        %4000 = vmatprep.subr.mxu0 0.0
        %v4001 = vand.u32 %v906, 4294901760
        %4002 = vmatpush1.msra.mxu0 %v4001
        %4003 = vmatprep.subr.mxu0 0.0
        %4004 = vmatpush2.msra.mxu0 0.0
        %4005 = vmatprep.subr.mxu0 0.0
        %4006 = vmatpush2.msra.mxu0 0.0
        %4007 = vmatprep.subr.mxu0 0.0
        %4008 = vmatpush2.msra.mxu0 0.0
        %4009 = vmatprep.subr.mxu0 0.0
        %4010 = vmatpush2.msra.mxu0 0.0
        %4011 = vmatprep.subr.mxu0 0.0
        %4012 = vmatpush2.msra.mxu0 0.0
        %4013 = vmatprep.subr.mxu0 0.0
        %4014 = vmatpush2.msra.mxu0 0.0
        %4015 = vmatprep.subr.mxu0 0.0
        %4016 = vmatpush2.msra.mxu0 0.0
        %4017 = vmatprep.subr.mxu0 0.0
        %4018 = vmatpush2.msra.mxu0 0.0
        %4019 = vmatprep.subr.mxu0 0.0
        %4020 = vmatpush2.msra.mxu0 0.0
        %4021 = vmatprep.subr.mxu0 0.0
        %4022 = vmatpush2.msra.mxu0 0.0
        %4023 = vmatprep.subr.mxu0 0.0
        %4024 = vmatpush2.msra.mxu0 0.0
        %4025 = vmatprep.subr.mxu0 0.0
        %4026 = vmatpush2.msra.mxu0 0.0
        %4027 = vmatprep.subr.mxu0 0.0
        %4028 = vmatpush2.msra.mxu0 0.0
        %4029 = vmatprep.subr.mxu0 0.0
        %4030 = vmatpush2.msra.mxu0 0.0
        %4031 = vmatprep.subr.mxu0 0.0
        %4032 = vmatpush2.msra.mxu0 0.0
        %4033 = vmatprep.subr.mxu0 0.0
        %4034 = vmatpush2.msra.mxu0 0.0
        %4035 = vmatprep.mubr.f32.mxu0 0.0
        %v4036 = vand.u32 %v874, 4294901760
        %v4037 = vsub.f32 %v874, %v4036
        %v4038 = vand.u32 %v4037, 4294901760
        %4039 = vmatmul.mubr.f32.gmra.mxu0 %v4038
        %v4040 = vpop.f32.mrf.mxu0
        %v4041 = vadd.f32 %v3735, %v4040
        %v4042 = vpop.f32.mrf.mxu0
        %4043 = vmatprep.mubr.f32.mxu0 0.0
        %v4044 = vand.u32 %v875, 4294901760
        %v4045 = vsub.f32 %v875, %v4044
        %v4046 = vand.u32 %v4045, 4294901760
        %4047 = vmatmul.mubr.f32.gmra.mxu0 %v4046
        %v4048 = vpop.f32.mrf.mxu0
        %v4049 = vadd.f32 %v3742, %v4048
        %v4050 = vpop.f32.mrf.mxu0
        %4051 = vmatprep.mubr.f32.mxu0 0.0
        %v4052 = vand.u32 %v876, 4294901760
        %v4053 = vsub.f32 %v876, %v4052
        %v4054 = vand.u32 %v4053, 4294901760
        %4055 = vmatmul.mubr.f32.gmra.mxu0 %v4054
        %v4056 = vpop.f32.mrf.mxu0
        %v4057 = vadd.f32 %v3749, %v4056
        %v4058 = vpop.f32.mrf.mxu0
        %4059 = vmatprep.mubr.f32.mxu0 0.0
        %v4060 = vand.u32 %v877, 4294901760
        %v4061 = vsub.f32 %v877, %v4060
        %v4062 = vand.u32 %v4061, 4294901760
        %4063 = vmatmul.mubr.f32.gmra.mxu0 %v4062
        %v4064 = vpop.f32.mrf.mxu0
        %v4065 = vadd.f32 %v3756, %v4064
        %v4066 = vpop.f32.mrf.mxu0
        %4067 = vmatprep.mubr.f32.mxu0 0.0
        %v4068 = vand.u32 %v878, 4294901760
        %v4069 = vsub.f32 %v878, %v4068
        %v4070 = vand.u32 %v4069, 4294901760
        %4071 = vmatmul.mubr.f32.gmra.mxu0 %v4070
        %v4072 = vpop.f32.mrf.mxu0
        %v4073 = vadd.f32 %v3763, %v4072
        %v4074 = vpop.f32.mrf.mxu0
        %4075 = vmatprep.mubr.f32.mxu0 0.0
        %v4076 = vand.u32 %v879, 4294901760
        %v4077 = vsub.f32 %v879, %v4076
        %v4078 = vand.u32 %v4077, 4294901760
        %4079 = vmatmul.mubr.f32.gmra.mxu0 %v4078
        %v4080 = vpop.f32.mrf.mxu0
        %v4081 = vadd.f32 %v3770, %v4080
        %v4082 = vpop.f32.mrf.mxu0
        %4083 = vmatprep.mubr.f32.mxu0 0.0
        %v4084 = vand.u32 %v880, 4294901760
        %v4085 = vsub.f32 %v880, %v4084
        %v4086 = vand.u32 %v4085, 4294901760
        %4087 = vmatmul.mubr.f32.gmra.mxu0 %v4086
        %v4088 = vpop.f32.mrf.mxu0
        %v4089 = vadd.f32 %v3777, %v4088
        %v4090 = vpop.f32.mrf.mxu0
        %4091 = vmatprep.mubr.f32.mxu0 0.0
        %v4092 = vand.u32 %v881, 4294901760
        %v4093 = vsub.f32 %v881, %v4092
        %v4094 = vand.u32 %v4093, 4294901760
        %4095 = vmatmul.mubr.f32.gmra.mxu0 %v4094
        %v4096 = vpop.f32.mrf.mxu0
        %v4097 = vadd.f32 %v3784, %v4096
        %v4098 = vpop.f32.mrf.mxu0
        %4099 = vmatprep.mubr.f32.mxu0 0.0
        %v4100 = vand.u32 %v882, 4294901760
        %v4101 = vsub.f32 %v882, %v4100
        %v4102 = vand.u32 %v4101, 4294901760
        %4103 = vmatmul.mubr.f32.gmra.mxu0 %v4102
        %v4104 = vpop.f32.mrf.mxu0
        %v4105 = vadd.f32 %v3791, %v4104
        %v4106 = vpop.f32.mrf.mxu0
        %4107 = vmatprep.mubr.f32.mxu0 0.0
        %v4108 = vand.u32 %v883, 4294901760
        %v4109 = vsub.f32 %v883, %v4108
        %v4110 = vand.u32 %v4109, 4294901760
        %4111 = vmatmul.mubr.f32.gmra.mxu0 %v4110
        %v4112 = vpop.f32.mrf.mxu0
        %v4113 = vadd.f32 %v3798, %v4112
        %v4114 = vpop.f32.mrf.mxu0
        %4115 = vmatprep.mubr.f32.mxu0 0.0
        %v4116 = vand.u32 %v884, 4294901760
        %v4117 = vsub.f32 %v884, %v4116
        %v4118 = vand.u32 %v4117, 4294901760
        %4119 = vmatmul.mubr.f32.gmra.mxu0 %v4118
        %v4120 = vpop.f32.mrf.mxu0
        %v4121 = vadd.f32 %v3805, %v4120
        %v4122 = vpop.f32.mrf.mxu0
        %4123 = vmatprep.mubr.f32.mxu0 0.0
        %v4124 = vand.u32 %v885, 4294901760
        %v4125 = vsub.f32 %v885, %v4124
        %v4126 = vand.u32 %v4125, 4294901760
        %4127 = vmatmul.mubr.f32.gmra.mxu0 %v4126
        %v4128 = vpop.f32.mrf.mxu0
        %v4129 = vadd.f32 %v3812, %v4128
        %v4130 = vpop.f32.mrf.mxu0
        %4131 = vmatprep.mubr.f32.mxu0 0.0
        %v4132 = vand.u32 %v886, 4294901760
        %v4133 = vsub.f32 %v886, %v4132
        %v4134 = vand.u32 %v4133, 4294901760
        %4135 = vmatmul.mubr.f32.gmra.mxu0 %v4134
        %v4136 = vpop.f32.mrf.mxu0
        %v4137 = vadd.f32 %v3819, %v4136
        %v4138 = vpop.f32.mrf.mxu0
        %4139 = vmatprep.mubr.f32.mxu0 0.0
        %v4140 = vand.u32 %v887, 4294901760
        %v4141 = vsub.f32 %v887, %v4140
        %v4142 = vand.u32 %v4141, 4294901760
        %4143 = vmatmul.mubr.f32.gmra.mxu0 %v4142
        %v4144 = vpop.f32.mrf.mxu0
        %v4145 = vadd.f32 %v3826, %v4144
        %v4146 = vpop.f32.mrf.mxu0
        %4147 = vmatprep.mubr.f32.mxu0 0.0
        %v4148 = vand.u32 %v888, 4294901760
        %v4149 = vsub.f32 %v888, %v4148
        %v4150 = vand.u32 %v4149, 4294901760
        %4151 = vmatmul.mubr.f32.gmra.mxu0 %v4150
        %v4152 = vpop.f32.mrf.mxu0
        %v4153 = vadd.f32 %v3833, %v4152
        %v4154 = vpop.f32.mrf.mxu0
        %4155 = vmatprep.mubr.f32.mxu0 0.0
        %v4156 = vand.u32 %v889, 4294901760
        %v4157 = vsub.f32 %v889, %v4156
        %v4158 = vand.u32 %v4157, 4294901760
        %4159 = vmatmul.mubr.f32.gmra.mxu0 %v4158
        %v4160 = vpop.f32.mrf.mxu0
        %v4161 = vadd.f32 %v3840, %v4160
        %v4162 = vpop.f32.mrf.mxu0
        %4163 = vmatprep.mubr.f32.mxu0 0.0
        %v4164 = vand.u32 %v890, 4294901760
        %v4165 = vsub.f32 %v890, %v4164
        %v4166 = vand.u32 %v4165, 4294901760
        %4167 = vmatmul.mubr.f32.gmra.mxu0 %v4166
        %v4168 = vpop.f32.mrf.mxu0
        %v4169 = vadd.f32 %v3847, %v4168
        %v4170 = vpop.f32.mrf.mxu0
        %4171 = vmatprep.mubr.f32.mxu0 0.0
        %v4172 = vand.u32 %v891, 4294901760
        %v4173 = vsub.f32 %v891, %v4172
        %v4174 = vand.u32 %v4173, 4294901760
        %4175 = vmatmul.mubr.f32.gmra.mxu0 %v4174
        %v4176 = vpop.f32.mrf.mxu0
        %v4177 = vadd.f32 %v3854, %v4176
        %v4178 = vpop.f32.mrf.mxu0
        %4179 = vmatprep.mubr.f32.mxu0 0.0
        %v4180 = vand.u32 %v892, 4294901760
        %v4181 = vsub.f32 %v892, %v4180
        %v4182 = vand.u32 %v4181, 4294901760
        %4183 = vmatmul.mubr.f32.gmra.mxu0 %v4182
        %v4184 = vpop.f32.mrf.mxu0
        %v4185 = vadd.f32 %v3861, %v4184
        %v4186 = vpop.f32.mrf.mxu0
        %4187 = vmatprep.mubr.f32.mxu0 0.0
        %v4188 = vand.u32 %v893, 4294901760
        %v4189 = vsub.f32 %v893, %v4188
        %v4190 = vand.u32 %v4189, 4294901760
        %4191 = vmatmul.mubr.f32.gmra.mxu0 %v4190
        %v4192 = vpop.f32.mrf.mxu0
        %v4193 = vadd.f32 %v3868, %v4192
        %v4194 = vpop.f32.mrf.mxu0
        %4195 = vmatprep.mubr.f32.mxu0 0.0
        %v4196 = vand.u32 %v894, 4294901760
        %v4197 = vsub.f32 %v894, %v4196
        %v4198 = vand.u32 %v4197, 4294901760
        %4199 = vmatmul.mubr.f32.gmra.mxu0 %v4198
        %v4200 = vpop.f32.mrf.mxu0
        %v4201 = vadd.f32 %v3875, %v4200
        %v4202 = vpop.f32.mrf.mxu0
        %4203 = vmatprep.mubr.f32.mxu0 0.0
        %v4204 = vand.u32 %v895, 4294901760
        %v4205 = vsub.f32 %v895, %v4204
        %v4206 = vand.u32 %v4205, 4294901760
        %4207 = vmatmul.mubr.f32.gmra.mxu0 %v4206
        %v4208 = vpop.f32.mrf.mxu0
        %v4209 = vadd.f32 %v3882, %v4208
        %v4210 = vpop.f32.mrf.mxu0
        %4211 = vmatprep.mubr.f32.mxu0 0.0
        %v4212 = vand.u32 %v896, 4294901760
        %v4213 = vsub.f32 %v896, %v4212
        %v4214 = vand.u32 %v4213, 4294901760
        %4215 = vmatmul.mubr.f32.gmra.mxu0 %v4214
        %v4216 = vpop.f32.mrf.mxu0
        %v4217 = vadd.f32 %v3889, %v4216
        %v4218 = vpop.f32.mrf.mxu0
        %4219 = vmatprep.mubr.f32.mxu0 0.0
        %v4220 = vand.u32 %v897, 4294901760
        %v4221 = vsub.f32 %v897, %v4220
        %v4222 = vand.u32 %v4221, 4294901760
        %4223 = vmatmul.mubr.f32.gmra.mxu0 %v4222
        %v4224 = vpop.f32.mrf.mxu0
        %v4225 = vadd.f32 %v3896, %v4224
        %v4226 = vpop.f32.mrf.mxu0
        %4227 = vmatprep.mubr.f32.mxu0 0.0
        %v4228 = vand.u32 %v898, 4294901760
        %v4229 = vsub.f32 %v898, %v4228
        %v4230 = vand.u32 %v4229, 4294901760
        %4231 = vmatmul.mubr.f32.gmra.mxu0 %v4230
        %v4232 = vpop.f32.mrf.mxu0
        %v4233 = vadd.f32 %v3903, %v4232
        %v4234 = vpop.f32.mrf.mxu0
        %4235 = vmatprep.mubr.f32.mxu0 0.0
        %v4236 = vand.u32 %v899, 4294901760
        %v4237 = vsub.f32 %v899, %v4236
        %v4238 = vand.u32 %v4237, 4294901760
        %4239 = vmatmul.mubr.f32.gmra.mxu0 %v4238
        %v4240 = vpop.f32.mrf.mxu0
        %v4241 = vadd.f32 %v3910, %v4240
        %v4242 = vpop.f32.mrf.mxu0
        %4243 = vmatprep.mubr.f32.mxu0 0.0
        %v4244 = vand.u32 %v900, 4294901760
        %v4245 = vsub.f32 %v900, %v4244
        %v4246 = vand.u32 %v4245, 4294901760
        %4247 = vmatmul.mubr.f32.gmra.mxu0 %v4246
        %v4248 = vpop.f32.mrf.mxu0
        %v4249 = vadd.f32 %v3917, %v4248
        %v4250 = vpop.f32.mrf.mxu0
        %4251 = vmatprep.mubr.f32.mxu0 0.0
        %v4252 = vand.u32 %v901, 4294901760
        %v4253 = vsub.f32 %v901, %v4252
        %v4254 = vand.u32 %v4253, 4294901760
        %4255 = vmatmul.mubr.f32.gmra.mxu0 %v4254
        %v4256 = vpop.f32.mrf.mxu0
        %v4257 = vadd.f32 %v3924, %v4256
        %v4258 = vpop.f32.mrf.mxu0
        %4259 = vmatprep.mubr.f32.mxu0 0.0
        %v4260 = vand.u32 %v902, 4294901760
        %v4261 = vsub.f32 %v902, %v4260
        %v4262 = vand.u32 %v4261, 4294901760
        %4263 = vmatmul.mubr.f32.gmra.mxu0 %v4262
        %v4264 = vpop.f32.mrf.mxu0
        %v4265 = vadd.f32 %v3931, %v4264
        %v4266 = vpop.f32.mrf.mxu0
        %4267 = vmatprep.mubr.f32.mxu0 0.0
        %v4268 = vand.u32 %v903, 4294901760
        %v4269 = vsub.f32 %v903, %v4268
        %v4270 = vand.u32 %v4269, 4294901760
        %4271 = vmatmul.mubr.f32.gmra.mxu0 %v4270
        %v4272 = vpop.f32.mrf.mxu0
        %v4273 = vadd.f32 %v3938, %v4272
        %v4274 = vpop.f32.mrf.mxu0
        %4275 = vmatprep.mubr.f32.mxu0 0.0
        %v4276 = vand.u32 %v904, 4294901760
        %v4277 = vsub.f32 %v904, %v4276
        %v4278 = vand.u32 %v4277, 4294901760
        %4279 = vmatmul.mubr.f32.gmra.mxu0 %v4278
        %v4280 = vpop.f32.mrf.mxu0
        %v4281 = vadd.f32 %v3945, %v4280
        %v4282 = vpop.f32.mrf.mxu0
        %4283 = vmatprep.mubr.f32.mxu0 0.0
        %v4284 = vand.u32 %v905, 4294901760
        %v4285 = vsub.f32 %v905, %v4284
        %v4286 = vand.u32 %v4285, 4294901760
        %4287 = vmatmul.mubr.f32.gmra.mxu0 %v4286
        %v4288 = vpop.f32.mrf.mxu0
        %v4289 = vadd.f32 %v3952, %v4288
        %v4290 = vpop.f32.mrf.mxu0
        %4291 = vdwg.mxu0
        %4292 = vmatprep.subr.mxu0 0.0
        %v4293 = vand.u32 %v921, 4294901760
        %v4294 = vsub.f32 %v921, %v4293
        %v4295 = vand.u32 %v4294, 4294901760
        %4296 = vmatpush1.msra.mxu0 %v4295
        %4297 = vmatprep.subr.mxu0 0.0
        %v4298 = vand.u32 %v920, 4294901760
        %v4299 = vsub.f32 %v920, %v4298
        %v4300 = vand.u32 %v4299, 4294901760
        %4301 = vmatpush1.msra.mxu0 %v4300
        %4302 = vmatprep.subr.mxu0 0.0
        %v4303 = vand.u32 %v919, 4294901760
        %v4304 = vsub.f32 %v919, %v4303
        %v4305 = vand.u32 %v4304, 4294901760
        %4306 = vmatpush1.msra.mxu0 %v4305
        %4307 = vmatprep.subr.mxu0 0.0
        %v4308 = vand.u32 %v918, 4294901760
        %v4309 = vsub.f32 %v918, %v4308
        %v4310 = vand.u32 %v4309, 4294901760
        %4311 = vmatpush1.msra.mxu0 %v4310
        %4312 = vmatprep.subr.mxu0 0.0
        %v4313 = vand.u32 %v917, 4294901760
        %v4314 = vsub.f32 %v917, %v4313
        %v4315 = vand.u32 %v4314, 4294901760
        %4316 = vmatpush1.msra.mxu0 %v4315
        %4317 = vmatprep.subr.mxu0 0.0
        %v4318 = vand.u32 %v916, 4294901760
        %v4319 = vsub.f32 %v916, %v4318
        %v4320 = vand.u32 %v4319, 4294901760
        %4321 = vmatpush1.msra.mxu0 %v4320
        %4322 = vmatprep.subr.mxu0 0.0
        %v4323 = vand.u32 %v915, 4294901760
        %v4324 = vsub.f32 %v915, %v4323
        %v4325 = vand.u32 %v4324, 4294901760
        %4326 = vmatpush1.msra.mxu0 %v4325
        %4327 = vmatprep.subr.mxu0 0.0
        %v4328 = vand.u32 %v914, 4294901760
        %v4329 = vsub.f32 %v914, %v4328
        %v4330 = vand.u32 %v4329, 4294901760
        %4331 = vmatpush1.msra.mxu0 %v4330
        %4332 = vmatprep.subr.mxu0 0.0
        %v4333 = vand.u32 %v913, 4294901760
        %v4334 = vsub.f32 %v913, %v4333
        %v4335 = vand.u32 %v4334, 4294901760
        %4336 = vmatpush1.msra.mxu0 %v4335
        %4337 = vmatprep.subr.mxu0 0.0
        %v4338 = vand.u32 %v912, 4294901760
        %v4339 = vsub.f32 %v912, %v4338
        %v4340 = vand.u32 %v4339, 4294901760
        %4341 = vmatpush1.msra.mxu0 %v4340
        %4342 = vmatprep.subr.mxu0 0.0
        %v4343 = vand.u32 %v911, 4294901760
        %v4344 = vsub.f32 %v911, %v4343
        %v4345 = vand.u32 %v4344, 4294901760
        %4346 = vmatpush1.msra.mxu0 %v4345
        %4347 = vmatprep.subr.mxu0 0.0
        %v4348 = vand.u32 %v910, 4294901760
        %v4349 = vsub.f32 %v910, %v4348
        %v4350 = vand.u32 %v4349, 4294901760
        %4351 = vmatpush1.msra.mxu0 %v4350
        %4352 = vmatprep.subr.mxu0 0.0
        %v4353 = vand.u32 %v909, 4294901760
        %v4354 = vsub.f32 %v909, %v4353
        %v4355 = vand.u32 %v4354, 4294901760
        %4356 = vmatpush1.msra.mxu0 %v4355
        %4357 = vmatprep.subr.mxu0 0.0
        %v4358 = vand.u32 %v908, 4294901760
        %v4359 = vsub.f32 %v908, %v4358
        %v4360 = vand.u32 %v4359, 4294901760
        %4361 = vmatpush1.msra.mxu0 %v4360
        %4362 = vmatprep.subr.mxu0 0.0
        %v4363 = vand.u32 %v907, 4294901760
        %v4364 = vsub.f32 %v907, %v4363
        %v4365 = vand.u32 %v4364, 4294901760
        %4366 = vmatpush1.msra.mxu0 %v4365
        %4367 = vmatprep.subr.mxu0 0.0
        %v4368 = vand.u32 %v906, 4294901760
        %v4369 = vsub.f32 %v906, %v4368
        %v4370 = vand.u32 %v4369, 4294901760
        %4371 = vmatpush1.msra.mxu0 %v4370
        %4372 = vmatprep.subr.mxu0 0.0
        %4373 = vmatpush2.msra.mxu0 0.0
        %4374 = vmatprep.subr.mxu0 0.0
        %4375 = vmatpush2.msra.mxu0 0.0
        %4376 = vmatprep.subr.mxu0 0.0
        %4377 = vmatpush2.msra.mxu0 0.0
        %4378 = vmatprep.subr.mxu0 0.0
        %4379 = vmatpush2.msra.mxu0 0.0
        %4380 = vmatprep.subr.mxu0 0.0
        %4381 = vmatpush2.msra.mxu0 0.0
        %4382 = vmatprep.subr.mxu0 0.0
        %4383 = vmatpush2.msra.mxu0 0.0
        %4384 = vmatprep.subr.mxu0 0.0
        %4385 = vmatpush2.msra.mxu0 0.0
        %4386 = vmatprep.subr.mxu0 0.0
        %4387 = vmatpush2.msra.mxu0 0.0
        %4388 = vmatprep.subr.mxu0 0.0
        %4389 = vmatpush2.msra.mxu0 0.0
        %4390 = vmatprep.subr.mxu0 0.0
        %4391 = vmatpush2.msra.mxu0 0.0
        %4392 = vmatprep.subr.mxu0 0.0
        %4393 = vmatpush2.msra.mxu0 0.0
        %4394 = vmatprep.subr.mxu0 0.0
        %4395 = vmatpush2.msra.mxu0 0.0
        %4396 = vmatprep.subr.mxu0 0.0
        %4397 = vmatpush2.msra.mxu0 0.0
        %4398 = vmatprep.subr.mxu0 0.0
        %4399 = vmatpush2.msra.mxu0 0.0
        %4400 = vmatprep.subr.mxu0 0.0
        %4401 = vmatpush2.msra.mxu0 0.0
        %4402 = vmatprep.subr.mxu0 0.0
        %4403 = vmatpush2.msra.mxu0 0.0
        %4404 = vmatprep.mubr.f32.mxu0 0.0
        %v4405 = vand.u32 %v874, 4294901760
        %4406 = vmatmul.mubr.f32.gmra.mxu0 %v4405
        %v4407 = vpop.f32.mrf.mxu0
        %v4408 = vadd.f32 %v4041, %v4407
        %v4409 = vpop.f32.mrf.mxu0
        %4410 = vmatprep.mubr.f32.mxu0 0.0
        %v4411 = vand.u32 %v875, 4294901760
        %4412 = vmatmul.mubr.f32.gmra.mxu0 %v4411
        %v4413 = vpop.f32.mrf.mxu0
        %v4414 = vadd.f32 %v4049, %v4413
        %v4415 = vpop.f32.mrf.mxu0
        %4416 = vmatprep.mubr.f32.mxu0 0.0
        %v4417 = vand.u32 %v876, 4294901760
        %4418 = vmatmul.mubr.f32.gmra.mxu0 %v4417
        %v4419 = vpop.f32.mrf.mxu0
        %v4420 = vadd.f32 %v4057, %v4419
        %v4421 = vpop.f32.mrf.mxu0
        %4422 = vmatprep.mubr.f32.mxu0 0.0
        %v4423 = vand.u32 %v877, 4294901760
        %4424 = vmatmul.mubr.f32.gmra.mxu0 %v4423
        %v4425 = vpop.f32.mrf.mxu0
        %v4426 = vadd.f32 %v4065, %v4425
        %v4427 = vpop.f32.mrf.mxu0
        %4428 = vmatprep.mubr.f32.mxu0 0.0
        %v4429 = vand.u32 %v878, 4294901760
        %4430 = vmatmul.mubr.f32.gmra.mxu0 %v4429
        %v4431 = vpop.f32.mrf.mxu0
        %v4432 = vadd.f32 %v4073, %v4431
        %v4433 = vpop.f32.mrf.mxu0
        %4434 = vmatprep.mubr.f32.mxu0 0.0
        %v4435 = vand.u32 %v879, 4294901760
        %4436 = vmatmul.mubr.f32.gmra.mxu0 %v4435
        %v4437 = vpop.f32.mrf.mxu0
        %v4438 = vadd.f32 %v4081, %v4437
        %v4439 = vpop.f32.mrf.mxu0
        %4440 = vmatprep.mubr.f32.mxu0 0.0
        %v4441 = vand.u32 %v880, 4294901760
        %4442 = vmatmul.mubr.f32.gmra.mxu0 %v4441
        %v4443 = vpop.f32.mrf.mxu0
        %v4444 = vadd.f32 %v4089, %v4443
        %v4445 = vpop.f32.mrf.mxu0
        %4446 = vmatprep.mubr.f32.mxu0 0.0
        %v4447 = vand.u32 %v881, 4294901760
        %4448 = vmatmul.mubr.f32.gmra.mxu0 %v4447
        %v4449 = vpop.f32.mrf.mxu0
        %v4450 = vadd.f32 %v4097, %v4449
        %v4451 = vpop.f32.mrf.mxu0
        %4452 = vmatprep.mubr.f32.mxu0 0.0
        %v4453 = vand.u32 %v882, 4294901760
        %4454 = vmatmul.mubr.f32.gmra.mxu0 %v4453
        %v4455 = vpop.f32.mrf.mxu0
        %v4456 = vadd.f32 %v4105, %v4455
        %v4457 = vpop.f32.mrf.mxu0
        %4458 = vmatprep.mubr.f32.mxu0 0.0
        %v4459 = vand.u32 %v883, 4294901760
        %4460 = vmatmul.mubr.f32.gmra.mxu0 %v4459
        %v4461 = vpop.f32.mrf.mxu0
        %v4462 = vadd.f32 %v4113, %v4461
        %v4463 = vpop.f32.mrf.mxu0
        %4464 = vmatprep.mubr.f32.mxu0 0.0
        %v4465 = vand.u32 %v884, 4294901760
        %4466 = vmatmul.mubr.f32.gmra.mxu0 %v4465
        %v4467 = vpop.f32.mrf.mxu0
        %v4468 = vadd.f32 %v4121, %v4467
        %v4469 = vpop.f32.mrf.mxu0
        %4470 = vmatprep.mubr.f32.mxu0 0.0
        %v4471 = vand.u32 %v885, 4294901760
        %4472 = vmatmul.mubr.f32.gmra.mxu0 %v4471
        %v4473 = vpop.f32.mrf.mxu0
        %v4474 = vadd.f32 %v4129, %v4473
        %v4475 = vpop.f32.mrf.mxu0
        %4476 = vmatprep.mubr.f32.mxu0 0.0
        %v4477 = vand.u32 %v886, 4294901760
        %4478 = vmatmul.mubr.f32.gmra.mxu0 %v4477
        %v4479 = vpop.f32.mrf.mxu0
        %v4480 = vadd.f32 %v4137, %v4479
        %v4481 = vpop.f32.mrf.mxu0
        %4482 = vmatprep.mubr.f32.mxu0 0.0
        %v4483 = vand.u32 %v887, 4294901760
        %4484 = vmatmul.mubr.f32.gmra.mxu0 %v4483
        %v4485 = vpop.f32.mrf.mxu0
        %v4486 = vadd.f32 %v4145, %v4485
        %v4487 = vpop.f32.mrf.mxu0
        %4488 = vmatprep.mubr.f32.mxu0 0.0
        %v4489 = vand.u32 %v888, 4294901760
        %4490 = vmatmul.mubr.f32.gmra.mxu0 %v4489
        %v4491 = vpop.f32.mrf.mxu0
        %v4492 = vadd.f32 %v4153, %v4491
        %v4493 = vpop.f32.mrf.mxu0
        %4494 = vmatprep.mubr.f32.mxu0 0.0
        %v4495 = vand.u32 %v889, 4294901760
        %4496 = vmatmul.mubr.f32.gmra.mxu0 %v4495
        %v4497 = vpop.f32.mrf.mxu0
        %v4498 = vadd.f32 %v4161, %v4497
        %v4499 = vpop.f32.mrf.mxu0
        %4500 = vmatprep.mubr.f32.mxu0 0.0
        %v4501 = vand.u32 %v890, 4294901760
        %4502 = vmatmul.mubr.f32.gmra.mxu0 %v4501
        %v4503 = vpop.f32.mrf.mxu0
        %v4504 = vadd.f32 %v4169, %v4503
        %v4505 = vpop.f32.mrf.mxu0
        %4506 = vmatprep.mubr.f32.mxu0 0.0
        %v4507 = vand.u32 %v891, 4294901760
        %4508 = vmatmul.mubr.f32.gmra.mxu0 %v4507
        %v4509 = vpop.f32.mrf.mxu0
        %v4510 = vadd.f32 %v4177, %v4509
        %v4511 = vpop.f32.mrf.mxu0
        %4512 = vmatprep.mubr.f32.mxu0 0.0
        %v4513 = vand.u32 %v892, 4294901760
        %4514 = vmatmul.mubr.f32.gmra.mxu0 %v4513
        %v4515 = vpop.f32.mrf.mxu0
        %v4516 = vadd.f32 %v4185, %v4515
        %v4517 = vpop.f32.mrf.mxu0
        %4518 = vmatprep.mubr.f32.mxu0 0.0
        %v4519 = vand.u32 %v893, 4294901760
        %4520 = vmatmul.mubr.f32.gmra.mxu0 %v4519
        %v4521 = vpop.f32.mrf.mxu0
        %v4522 = vadd.f32 %v4193, %v4521
        %v4523 = vpop.f32.mrf.mxu0
        %4524 = vmatprep.mubr.f32.mxu0 0.0
        %v4525 = vand.u32 %v894, 4294901760
        %4526 = vmatmul.mubr.f32.gmra.mxu0 %v4525
        %v4527 = vpop.f32.mrf.mxu0
        %v4528 = vadd.f32 %v4201, %v4527
        %v4529 = vpop.f32.mrf.mxu0
        %4530 = vmatprep.mubr.f32.mxu0 0.0
        %v4531 = vand.u32 %v895, 4294901760
        %4532 = vmatmul.mubr.f32.gmra.mxu0 %v4531
        %v4533 = vpop.f32.mrf.mxu0
        %v4534 = vadd.f32 %v4209, %v4533
        %v4535 = vpop.f32.mrf.mxu0
        %4536 = vmatprep.mubr.f32.mxu0 0.0
        %v4537 = vand.u32 %v896, 4294901760
        %4538 = vmatmul.mubr.f32.gmra.mxu0 %v4537
        %v4539 = vpop.f32.mrf.mxu0
        %v4540 = vadd.f32 %v4217, %v4539
        %v4541 = vpop.f32.mrf.mxu0
        %4542 = vmatprep.mubr.f32.mxu0 0.0
        %v4543 = vand.u32 %v897, 4294901760
        %4544 = vmatmul.mubr.f32.gmra.mxu0 %v4543
        %v4545 = vpop.f32.mrf.mxu0
        %v4546 = vadd.f32 %v4225, %v4545
        %v4547 = vpop.f32.mrf.mxu0
        %4548 = vmatprep.mubr.f32.mxu0 0.0
        %v4549 = vand.u32 %v898, 4294901760
        %4550 = vmatmul.mubr.f32.gmra.mxu0 %v4549
        %v4551 = vpop.f32.mrf.mxu0
        %v4552 = vadd.f32 %v4233, %v4551
        %v4553 = vpop.f32.mrf.mxu0
        %4554 = vmatprep.mubr.f32.mxu0 0.0
        %v4555 = vand.u32 %v899, 4294901760
        %4556 = vmatmul.mubr.f32.gmra.mxu0 %v4555
        %v4557 = vpop.f32.mrf.mxu0
        %v4558 = vadd.f32 %v4241, %v4557
        %v4559 = vpop.f32.mrf.mxu0
        %4560 = vmatprep.mubr.f32.mxu0 0.0
        %v4561 = vand.u32 %v900, 4294901760
        %4562 = vmatmul.mubr.f32.gmra.mxu0 %v4561
        %v4563 = vpop.f32.mrf.mxu0
        %v4564 = vadd.f32 %v4249, %v4563
        %v4565 = vpop.f32.mrf.mxu0
        %4566 = vmatprep.mubr.f32.mxu0 0.0
        %v4567 = vand.u32 %v901, 4294901760
        %4568 = vmatmul.mubr.f32.gmra.mxu0 %v4567
        %v4569 = vpop.f32.mrf.mxu0
        %v4570 = vadd.f32 %v4257, %v4569
        %v4571 = vpop.f32.mrf.mxu0
        %4572 = vmatprep.mubr.f32.mxu0 0.0
        %v4573 = vand.u32 %v902, 4294901760
        %4574 = vmatmul.mubr.f32.gmra.mxu0 %v4573
        %v4575 = vpop.f32.mrf.mxu0
        %v4576 = vadd.f32 %v4265, %v4575
        %v4577 = vpop.f32.mrf.mxu0
        %4578 = vmatprep.mubr.f32.mxu0 0.0
        %v4579 = vand.u32 %v903, 4294901760
        %4580 = vmatmul.mubr.f32.gmra.mxu0 %v4579
        %v4581 = vpop.f32.mrf.mxu0
        %v4582 = vadd.f32 %v4273, %v4581
        %v4583 = vpop.f32.mrf.mxu0
        %4584 = vmatprep.mubr.f32.mxu0 0.0
        %v4585 = vand.u32 %v904, 4294901760
        %4586 = vmatmul.mubr.f32.gmra.mxu0 %v4585
        %v4587 = vpop.f32.mrf.mxu0
        %v4588 = vadd.f32 %v4281, %v4587
        %v4589 = vpop.f32.mrf.mxu0
        %4590 = vmatprep.mubr.f32.mxu0 0.0
        %v4591 = vand.u32 %v905, 4294901760
        %4592 = vmatmul.mubr.f32.gmra.mxu0 %v4591
        %v4593 = vpop.f32.mrf.mxu0
        %v4594 = vadd.f32 %v4289, %v4593
        %v4595 = vpop.f32.mrf.mxu0
        %4596 = vdwg.mxu0
        %4597 = vmatprep.subr.mxu0 0.0
        %v4598 = vand.u32 %v921, 4294901760
        %4599 = vmatpush1.msra.mxu0 %v4598
        %4600 = vmatprep.subr.mxu0 0.0
        %v4601 = vand.u32 %v920, 4294901760
        %4602 = vmatpush1.msra.mxu0 %v4601
        %4603 = vmatprep.subr.mxu0 0.0
        %v4604 = vand.u32 %v919, 4294901760
        %4605 = vmatpush1.msra.mxu0 %v4604
        %4606 = vmatprep.subr.mxu0 0.0
        %v4607 = vand.u32 %v918, 4294901760
        %4608 = vmatpush1.msra.mxu0 %v4607
        %4609 = vmatprep.subr.mxu0 0.0
        %v4610 = vand.u32 %v917, 4294901760
        %4611 = vmatpush1.msra.mxu0 %v4610
        %4612 = vmatprep.subr.mxu0 0.0
        %v4613 = vand.u32 %v916, 4294901760
        %4614 = vmatpush1.msra.mxu0 %v4613
        %4615 = vmatprep.subr.mxu0 0.0
        %v4616 = vand.u32 %v915, 4294901760
        %4617 = vmatpush1.msra.mxu0 %v4616
        %4618 = vmatprep.subr.mxu0 0.0
        %v4619 = vand.u32 %v914, 4294901760
        %4620 = vmatpush1.msra.mxu0 %v4619
        %4621 = vmatprep.subr.mxu0 0.0
        %v4622 = vand.u32 %v913, 4294901760
        %4623 = vmatpush1.msra.mxu0 %v4622
        %4624 = vmatprep.subr.mxu0 0.0
        %v4625 = vand.u32 %v912, 4294901760
        %4626 = vmatpush1.msra.mxu0 %v4625
        %4627 = vmatprep.subr.mxu0 0.0
        %v4628 = vand.u32 %v911, 4294901760
        %4629 = vmatpush1.msra.mxu0 %v4628
        %4630 = vmatprep.subr.mxu0 0.0
        %v4631 = vand.u32 %v910, 4294901760
        %4632 = vmatpush1.msra.mxu0 %v4631
        %4633 = vmatprep.subr.mxu0 0.0
        %v4634 = vand.u32 %v909, 4294901760
        %4635 = vmatpush1.msra.mxu0 %v4634
        %4636 = vmatprep.subr.mxu0 0.0
        %v4637 = vand.u32 %v908, 4294901760
        %4638 = vmatpush1.msra.mxu0 %v4637
        %4639 = vmatprep.subr.mxu0 0.0
        %v4640 = vand.u32 %v907, 4294901760
        %4641 = vmatpush1.msra.mxu0 %v4640
        %4642 = vmatprep.subr.mxu0 0.0
        %v4643 = vand.u32 %v906, 4294901760
        %4644 = vmatpush1.msra.mxu0 %v4643
        %4645 = vmatprep.subr.mxu0 0.0
        %4646 = vmatpush2.msra.mxu0 0.0
        %4647 = vmatprep.subr.mxu0 0.0
        %4648 = vmatpush2.msra.mxu0 0.0
        %4649 = vmatprep.subr.mxu0 0.0
        %4650 = vmatpush2.msra.mxu0 0.0
        %4651 = vmatprep.subr.mxu0 0.0
        %4652 = vmatpush2.msra.mxu0 0.0
        %4653 = vmatprep.subr.mxu0 0.0
        %4654 = vmatpush2.msra.mxu0 0.0
        %4655 = vmatprep.subr.mxu0 0.0
        %4656 = vmatpush2.msra.mxu0 0.0
        %4657 = vmatprep.subr.mxu0 0.0
        %4658 = vmatpush2.msra.mxu0 0.0
        %4659 = vmatprep.subr.mxu0 0.0
        %4660 = vmatpush2.msra.mxu0 0.0
        %4661 = vmatprep.subr.mxu0 0.0
        %4662 = vmatpush2.msra.mxu0 0.0
        %4663 = vmatprep.subr.mxu0 0.0
        %4664 = vmatpush2.msra.mxu0 0.0
        %4665 = vmatprep.subr.mxu0 0.0
        %4666 = vmatpush2.msra.mxu0 0.0
        %4667 = vmatprep.subr.mxu0 0.0
        %4668 = vmatpush2.msra.mxu0 0.0
        %4669 = vmatprep.subr.mxu0 0.0
        %4670 = vmatpush2.msra.mxu0 0.0
        %4671 = vmatprep.subr.mxu0 0.0
        %4672 = vmatpush2.msra.mxu0 0.0
        %4673 = vmatprep.subr.mxu0 0.0
        %4674 = vmatpush2.msra.mxu0 0.0
        %4675 = vmatprep.subr.mxu0 0.0
        %4676 = vmatpush2.msra.mxu0 0.0
        %4677 = vmatprep.mubr.f32.mxu0 0.0
        %v4678 = vand.u32 %v874, 4294901760
        %4679 = vmatmul.mubr.f32.gmra.mxu0 %v4678
        %v4680 = vpop.f32.mrf.mxu0
        %v4681 = vadd.f32 %v4408, %v4680
        %v4682 = vpop.f32.mrf.mxu0
        %4683 = vmatprep.mubr.f32.mxu0 0.0
        %v4684 = vand.u32 %v875, 4294901760
        %4685 = vmatmul.mubr.f32.gmra.mxu0 %v4684
        %v4686 = vpop.f32.mrf.mxu0
        %v4687 = vadd.f32 %v4414, %v4686
        %v4688 = vpop.f32.mrf.mxu0
        %4689 = vmatprep.mubr.f32.mxu0 0.0
        %v4690 = vand.u32 %v876, 4294901760
        %4691 = vmatmul.mubr.f32.gmra.mxu0 %v4690
        %v4692 = vpop.f32.mrf.mxu0
        %v4693 = vadd.f32 %v4420, %v4692
        %v4694 = vpop.f32.mrf.mxu0
        %4695 = vmatprep.mubr.f32.mxu0 0.0
        %v4696 = vand.u32 %v877, 4294901760
        %4697 = vmatmul.mubr.f32.gmra.mxu0 %v4696
        %v4698 = vpop.f32.mrf.mxu0
        %v4699 = vadd.f32 %v4426, %v4698
        %v4700 = vpop.f32.mrf.mxu0
        %4701 = vmatprep.mubr.f32.mxu0 0.0
        %v4702 = vand.u32 %v878, 4294901760
        %4703 = vmatmul.mubr.f32.gmra.mxu0 %v4702
        %v4704 = vpop.f32.mrf.mxu0
        %v4705 = vadd.f32 %v4432, %v4704
        %v4706 = vpop.f32.mrf.mxu0
        %4707 = vmatprep.mubr.f32.mxu0 0.0
        %v4708 = vand.u32 %v879, 4294901760
        %4709 = vmatmul.mubr.f32.gmra.mxu0 %v4708
        %v4710 = vpop.f32.mrf.mxu0
        %v4711 = vadd.f32 %v4438, %v4710
        %v4712 = vpop.f32.mrf.mxu0
        %4713 = vmatprep.mubr.f32.mxu0 0.0
        %v4714 = vand.u32 %v880, 4294901760
        %4715 = vmatmul.mubr.f32.gmra.mxu0 %v4714
        %v4716 = vpop.f32.mrf.mxu0
        %v4717 = vadd.f32 %v4444, %v4716
        %v4718 = vpop.f32.mrf.mxu0
        %4719 = vmatprep.mubr.f32.mxu0 0.0
        %v4720 = vand.u32 %v881, 4294901760
        %4721 = vmatmul.mubr.f32.gmra.mxu0 %v4720
        %v4722 = vpop.f32.mrf.mxu0
        %v4723 = vadd.f32 %v4450, %v4722
        %v4724 = vpop.f32.mrf.mxu0
        %4725 = vmatprep.mubr.f32.mxu0 0.0
        %v4726 = vand.u32 %v882, 4294901760
        %4727 = vmatmul.mubr.f32.gmra.mxu0 %v4726
        %v4728 = vpop.f32.mrf.mxu0
        %v4729 = vadd.f32 %v4456, %v4728
        %v4730 = vpop.f32.mrf.mxu0
        %4731 = vmatprep.mubr.f32.mxu0 0.0
        %v4732 = vand.u32 %v883, 4294901760
        %4733 = vmatmul.mubr.f32.gmra.mxu0 %v4732
        %v4734 = vpop.f32.mrf.mxu0
        %v4735 = vadd.f32 %v4462, %v4734
        %v4736 = vpop.f32.mrf.mxu0
        %4737 = vmatprep.mubr.f32.mxu0 0.0
        %v4738 = vand.u32 %v884, 4294901760
        %4739 = vmatmul.mubr.f32.gmra.mxu0 %v4738
        %v4740 = vpop.f32.mrf.mxu0
        %v4741 = vadd.f32 %v4468, %v4740
        %v4742 = vpop.f32.mrf.mxu0
        %4743 = vmatprep.mubr.f32.mxu0 0.0
        %v4744 = vand.u32 %v885, 4294901760
        %4745 = vmatmul.mubr.f32.gmra.mxu0 %v4744
        %v4746 = vpop.f32.mrf.mxu0
        %v4747 = vadd.f32 %v4474, %v4746
        %v4748 = vpop.f32.mrf.mxu0
        %4749 = vmatprep.mubr.f32.mxu0 0.0
        %v4750 = vand.u32 %v886, 4294901760
        %4751 = vmatmul.mubr.f32.gmra.mxu0 %v4750
        %v4752 = vpop.f32.mrf.mxu0
        %v4753 = vadd.f32 %v4480, %v4752
        %v4754 = vpop.f32.mrf.mxu0
        %4755 = vmatprep.mubr.f32.mxu0 0.0
        %v4756 = vand.u32 %v887, 4294901760
        %4757 = vmatmul.mubr.f32.gmra.mxu0 %v4756
        %v4758 = vpop.f32.mrf.mxu0
        %v4759 = vadd.f32 %v4486, %v4758
        %v4760 = vpop.f32.mrf.mxu0
        %4761 = vmatprep.mubr.f32.mxu0 0.0
        %v4762 = vand.u32 %v888, 4294901760
        %4763 = vmatmul.mubr.f32.gmra.mxu0 %v4762
        %v4764 = vpop.f32.mrf.mxu0
        %v4765 = vadd.f32 %v4492, %v4764
        %v4766 = vpop.f32.mrf.mxu0
        %4767 = vmatprep.mubr.f32.mxu0 0.0
        %v4768 = vand.u32 %v889, 4294901760
        %4769 = vmatmul.mubr.f32.gmra.mxu0 %v4768
        %v4770 = vpop.f32.mrf.mxu0
        %v4771 = vadd.f32 %v4498, %v4770
        %v4772 = vpop.f32.mrf.mxu0
        %4773 = vmatprep.mubr.f32.mxu0 0.0
        %v4774 = vand.u32 %v890, 4294901760
        %4775 = vmatmul.mubr.f32.gmra.mxu0 %v4774
        %v4776 = vpop.f32.mrf.mxu0
        %v4777 = vadd.f32 %v4504, %v4776
        %v4778 = vpop.f32.mrf.mxu0
        %4779 = vmatprep.mubr.f32.mxu0 0.0
        %v4780 = vand.u32 %v891, 4294901760
        %4781 = vmatmul.mubr.f32.gmra.mxu0 %v4780
        %v4782 = vpop.f32.mrf.mxu0
        %v4783 = vadd.f32 %v4510, %v4782
        %v4784 = vpop.f32.mrf.mxu0
        %4785 = vmatprep.mubr.f32.mxu0 0.0
        %v4786 = vand.u32 %v892, 4294901760
        %4787 = vmatmul.mubr.f32.gmra.mxu0 %v4786
        %v4788 = vpop.f32.mrf.mxu0
        %v4789 = vadd.f32 %v4516, %v4788
        %v4790 = vpop.f32.mrf.mxu0
        %4791 = vmatprep.mubr.f32.mxu0 0.0
        %v4792 = vand.u32 %v893, 4294901760
        %4793 = vmatmul.mubr.f32.gmra.mxu0 %v4792
        %v4794 = vpop.f32.mrf.mxu0
        %v4795 = vadd.f32 %v4522, %v4794
        %v4796 = vpop.f32.mrf.mxu0
        %4797 = vmatprep.mubr.f32.mxu0 0.0
        %v4798 = vand.u32 %v894, 4294901760
        %4799 = vmatmul.mubr.f32.gmra.mxu0 %v4798
        %v4800 = vpop.f32.mrf.mxu0
        %v4801 = vadd.f32 %v4528, %v4800
        %v4802 = vpop.f32.mrf.mxu0
        %4803 = vmatprep.mubr.f32.mxu0 0.0
        %v4804 = vand.u32 %v895, 4294901760
        %4805 = vmatmul.mubr.f32.gmra.mxu0 %v4804
        %v4806 = vpop.f32.mrf.mxu0
        %v4807 = vadd.f32 %v4534, %v4806
        %v4808 = vpop.f32.mrf.mxu0
        %4809 = vmatprep.mubr.f32.mxu0 0.0
        %v4810 = vand.u32 %v896, 4294901760
        %4811 = vmatmul.mubr.f32.gmra.mxu0 %v4810
        %v4812 = vpop.f32.mrf.mxu0
        %v4813 = vadd.f32 %v4540, %v4812
        %v4814 = vpop.f32.mrf.mxu0
        %4815 = vmatprep.mubr.f32.mxu0 0.0
        %v4816 = vand.u32 %v897, 4294901760
        %4817 = vmatmul.mubr.f32.gmra.mxu0 %v4816
        %v4818 = vpop.f32.mrf.mxu0
        %v4819 = vadd.f32 %v4546, %v4818
        %v4820 = vpop.f32.mrf.mxu0
        %4821 = vmatprep.mubr.f32.mxu0 0.0
        %v4822 = vand.u32 %v898, 4294901760
        %4823 = vmatmul.mubr.f32.gmra.mxu0 %v4822
        %v4824 = vpop.f32.mrf.mxu0
        %v4825 = vadd.f32 %v4552, %v4824
        %v4826 = vpop.f32.mrf.mxu0
        %4827 = vmatprep.mubr.f32.mxu0 0.0
        %v4828 = vand.u32 %v899, 4294901760
        %4829 = vmatmul.mubr.f32.gmra.mxu0 %v4828
        %v4830 = vpop.f32.mrf.mxu0
        %v4831 = vadd.f32 %v4558, %v4830
        %v4832 = vpop.f32.mrf.mxu0
        %4833 = vmatprep.mubr.f32.mxu0 0.0
        %v4834 = vand.u32 %v900, 4294901760
        %4835 = vmatmul.mubr.f32.gmra.mxu0 %v4834
        %v4836 = vpop.f32.mrf.mxu0
        %v4837 = vadd.f32 %v4564, %v4836
        %v4838 = vpop.f32.mrf.mxu0
        %4839 = vmatprep.mubr.f32.mxu0 0.0
        %v4840 = vand.u32 %v901, 4294901760
        %4841 = vmatmul.mubr.f32.gmra.mxu0 %v4840
        %v4842 = vpop.f32.mrf.mxu0
        %v4843 = vadd.f32 %v4570, %v4842
        %v4844 = vpop.f32.mrf.mxu0
        %4845 = vmatprep.mubr.f32.mxu0 0.0
        %v4846 = vand.u32 %v902, 4294901760
        %4847 = vmatmul.mubr.f32.gmra.mxu0 %v4846
        %v4848 = vpop.f32.mrf.mxu0
        %v4849 = vadd.f32 %v4576, %v4848
        %v4850 = vpop.f32.mrf.mxu0
        %4851 = vmatprep.mubr.f32.mxu0 0.0
        %v4852 = vand.u32 %v903, 4294901760
        %4853 = vmatmul.mubr.f32.gmra.mxu0 %v4852
        %v4854 = vpop.f32.mrf.mxu0
        %v4855 = vadd.f32 %v4582, %v4854
        %v4856 = vpop.f32.mrf.mxu0
        %4857 = vmatprep.mubr.f32.mxu0 0.0
        %v4858 = vand.u32 %v904, 4294901760
        %4859 = vmatmul.mubr.f32.gmra.mxu0 %v4858
        %v4860 = vpop.f32.mrf.mxu0
        %v4861 = vadd.f32 %v4588, %v4860
        %v4862 = vpop.f32.mrf.mxu0
        %4863 = vmatprep.mubr.f32.mxu0 0.0
        %v4864 = vand.u32 %v905, 4294901760
        %4865 = vmatmul.mubr.f32.gmra.mxu0 %v4864
        %v4866 = vpop.f32.mrf.mxu0
        %v4867 = vadd.f32 %v4594, %v4866
        %v4868 = vpop.f32.mrf.mxu0
        %4869 = vdwg.mxu0
        %v4870 = vmul.f32 %v2707, %v2707
        %v4871 = vmul.f32 %v2713, %v2713
        %v4872 = vmul.f32 %v2719, %v2719
        %v4873 = vmul.f32 %v2725, %v2725
        %v4874 = vmul.f32 %v2731, %v2731
        %v4875 = vmul.f32 %v2737, %v2737
        %v4876 = vmul.f32 %v2743, %v2743
        %v4877 = vmul.f32 %v2749, %v2749
        %v4878 = vmul.f32 %v2755, %v2755
        %v4879 = vmul.f32 %v2761, %v2761
        %v4880 = vmul.f32 %v2767, %v2767
        %v4881 = vmul.f32 %v2773, %v2773
        %v4882 = vmul.f32 %v2779, %v2779
        %v4883 = vmul.f32 %v2785, %v2785
        %v4884 = vmul.f32 %v2791, %v2791
        %v4885 = vmul.f32 %v2797, %v2797
        %v4886 = vmul.f32 %v2803, %v2803
        %v4887 = vmul.f32 %v2809, %v2809
        %v4888 = vmul.f32 %v2815, %v2815
        %v4889 = vmul.f32 %v2821, %v2821
        %v4890 = vmul.f32 %v2827, %v2827
        %v4891 = vmul.f32 %v2833, %v2833
        %v4892 = vmul.f32 %v2839, %v2839
        %v4893 = vmul.f32 %v2845, %v2845
        %v4894 = vmul.f32 %v2851, %v2851
        %v4895 = vmul.f32 %v2857, %v2857
        %v4896 = vmul.f32 %v2863, %v2863
        %v4897 = vmul.f32 %v2869, %v2869
        %v4898 = vmul.f32 %v2875, %v2875
        %v4899 = vmul.f32 %v2881, %v2881
        %v4900 = vmul.f32 %v2887, %v2887
        %v4901 = vmul.f32 %v2893, %v2893
        %4902 = vadd.xlane.f32.xlu0 %v4870
        %v4903 = vpop.xlane.xlu0 %4902
        %4904 = vadd.xlane.f32.xlu0 %v4871
        %v4905 = vpop.xlane.xlu0 %4904
        %4906 = vadd.xlane.f32.xlu0 %v4872
        %v4907 = vpop.xlane.xlu0 %4906
        %4908 = vadd.xlane.f32.xlu0 %v4873
        %v4909 = vpop.xlane.xlu0 %4908
        %4910 = vadd.xlane.f32.xlu0 %v4874
        %v4911 = vpop.xlane.xlu0 %4910
        %4912 = vadd.xlane.f32.xlu0 %v4875
        %v4913 = vpop.xlane.xlu0 %4912
        %4914 = vadd.xlane.f32.xlu0 %v4876
        %v4915 = vpop.xlane.xlu0 %4914
        %4916 = vadd.xlane.f32.xlu0 %v4877
        %v4917 = vpop.xlane.xlu0 %4916
        %4918 = vadd.xlane.f32.xlu0 %v4878
        %v4919 = vpop.xlane.xlu0 %4918
        %4920 = vadd.xlane.f32.xlu0 %v4879
        %v4921 = vpop.xlane.xlu0 %4920
        %4922 = vadd.xlane.f32.xlu0 %v4880
        %v4923 = vpop.xlane.xlu0 %4922
        %4924 = vadd.xlane.f32.xlu0 %v4881
        %v4925 = vpop.xlane.xlu0 %4924
        %4926 = vadd.xlane.f32.xlu0 %v4882
        %v4927 = vpop.xlane.xlu0 %4926
        %4928 = vadd.xlane.f32.xlu0 %v4883
        %v4929 = vpop.xlane.xlu0 %4928
        %4930 = vadd.xlane.f32.xlu0 %v4884
        %v4931 = vpop.xlane.xlu0 %4930
        %4932 = vadd.xlane.f32.xlu0 %v4885
        %v4933 = vpop.xlane.xlu0 %4932
        %4934 = vadd.xlane.f32.xlu0 %v4886
        %v4935 = vpop.xlane.xlu0 %4934
        %4936 = vadd.xlane.f32.xlu0 %v4887
        %v4937 = vpop.xlane.xlu0 %4936
        %4938 = vadd.xlane.f32.xlu0 %v4888
        %v4939 = vpop.xlane.xlu0 %4938
        %4940 = vadd.xlane.f32.xlu0 %v4889
        %v4941 = vpop.xlane.xlu0 %4940
        %4942 = vadd.xlane.f32.xlu0 %v4890
        %v4943 = vpop.xlane.xlu0 %4942
        %4944 = vadd.xlane.f32.xlu0 %v4891
        %v4945 = vpop.xlane.xlu0 %4944
        %4946 = vadd.xlane.f32.xlu0 %v4892
        %v4947 = vpop.xlane.xlu0 %4946
        %4948 = vadd.xlane.f32.xlu0 %v4893
        %v4949 = vpop.xlane.xlu0 %4948
        %4950 = vadd.xlane.f32.xlu0 %v4894
        %v4951 = vpop.xlane.xlu0 %4950
        %4952 = vadd.xlane.f32.xlu0 %v4895
        %v4953 = vpop.xlane.xlu0 %4952
        %4954 = vadd.xlane.f32.xlu0 %v4896
        %v4955 = vpop.xlane.xlu0 %4954
        %4956 = vadd.xlane.f32.xlu0 %v4897
        %v4957 = vpop.xlane.xlu0 %4956
        %4958 = vadd.xlane.f32.xlu0 %v4898
        %v4959 = vpop.xlane.xlu0 %4958
        %4960 = vadd.xlane.f32.xlu0 %v4899
        %v4961 = vpop.xlane.xlu0 %4960
        %4962 = vadd.xlane.f32.xlu0 %v4900
        %v4963 = vpop.xlane.xlu0 %4962
        %4964 = vadd.xlane.f32.xlu0 %v4901
        %v4965 = vpop.xlane.xlu0 %4964
        %v4966 = vmul.f32 %v4681, %v4681
        %v4967 = vmul.f32 %v4687, %v4687
        %v4968 = vmul.f32 %v4693, %v4693
        %v4969 = vmul.f32 %v4699, %v4699
        %v4970 = vmul.f32 %v4705, %v4705
        %v4971 = vmul.f32 %v4711, %v4711
        %v4972 = vmul.f32 %v4717, %v4717
        %v4973 = vmul.f32 %v4723, %v4723
        %v4974 = vmul.f32 %v4729, %v4729
        %v4975 = vmul.f32 %v4735, %v4735
        %v4976 = vmul.f32 %v4741, %v4741
        %v4977 = vmul.f32 %v4747, %v4747
        %v4978 = vmul.f32 %v4753, %v4753
        %v4979 = vmul.f32 %v4759, %v4759
        %v4980 = vmul.f32 %v4765, %v4765
        %v4981 = vmul.f32 %v4771, %v4771
        %v4982 = vmul.f32 %v4777, %v4777
        %v4983 = vmul.f32 %v4783, %v4783
        %v4984 = vmul.f32 %v4789, %v4789
        %v4985 = vmul.f32 %v4795, %v4795
        %v4986 = vmul.f32 %v4801, %v4801
        %v4987 = vmul.f32 %v4807, %v4807
        %v4988 = vmul.f32 %v4813, %v4813
        %v4989 = vmul.f32 %v4819, %v4819
        %v4990 = vmul.f32 %v4825, %v4825
        %v4991 = vmul.f32 %v4831, %v4831
        %v4992 = vmul.f32 %v4837, %v4837
        %v4993 = vmul.f32 %v4843, %v4843
        %v4994 = vmul.f32 %v4849, %v4849
        %v4995 = vmul.f32 %v4855, %v4855
        %v4996 = vmul.f32 %v4861, %v4861
        %v4997 = vmul.f32 %v4867, %v4867
        %4998 = vadd.xlane.f32.xlu0 %v4966
        %v4999 = vpop.xlane.xlu0 %4998
        %5000 = vadd.xlane.f32.xlu0 %v4967
        %v5001 = vpop.xlane.xlu0 %5000
        %5002 = vadd.xlane.f32.xlu0 %v4968
        %v5003 = vpop.xlane.xlu0 %5002
        %5004 = vadd.xlane.f32.xlu0 %v4969
        %v5005 = vpop.xlane.xlu0 %5004
        %5006 = vadd.xlane.f32.xlu0 %v4970
        %v5007 = vpop.xlane.xlu0 %5006
        %5008 = vadd.xlane.f32.xlu0 %v4971
        %v5009 = vpop.xlane.xlu0 %5008
        %5010 = vadd.xlane.f32.xlu0 %v4972
        %v5011 = vpop.xlane.xlu0 %5010
        %5012 = vadd.xlane.f32.xlu0 %v4973
        %v5013 = vpop.xlane.xlu0 %5012
        %5014 = vadd.xlane.f32.xlu0 %v4974
        %v5015 = vpop.xlane.xlu0 %5014
        %5016 = vadd.xlane.f32.xlu0 %v4975
        %v5017 = vpop.xlane.xlu0 %5016
        %5018 = vadd.xlane.f32.xlu0 %v4976
        %v5019 = vpop.xlane.xlu0 %5018
        %5020 = vadd.xlane.f32.xlu0 %v4977
        %v5021 = vpop.xlane.xlu0 %5020
        %5022 = vadd.xlane.f32.xlu0 %v4978
        %v5023 = vpop.xlane.xlu0 %5022
        %5024 = vadd.xlane.f32.xlu0 %v4979
        %v5025 = vpop.xlane.xlu0 %5024
        %5026 = vadd.xlane.f32.xlu0 %v4980
        %v5027 = vpop.xlane.xlu0 %5026
        %5028 = vadd.xlane.f32.xlu0 %v4981
        %v5029 = vpop.xlane.xlu0 %5028
        %5030 = vadd.xlane.f32.xlu0 %v4982
        %v5031 = vpop.xlane.xlu0 %5030
        %5032 = vadd.xlane.f32.xlu0 %v4983
        %v5033 = vpop.xlane.xlu0 %5032
        %5034 = vadd.xlane.f32.xlu0 %v4984
        %v5035 = vpop.xlane.xlu0 %5034
        %5036 = vadd.xlane.f32.xlu0 %v4985
        %v5037 = vpop.xlane.xlu0 %5036
        %5038 = vadd.xlane.f32.xlu0 %v4986
        %v5039 = vpop.xlane.xlu0 %5038
        %5040 = vadd.xlane.f32.xlu0 %v4987
        %v5041 = vpop.xlane.xlu0 %5040
        %5042 = vadd.xlane.f32.xlu0 %v4988
        %v5043 = vpop.xlane.xlu0 %5042
        %5044 = vadd.xlane.f32.xlu0 %v4989
        %v5045 = vpop.xlane.xlu0 %5044
        %5046 = vadd.xlane.f32.xlu0 %v4990
        %v5047 = vpop.xlane.xlu0 %5046
        %5048 = vadd.xlane.f32.xlu0 %v4991
        %v5049 = vpop.xlane.xlu0 %5048
        %5050 = vadd.xlane.f32.xlu0 %v4992
        %v5051 = vpop.xlane.xlu0 %5050
        %5052 = vadd.xlane.f32.xlu0 %v4993
        %v5053 = vpop.xlane.xlu0 %5052
        %5054 = vadd.xlane.f32.xlu0 %v4994
        %v5055 = vpop.xlane.xlu0 %5054
        %5056 = vadd.xlane.f32.xlu0 %v4995
        %v5057 = vpop.xlane.xlu0 %5056
        %5058 = vadd.xlane.f32.xlu0 %v4996
        %v5059 = vpop.xlane.xlu0 %5058
        %5060 = vadd.xlane.f32.xlu0 %v4997
        %v5061 = vpop.xlane.xlu0 %5060
        %v5062 = vsub.f32 %v4903, %v4999
        %v5063 = vsub.f32 %v4905, %v5001
        %v5064 = vsub.f32 %v4907, %v5003
        %v5065 = vsub.f32 %v4909, %v5005
        %v5066 = vsub.f32 %v4911, %v5007
        %v5067 = vsub.f32 %v4913, %v5009
        %v5068 = vsub.f32 %v4915, %v5011
        %v5069 = vsub.f32 %v4917, %v5013
        %v5070 = vsub.f32 %v4919, %v5015
        %v5071 = vsub.f32 %v4921, %v5017
        %v5072 = vsub.f32 %v4923, %v5019
        %v5073 = vsub.f32 %v4925, %v5021
        %v5074 = vsub.f32 %v4927, %v5023
        %v5075 = vsub.f32 %v4929, %v5025
        %v5076 = vsub.f32 %v4931, %v5027
        %v5077 = vsub.f32 %v4933, %v5029
        %v5078 = vsub.f32 %v4935, %v5031
        %v5079 = vsub.f32 %v4937, %v5033
        %v5080 = vsub.f32 %v4939, %v5035
        %v5081 = vsub.f32 %v4941, %v5037
        %v5082 = vsub.f32 %v4943, %v5039
        %v5083 = vsub.f32 %v4945, %v5041
        %v5084 = vsub.f32 %v4947, %v5043
        %v5085 = vsub.f32 %v4949, %v5045
        %v5086 = vsub.f32 %v4951, %v5047
        %v5087 = vsub.f32 %v4953, %v5049
        %v5088 = vsub.f32 %v4955, %v5051
        %v5089 = vsub.f32 %v4957, %v5053
        %v5090 = vsub.f32 %v4959, %v5055
        %v5091 = vsub.f32 %v4961, %v5057
        %v5092 = vsub.f32 %v4963, %v5059
        %v5093 = vsub.f32 %v4965, %v5061
        %v5094 = vadd.f32 %v5062, 1.0
        %v5095 = vadd.f32 %v5063, 1.0
        %v5096 = vadd.f32 %v5064, 1.0
        %v5097 = vadd.f32 %v5065, 1.0
        %v5098 = vadd.f32 %v5066, 1.0
        %v5099 = vadd.f32 %v5067, 1.0
        %v5100 = vadd.f32 %v5068, 1.0
        %v5101 = vadd.f32 %v5069, 1.0
        %v5102 = vadd.f32 %v5070, 1.0
        %v5103 = vadd.f32 %v5071, 1.0
        %v5104 = vadd.f32 %v5072, 1.0
        %v5105 = vadd.f32 %v5073, 1.0
        %v5106 = vadd.f32 %v5074, 1.0
        %v5107 = vadd.f32 %v5075, 1.0
        %v5108 = vadd.f32 %v5076, 1.0
        %v5109 = vadd.f32 %v5077, 1.0
        %v5110 = vadd.f32 %v5078, 1.0
        %v5111 = vadd.f32 %v5079, 1.0
        %v5112 = vadd.f32 %v5080, 1.0
        %v5113 = vadd.f32 %v5081, 1.0
        %v5114 = vadd.f32 %v5082, 1.0
        %v5115 = vadd.f32 %v5083, 1.0
        %v5116 = vadd.f32 %v5084, 1.0
        %v5117 = vadd.f32 %v5085, 1.0
        %v5118 = vadd.f32 %v5086, 1.0
        %v5119 = vadd.f32 %v5087, 1.0
        %v5120 = vadd.f32 %v5088, 1.0
        %v5121 = vadd.f32 %v5089, 1.0
        %v5122 = vadd.f32 %v5090, 1.0
        %v5123 = vadd.f32 %v5091, 1.0
        %v5124 = vadd.f32 %v5092, 1.0
        %v5125 = vadd.f32 %v5093, 1.0
        %v5126 = vmax.f32 %v5094, 0.0
        %v5127 = vmax.f32 %v5095, 0.0
        %v5128 = vmax.f32 %v5096, 0.0
        %v5129 = vmax.f32 %v5097, 0.0
        %v5130 = vmax.f32 %v5098, 0.0
        %v5131 = vmax.f32 %v5099, 0.0
        %v5132 = vmax.f32 %v5100, 0.0
        %v5133 = vmax.f32 %v5101, 0.0
        %v5134 = vmax.f32 %v5102, 0.0
        %v5135 = vmax.f32 %v5103, 0.0
        %v5136 = vmax.f32 %v5104, 0.0
        %v5137 = vmax.f32 %v5105, 0.0
        %v5138 = vmax.f32 %v5106, 0.0
        %v5139 = vmax.f32 %v5107, 0.0
        %v5140 = vmax.f32 %v5108, 0.0
        %v5141 = vmax.f32 %v5109, 0.0
        %v5142 = vmax.f32 %v5110, 0.0
        %v5143 = vmax.f32 %v5111, 0.0
        %v5144 = vmax.f32 %v5112, 0.0
        %v5145 = vmax.f32 %v5113, 0.0
        %v5146 = vmax.f32 %v5114, 0.0
        %v5147 = vmax.f32 %v5115, 0.0
        %v5148 = vmax.f32 %v5116, 0.0
        %v5149 = vmax.f32 %v5117, 0.0
        %v5150 = vmax.f32 %v5118, 0.0
        %v5151 = vmax.f32 %v5119, 0.0
        %v5152 = vmax.f32 %v5120, 0.0
        %v5153 = vmax.f32 %v5121, 0.0
        %v5154 = vmax.f32 %v5122, 0.0
        %v5155 = vmax.f32 %v5123, 0.0
        %v5156 = vmax.f32 %v5124, 0.0
        %v5157 = vmax.f32 %v5125, 0.0
        %v5158 = vlaneseq
        %v5159 = vshrl.u32 %v5158, 7
        %v5160 = vadd.s32 %v5159, 8
        %v5161 = vadd.s32 %v5159, 16
        %v5162 = vadd.s32 %v5159, 24
        %v5163 = vadd.s32 %v5159, 32
        %v5164 = vadd.s32 %v5159, 40
        %v5165 = vadd.s32 %v5159, 48
        %v5166 = vadd.s32 %v5159, 56
        %v5167 = vadd.s32 %v5159, 64
        %v5168 = vadd.s32 %v5159, 72
        %v5169 = vadd.s32 %v5159, 80
        %v5170 = vadd.s32 %v5159, 88
        %v5171 = vadd.s32 %v5159, 96
        %v5172 = vadd.s32 %v5159, 104
        %v5173 = vadd.s32 %v5159, 112
        %v5174 = vadd.s32 %v5159, 120
        %v5175 = vadd.s32 %v5159, 128
        %v5176 = vadd.s32 %v5159, 136
        %v5177 = vadd.s32 %v5159, 144
        %v5178 = vadd.s32 %v5159, 152
        %v5179 = vadd.s32 %v5159, 160
        %v5180 = vadd.s32 %v5159, 168
        %v5181 = vadd.s32 %v5159, 176
        %v5182 = vadd.s32 %v5159, 184
        %v5183 = vadd.s32 %v5159, 192
        %v5184 = vadd.s32 %v5159, 200
        %v5185 = vadd.s32 %v5159, 208
        %v5186 = vadd.s32 %v5159, 216
        %v5187 = vadd.s32 %v5159, 224
        %v5188 = vadd.s32 %v5159, 232
        %v5189 = vadd.s32 %v5159, 240
        %v5190 = vadd.s32 %v5159, 248
        %v5191 = vstv %s141
        %v5192 = vadd.s32 %v5159, %v5191
        %v5193 = vadd.s32 %v5160, %v5191
        %v5194 = vadd.s32 %v5161, %v5191
        %v5195 = vadd.s32 %v5162, %v5191
        %v5196 = vadd.s32 %v5163, %v5191
        %v5197 = vadd.s32 %v5164, %v5191
        %v5198 = vadd.s32 %v5165, %v5191
        %v5199 = vadd.s32 %v5166, %v5191
        %v5200 = vadd.s32 %v5167, %v5191
        %v5201 = vadd.s32 %v5168, %v5191
        %v5202 = vadd.s32 %v5169, %v5191
        %v5203 = vadd.s32 %v5170, %v5191
        %v5204 = vadd.s32 %v5171, %v5191
        %v5205 = vadd.s32 %v5172, %v5191
        %v5206 = vadd.s32 %v5173, %v5191
        %v5207 = vadd.s32 %v5174, %v5191
        %v5208 = vadd.s32 %v5175, %v5191
        %v5209 = vadd.s32 %v5176, %v5191
        %v5210 = vadd.s32 %v5177, %v5191
        %v5211 = vadd.s32 %v5178, %v5191
        %v5212 = vadd.s32 %v5179, %v5191
        %v5213 = vadd.s32 %v5180, %v5191
        %v5214 = vadd.s32 %v5181, %v5191
        %v5215 = vadd.s32 %v5182, %v5191
        %v5216 = vadd.s32 %v5183, %v5191
        %v5217 = vadd.s32 %v5184, %v5191
        %v5218 = vadd.s32 %v5185, %v5191
        %v5219 = vadd.s32 %v5186, %v5191
        %v5220 = vadd.s32 %v5187, %v5191
        %v5221 = vadd.s32 %v5188, %v5191
        %v5222 = vadd.s32 %v5189, %v5191
        %v5223 = vadd.s32 %v5190, %v5191
        %v5224 = vstv %s139
        %vm5225 = vcmp.lt.s32.totalorder %v5192, %v5224
        %vm5226 = vcmp.lt.s32.totalorder %v5193, %v5224
        %vm5227 = vcmp.lt.s32.totalorder %v5194, %v5224
        %vm5228 = vcmp.lt.s32.totalorder %v5195, %v5224
        %vm5229 = vcmp.lt.s32.totalorder %v5196, %v5224
        %vm5230 = vcmp.lt.s32.totalorder %v5197, %v5224
        %vm5231 = vcmp.lt.s32.totalorder %v5198, %v5224
        %vm5232 = vcmp.lt.s32.totalorder %v5199, %v5224
        %vm5233 = vcmp.lt.s32.totalorder %v5200, %v5224
        %vm5234 = vcmp.lt.s32.totalorder %v5201, %v5224
        %vm5235 = vcmp.lt.s32.totalorder %v5202, %v5224
        %vm5236 = vcmp.lt.s32.totalorder %v5203, %v5224
        %vm5237 = vcmp.lt.s32.totalorder %v5204, %v5224
        %vm5238 = vcmp.lt.s32.totalorder %v5205, %v5224
        %vm5239 = vcmp.lt.s32.totalorder %v5206, %v5224
        %vm5240 = vcmp.lt.s32.totalorder %v5207, %v5224
        %vm5241 = vcmp.lt.s32.totalorder %v5208, %v5224
        %vm5242 = vcmp.lt.s32.totalorder %v5209, %v5224
        %vm5243 = vcmp.lt.s32.totalorder %v5210, %v5224
        %vm5244 = vcmp.lt.s32.totalorder %v5211, %v5224
        %vm5245 = vcmp.lt.s32.totalorder %v5212, %v5224
        %vm5246 = vcmp.lt.s32.totalorder %v5213, %v5224
        %vm5247 = vcmp.lt.s32.totalorder %v5214, %v5224
        %vm5248 = vcmp.lt.s32.totalorder %v5215, %v5224
        %vm5249 = vcmp.lt.s32.totalorder %v5216, %v5224
        %vm5250 = vcmp.lt.s32.totalorder %v5217, %v5224
        %vm5251 = vcmp.lt.s32.totalorder %v5218, %v5224
        %vm5252 = vcmp.lt.s32.totalorder %v5219, %v5224
        %vm5253 = vcmp.lt.s32.totalorder %v5220, %v5224
        %vm5254 = vcmp.lt.s32.totalorder %v5221, %v5224
        %vm5255 = vcmp.lt.s32.totalorder %v5222, %v5224
        %vm5256 = vcmp.lt.s32.totalorder %v5223, %v5224
        %v5257 = vsel %vm5225, 1, 0
        %v5258 = vsel %vm5226, 1, 0
        %v5259 = vsel %vm5227, 1, 0
        %v5260 = vsel %vm5228, 1, 0
        %v5261 = vsel %vm5229, 1, 0
        %v5262 = vsel %vm5230, 1, 0
        %v5263 = vsel %vm5231, 1, 0
        %v5264 = vsel %vm5232, 1, 0
        %v5265 = vsel %vm5233, 1, 0
        %v5266 = vsel %vm5234, 1, 0
        %v5267 = vsel %vm5235, 1, 0
        %v5268 = vsel %vm5236, 1, 0
        %v5269 = vsel %vm5237, 1, 0
        %v5270 = vsel %vm5238, 1, 0
        %v5271 = vsel %vm5239, 1, 0
        %v5272 = vsel %vm5240, 1, 0
        %v5273 = vsel %vm5241, 1, 0
        %v5274 = vsel %vm5242, 1, 0
        %v5275 = vsel %vm5243, 1, 0
        %v5276 = vsel %vm5244, 1, 0
        %v5277 = vsel %vm5245, 1, 0
        %v5278 = vsel %vm5246, 1, 0
        %v5279 = vsel %vm5247, 1, 0
        %v5280 = vsel %vm5248, 1, 0
        %v5281 = vsel %vm5249, 1, 0
        %v5282 = vsel %vm5250, 1, 0
        %v5283 = vsel %vm5251, 1, 0
        %v5284 = vsel %vm5252, 1, 0
        %v5285 = vsel %vm5253, 1, 0
        %v5286 = vsel %vm5254, 1, 0
        %v5287 = vsel %vm5255, 1, 0
        %v5288 = vsel %vm5256, 1, 0
        %v5289 = vcvt.s32.f32 %v5257
        %v5290 = vcvt.s32.f32 %v5258
        %v5291 = vcvt.s32.f32 %v5259
        %v5292 = vcvt.s32.f32 %v5260
        %v5293 = vcvt.s32.f32 %v5261
        %v5294 = vcvt.s32.f32 %v5262
        %v5295 = vcvt.s32.f32 %v5263
        %v5296 = vcvt.s32.f32 %v5264
        %v5297 = vcvt.s32.f32 %v5265
        %v5298 = vcvt.s32.f32 %v5266
        %v5299 = vcvt.s32.f32 %v5267
        %v5300 = vcvt.s32.f32 %v5268
        %v5301 = vcvt.s32.f32 %v5269
        %v5302 = vcvt.s32.f32 %v5270
        %v5303 = vcvt.s32.f32 %v5271
        %v5304 = vcvt.s32.f32 %v5272
        %v5305 = vcvt.s32.f32 %v5273
        %v5306 = vcvt.s32.f32 %v5274
        %v5307 = vcvt.s32.f32 %v5275
        %v5308 = vcvt.s32.f32 %v5276
        %v5309 = vcvt.s32.f32 %v5277
        %v5310 = vcvt.s32.f32 %v5278
        %v5311 = vcvt.s32.f32 %v5279
        %v5312 = vcvt.s32.f32 %v5280
        %v5313 = vcvt.s32.f32 %v5281
        %v5314 = vcvt.s32.f32 %v5282
        %v5315 = vcvt.s32.f32 %v5283
        %v5316 = vcvt.s32.f32 %v5284
        %v5317 = vcvt.s32.f32 %v5285
        %v5318 = vcvt.s32.f32 %v5286
        %v5319 = vcvt.s32.f32 %v5287
        %v5320 = vcvt.s32.f32 %v5288
        %v5321 = vld [vmem:[#allocation3] sm:$0x1]
        %v5322 = vmul.f32 %v5126, %v5289
        %v5323 = vmul.f32 %v5127, %v5290
        %v5324 = vmul.f32 %v5128, %v5291
        %v5325 = vmul.f32 %v5129, %v5292
        %v5326 = vmul.f32 %v5130, %v5293
        %v5327 = vmul.f32 %v5131, %v5294
        %v5328 = vmul.f32 %v5132, %v5295
        %v5329 = vmul.f32 %v5133, %v5296
        %v5330 = vmul.f32 %v5134, %v5297
        %v5331 = vmul.f32 %v5135, %v5298
        %v5332 = vmul.f32 %v5136, %v5299
        %v5333 = vmul.f32 %v5137, %v5300
        %v5334 = vmul.f32 %v5138, %v5301
        %v5335 = vmul.f32 %v5139, %v5302
        %v5336 = vmul.f32 %v5140, %v5303
        %v5337 = vmul.f32 %v5141, %v5304
        %v5338 = vmul.f32 %v5142, %v5305
        %v5339 = vmul.f32 %v5143, %v5306
        %v5340 = vmul.f32 %v5144, %v5307
        %v5341 = vmul.f32 %v5145, %v5308
        %v5342 = vmul.f32 %v5146, %v5309
        %v5343 = vmul.f32 %v5147, %v5310
        %v5344 = vmul.f32 %v5148, %v5311
        %v5345 = vmul.f32 %v5149, %v5312
        %v5346 = vmul.f32 %v5150, %v5313
        %v5347 = vmul.f32 %v5151, %v5314
        %v5348 = vmul.f32 %v5152, %v5315
        %v5349 = vmul.f32 %v5153, %v5316
        %v5350 = vmul.f32 %v5154, %v5317
        %v5351 = vmul.f32 %v5155, %v5318
        %v5352 = vmul.f32 %v5156, %v5319
        %v5353 = vmul.f32 %v5157, %v5320
        %v5354 = vadd.f32 %v5322, %v5323
        %v5355 = vadd.f32 %v5354, %v5324
        %v5356 = vadd.f32 %v5355, %v5325
        %v5357 = vadd.f32 %v5356, %v5326
        %v5358 = vadd.f32 %v5357, %v5327
        %v5359 = vadd.f32 %v5358, %v5328
        %v5360 = vadd.f32 %v5359, %v5329
        %v5361 = vadd.f32 %v5360, %v5330
        %v5362 = vadd.f32 %v5361, %v5331
        %v5363 = vadd.f32 %v5362, %v5332
        %v5364 = vadd.f32 %v5363, %v5333
        %v5365 = vadd.f32 %v5364, %v5334
        %v5366 = vadd.f32 %v5365, %v5335
        %v5367 = vadd.f32 %v5366, %v5336
        %v5368 = vadd.f32 %v5367, %v5337
        %v5369 = vadd.f32 %v5368, %v5338
        %v5370 = vadd.f32 %v5369, %v5339
        %v5371 = vadd.f32 %v5370, %v5340
        %v5372 = vadd.f32 %v5371, %v5341
        %v5373 = vadd.f32 %v5372, %v5342
        %v5374 = vadd.f32 %v5373, %v5343
        %v5375 = vadd.f32 %v5374, %v5344
        %v5376 = vadd.f32 %v5375, %v5345
        %v5377 = vadd.f32 %v5376, %v5346
        %v5378 = vadd.f32 %v5377, %v5347
        %v5379 = vadd.f32 %v5378, %v5348
        %v5380 = vadd.f32 %v5379, %v5349
        %v5381 = vadd.f32 %v5380, %v5350
        %v5382 = vadd.f32 %v5381, %v5351
        %v5383 = vadd.f32 %v5382, %v5352
        %v5384 = vadd.f32 %v5383, %v5353
        %v5385 = vrot.slane %v5384, 4
        %v5386 = vadd.f32 %v5384, %v5385
        %v5387 = vrot.slane %v5386, 2
        %v5388 = vadd.f32 %v5386, %v5387
        %v5389 = vrot.slane %v5388, 1
        %v5390 = vadd.f32 %v5388, %v5389
        %v5391 = vadd.f32 %v5321, %v5390
        %vm5392 = vcmask 0
        %5393 = vst.msk [vmem:[#allocation3] sm:$0x1] %vm5392, %v5391
      $region71: #{_triplet_loss_pallas.1} parent=23 // pred_fallthru
        _
      %v5394 = vld [vmem:[#allocation3] sm:$0x1]
      %v5396 = vlaneseq
      %v5397 = vshrl.u32 %v5396, 7
      %v5398 = vsub.s32 0, %v5397
      %v5399 = vrot.slane %v5394, %v5398
      %5400 = vset.pattern.permute.xlu0 0
      %5401 = vperm.xlu0 %5400, %v5399
      %v5402 = vpop.permute.xlu0 %5401
      %5404 = vst [vmem:[%s138] sm:$0xff] %v5402
      %p5405 = scmp.lt.s32.totalorder %s19, 1
      %s5406 = scalar_select %p5405, %s19, 1
      %s5407 = smul.addr %s5406, 8
      %s5408 = scalar_lea.vmem %s3, %s5407
      // Predicated region
      $region72: #{_triplet_loss_pallas.1} parent=23 // pred_check
        %p5409 = pneg %p73
      $region73: #{_triplet_loss_pallas.1} parent=23 // pred_check_branch
        %5411 = sbr.rel (%p5409) target = $region75
      $region74: #{_triplet_loss_pallas.1} parent=23 // pred_region
        _
      $region75: #{_triplet_loss_pallas.1} parent=23 // pred_fallthru
        _
    $region24: #{_triplet_loss_pallas.1} parent=5 // pred_fallthru
      _
    %p5412 = scmp.le.s32.totalorder 2, %s10
    // Predicated region
    $region76: #{_triplet_loss_pallas.1} parent=5 // pred_check
      %p5413 = pneg %p5412
    $region77: #{_triplet_loss_pallas.1} parent=5 // pred_check_branch
      %5415 = sbr.rel (%p5413) target = $region79
    $region78: #{_triplet_loss_pallas.1} parent=5 // pred_region
      %s5416 = ssub.s32 %s10, 2
      // Predicated region
      $region80: #{_triplet_loss_pallas.1} parent=78 // pred_check
        %p5417 = pneg %p79
      $region81: #{_triplet_loss_pallas.1} parent=78 // pred_check_branch
        %5419 = sbr.rel (%p5417) target = $region83
      $region82: #{_triplet_loss_pallas.1} parent=78 // pred_region
        %p5420 = scmp.lt.s32.totalorder %s21, 1
        %s5421 = scalar_select %p5420, %s21, 1
        %s5422 = smul.addr %s5421, 8
        %s5423 = scalar_lea.vmem %s3, %s5422
      $region83: #{_triplet_loss_pallas.1} parent=78 // pred_fallthru
        _
    $region79: #{_triplet_loss_pallas.1} parent=5 // pred_fallthru
      _
  $region6: #{_triplet_loss_pallas.1} parent=0 // loop_footer
    %s14 = sadd.s32 1, %s10
  $region7: #{_triplet_loss_pallas.1} parent=0 // loop_footer_branch
    %9 = sbr.rel target = $region3
  $region8: #{_triplet_loss_pallas.1} parent=0 // loop_exit
    _

</llo_original>
